<compile_context>
chip_gen: v7x
topology: tpu7x:2x2x1
jax: 0.10.0
libtpu: 0.0.40
codegen_flags: <defaults>
</compile_context>

<pallas_src>
import jax
import jax.numpy as jnp
from jax.experimental import pallas as pl
from jax.experimental.pallas import tpu as pltpu

HIDDEN = 32
DES_SIZE = 768
TWEET_SIZE = 768
NUM_PROP_SIZE = 5
CAT_PROP_SIZE = 3
N_NODES = 8
HEADS1 = 4
OUT_PAD = 128  # lane-padded width of the final projection / kernel output

# ---- slab A (input projections) row layout: 16-row-aligned offsets --------------
A_DES = 0
A_TWEET = DES_SIZE
A_NUM = DES_SIZE + TWEET_SIZE            # 1536, 5 real rows in a 16-row slot
A_CAT = DES_SIZE + TWEET_SIZE + 16       # 1552, 3 real rows in a 16-row slot
A_ROWS = A_CAT + 16                      # 1568


# ---- slab B (all other weights) row layout: 32-row-aligned offsets, 128 lanes ---
def _slab_b_layout():
    spec = [
        ("mb0", HIDDEN), ("mb1", 4 * HIDDEN), ("mb2", 2 * HIDDEN), ("inp", HIDDEN),
        ("g1w", HIDDEN), ("g1ad", HIDDEN), ("g1as", HIDDEN),
        ("g2w", HIDDEN), ("g2ad", HIDDEN), ("g2as", HIDDEN),
        ("o1", HIDDEN),
        ("ma0", HIDDEN), ("ma1", 4 * HIDDEN), ("ma2", 2 * HIDDEN),
        ("o2", HIDDEN),
    ]
    off, d = 0, {}
    for name, rows in spec:
        d[name] = off
        off += rows
    return d, off


W_OFF, W_ROWS = _slab_b_layout()

# ---- bias slab row indices -------------------------------------------------------
B_IDX = {"in": 0, "mb0": 1, "mb1": 2, "mb2": 3, "inp": 4, "g1": 5, "g2": 6,
         "o1": 7, "ma0": 8, "ma1": 9, "ma2": 10, "o2": 11}
B_ROWS = 16


# -----------------------------------------------------------------------------
# Fused forward kernel (single invocation, everything resident in VMEM)
# -----------------------------------------------------------------------------
def _botgat_kernel(des_ref, tweet_ref, num_ref, cat_ref, adj_ref,
                   wa_ref, wb_ref, b_ref, o_ref):
    f32, bf16 = jnp.float32, jnp.bfloat16

    def bias(name, width=128):
        i = B_IDX[name]
        return b_ref[i:i + 1, :width]                                       # [1, width] f32

    def lin(x, wname, in_d, bname, act=None, slope=0.01):
        w = wb_ref[W_OFF[wname]:W_OFF[wname] + in_d, :]                     # [in_d, 128] bf16
        y = jnp.dot(x[:, :in_d].astype(bf16), w, preferred_element_type=f32)
        y = y + bias(bname)
        if act == "relu":
            y = jnp.maximum(y, 0.0)
        elif act == "leaky":
            y = jnp.where(y >= 0.0, y, slope * y)
        return y                                                            # [N, 128] f32

    def gat(x, wname, adname, asname, bname, heads, out_c, neg):
        # PyG GATConv, concat=True, LeakyReLU(0.2) attention, softmax over sources.
        hc = heads * out_c
        wp = wb_ref[W_OFF[wname]:W_OFF[wname] + HIDDEN, :]
        xp = jnp.dot(x[:, :HIDDEN].astype(bf16), wp,
                     preferred_element_type=f32)                            # [N, 128] (real hc)
        xpb = xp[:, :hc].astype(bf16)
        # destination logits [N, heads]: standard matmul against the [hc, heads] block matrix
        adst = jnp.dot(xpb, wb_ref[W_OFF[adname]:W_OFF[adname] + hc, :],
                       preferred_element_type=f32)                          # [N, 128] (real heads)
        # source logits already on lanes [heads(pad 8), N]: ONE trans_b matmul per layer
        as_t = wb_ref[W_OFF[asname]:W_OFF[asname] + 8, :hc]                 # [8, hc] bf16
        asrc_t = jnp.einsum("hk,jk->hj", as_t, xpb,
                            preferred_element_type=f32)                     # [8, N] f32
        cols = []
        for h in range(heads):  # static unroll; heads is 1 or 4
            e = adst[:, h:h + 1] + asrc_t[h:h + 1, :]                       # [N_dst, N_src]
            e = jnp.where(e >= 0.0, e, 0.2 * e) + neg                       # LeakyReLU(0.2) + mask
            m = jnp.max(e, axis=1, keepdims=True)                           # stable softmax
            p = jnp.exp(e - m)                                              # masked -> exactly 0
            s = jnp.sum(p, axis=1, keepdims=True)                           # >= 1 (self loops)
            attn = p * pl.reciprocal(s, approx=True)
            cols.append(jnp.dot(attn, xp[:, h * out_c:(h + 1) * out_c],
                                preferred_element_type=f32))
        out = cols[0] if heads == 1 else jnp.concatenate(cols, axis=1)      # [N, hc]
        return out + bias(bname, hc)

    # additive attention mask, built once (adj always carries self loops)
    neg = jnp.where(adj_ref[...] > 0.0, 0.0, -1e30)

    # fused des/tweet/num_prop/cat_prop projections + LeakyReLU(0.01); each segment's
    # weight lives in its own 8-lane slot so the sum IS the lane-concatenated x.
    x = jnp.dot(des_ref[...].astype(bf16), wa_ref[A_DES:A_DES + DES_SIZE, :],
                preferred_element_type=f32)
    x = x + jnp.dot(tweet_ref[...].astype(bf16), wa_ref[A_TWEET:A_TWEET + TWEET_SIZE, :],
                    preferred_element_type=f32)
    x = x + jnp.dot(num_ref[...].astype(bf16), wa_ref[A_NUM:A_NUM + NUM_PROP_SIZE, :],
                    preferred_element_type=f32)
    x = x + jnp.dot(cat_ref[...].astype(bf16), wa_ref[A_CAT:A_CAT + CAT_PROP_SIZE, :],
                    preferred_element_type=f32)
    x = x + bias("in", HIDDEN)
    x = jnp.where(x >= 0.0, x, 0.01 * x)                                    # [N, 32]

    # mlp_before (Flatten == identity for 2-D input)
    x = lin(x, "mb0", HIDDEN, "mb0", act="relu")
    x = lin(x, "mb1", 4 * HIDDEN, "mb1", act="relu")
    x = lin(x, "mb2", 2 * HIDDEN, "mb2")

    # TODO(synk): nn.Dropout implemented as identity (inference-mode semantics).
    x = lin(x, "inp", HIDDEN, "inp", act="leaky")

    x = gat(x, "g1w", "g1ad", "g1as", "g1", heads=HEADS1, out_c=HIDDEN // HEADS1, neg=neg)
    x = gat(x, "g2w", "g2ad", "g2as", "g2", heads=1, out_c=HIDDEN, neg=neg)

    x = lin(x, "o1", HIDDEN, "o1", act="leaky")

    # mlp_after
    x = lin(x, "ma0", HIDDEN, "ma0", act="relu")
    x = lin(x, "ma1", 4 * HIDDEN, "ma1", act="relu")
    x = lin(x, "ma2", 2 * HIDDEN, "ma2")

    # final projection, lane-padded to OUT_PAD columns (wrapper slices [:, :2])
    o_ref[...] = lin(x, "o2", HIDDEN, "o2")


# -----------------------------------------------------------------------------
# Parameter packing (done once) + model wrapper
# -----------------------------------------------------------------------------
def pack_params(params):
    """Repack per-layer params into 3 slabs: input-proj (bf16), main weights (bf16), biases (f32)."""
    h = HIDDEN
    q = h // 4

    # ---- slab A : fused input projections -------------------------------------
    wa = jnp.zeros((A_ROWS, h), jnp.float32)
    wd, bd = params["des"]
    wt, bt = params["tweet"]
    wn, bn = params["num_prop"]
    wc, bc = params["cat_prop"]
    wa = wa.at[A_DES:A_DES + DES_SIZE, 0 * q:1 * q].set(wd)
    wa = wa.at[A_TWEET:A_TWEET + TWEET_SIZE, 1 * q:2 * q].set(wt)
    wa = wa.at[A_NUM:A_NUM + NUM_PROP_SIZE, 2 * q:3 * q].set(wn)
    wa = wa.at[A_CAT:A_CAT + CAT_PROP_SIZE, 3 * q:4 * q].set(wc)
    b_in = jnp.concatenate([bd, bt, bn, bc], axis=1)                        # [1, 32]

    # ---- GAT attention-vector packing ------------------------------------------
    def att_dst_mat(a):      # [H, C] -> [H*C, H] block matrix
        heads, c = a.shape
        m = jnp.zeros((heads * c, heads), jnp.float32)
        for hh in range(heads):
            m = m.at[hh * c:(hh + 1) * c, hh].set(a[hh])
        return m

    def att_src_mat_t(a):    # [H, C] -> [H, H*C] block matrix (pre-transposed)
        heads, c = a.shape
        m = jnp.zeros((heads, heads * c), jnp.float32)
        for hh in range(heads):
            m = m.at[hh, hh * c:(hh + 1) * c].set(a[hh])
        return m

    wg1, as1, ad1, bg1 = params["gat1"]
    wg2, as2, ad2, bg2 = params["gat2"]
    w_o2, b_o2 = params["out2"]

    # ---- slab B : every other weight, row-stacked, lane-padded to 128 ----------
    wb = jnp.zeros((W_ROWS, 128), jnp.float32)

    def put_w(buf, name, w):
        r, c = w.shape
        return buf.at[W_OFF[name]:W_OFF[name] + r, :c].set(w)

    wb = put_w(wb, "mb0", params["mb0"][0])
    wb = put_w(wb, "mb1", params["mb1"][0])
    wb = put_w(wb, "mb2", params["mb2"][0])
    wb = put_w(wb, "inp", params["inp"][0])
    wb = put_w(wb, "g1w", wg1)
    wb = put_w(wb, "g1ad", att_dst_mat(ad1))
    wb = put_w(wb, "g1as", att_src_mat_t(as1))
    wb = put_w(wb, "g2w", wg2)
    wb = put_w(wb, "g2ad", att_dst_mat(ad2))
    wb = put_w(wb, "g2as", att_src_mat_t(as2))
    wb = put_w(wb, "o1", params["out1"][0])
    wb = put_w(wb, "ma0", params["ma0"][0])
    wb = put_w(wb, "ma1", params["ma1"][0])
    wb = put_w(wb, "ma2", params["ma2"][0])
    wb = put_w(wb, "o2", w_o2)

    # ---- bias slab (kept f32: added after f32 accumulation) --------------------
    bs = jnp.zeros((B_ROWS, 128), jnp.float32)

    def put_b(buf, name, b):
        return buf.at[B_IDX[name]:B_IDX[name] + 1, :b.shape[1]].set(b)

    bs = put_b(bs, "in", b_in)
    bs = put_b(bs, "mb0", params["mb0"][1])
    bs = put_b(bs, "mb1", params["mb1"][1])
    bs = put_b(bs, "mb2", params["mb2"][1])
    bs = put_b(bs, "inp", params["inp"][1])
    bs = put_b(bs, "g1", bg1)
    bs = put_b(bs, "g2", bg2)
    bs = put_b(bs, "o1", params["out1"][1])
    bs = put_b(bs, "ma0", params["ma0"][1])
    bs = put_b(bs, "ma1", params["ma1"][1])
    bs = put_b(bs, "ma2", params["ma2"][1])
    bs = put_b(bs, "o2", b_o2)

    return (wa.astype(jnp.bfloat16), wb.astype(jnp.bfloat16), bs)


@jax.jit
def botgat_mlp_forward(packed, des, tweet, num_prop, cat_prop, adj):
    wa, wb, bs = packed
    n = des.shape[0]
    args = (des, tweet, num_prop, cat_prop, adj, wa, wb, bs)
    out = pl.pallas_call(
        _botgat_kernel,
        out_shape=jax.ShapeDtypeStruct((n, OUT_PAD), jnp.float32),
        in_specs=[pl.BlockSpec(memory_space=pltpu.MemorySpace.VMEM)] * len(args),
        out_specs=pl.BlockSpec(memory_space=pltpu.MemorySpace.VMEM),
    )(*args)
    return out[:, :2]


# -----------------------------------------------------------------------------
# Parameter init / graph helpers
# -----------------------------------------------------------------------------
def init_params(key):
    h = HIDDEN
    keys = iter(jax.random.split(key, 64))

    def lin(in_d, out_d):
        w = jax.random.normal(next(keys), (in_d, out_d), jnp.float32) * 0.05
        b = jax.random.normal(next(keys), (1, out_d), jnp.float32) * 0.05
        return (w, b)

    def gat(in_d, out_c, heads):
        w = jax.random.normal(next(keys), (in_d, heads * out_c), jnp.float32) * 0.05
        a_s = jax.random.normal(next(keys), (heads, out_c), jnp.float32) * 0.05
        a_d = jax.random.normal(next(keys), (heads, out_c), jnp.float32) * 0.05
        b = jax.random.normal(next(keys), (1, heads * out_c), jnp.float32) * 0.05
        return (w, a_s, a_d, b)

    return {
        "des": lin(DES_SIZE, h // 4),
        "tweet": lin(TWEET_SIZE, h // 4),
        "num_prop": lin(NUM_PROP_SIZE, h // 4),
        "cat_prop": lin(CAT_PROP_SIZE, h // 4),
        "mb0": lin(h, 4 * h), "mb1": lin(4 * h, 2 * h), "mb2": lin(2 * h, h),
        "inp": lin(h, h),
        "gat1": gat(h, h // 4, HEADS1),
        "gat2": gat(h, h, 1),
        "out1": lin(h, h),
        "ma0": lin(h, 4 * h), "ma1": lin(4 * h, 2 * h), "ma2": lin(2 * h, h),
        "out2": lin(h, 2),
    }


def edge_index_to_adj(edge_index, n):
    """adj[i, j] = 1 iff edge j -> i (PyG: edge_index[0]=src, [1]=dst), + self loops."""
    src, dst = edge_index[0], edge_index[1]
    adj = jnp.zeros((n, n), jnp.float32).at[dst, src].set(1.0)
    return jnp.maximum(adj, jnp.eye(n, dtype=jnp.float32))


if __name__ == "__main__":
    key = jax.random.PRNGKey(0)
    kp, kd, kt, kn, kc = jax.random.split(key, 5)
    params = init_params(kp)
    packed = pack_params(params)

    des = jax.random.normal(kd, (N_NODES, DES_SIZE), jnp.float32)
    tweet = jax.random.normal(kt, (N_NODES, TWEET_SIZE), jnp.float32)
    num_prop = jax.random.normal(kn, (N_NODES, NUM_PROP_SIZE), jnp.float32)
    cat_prop = jax.random.normal(kc, (N_NODES, CAT_PROP_SIZE), jnp.float32)

    # deterministic bidirectional ring graph (self loops added in adj)
    ids = jnp.arange(N_NODES)
    src = jnp.concatenate([ids, (ids + 1) % N_NODES])
    dst = jnp.concatenate([(ids + 1) % N_NODES, ids])
    edge_index = jnp.stack([src, dst])                  # [2, 2N]
    adj = edge_index_to_adj(edge_index, N_NODES)

    out = botgat_mlp_forward(packed, des, tweet, num_prop, cat_prop, adj)
    out = jax.block_until_ready(out)
    assert out.shape == (N_NODES, 2) and out.dtype == jnp.float32
    assert bool(jnp.all(jnp.isfinite(out)))
    print("KERNEL_OK")
</pallas_src>

<mosaic_0001>
module attributes {stable_mosaic.version = 11 : i64} {
  func.func @_botgat_kernel(%arg0: memref<8x768xf32, #tpu.memory_space<vmem>>, %arg1: memref<8x768xf32, #tpu.memory_space<vmem>>, %arg2: memref<8x5xf32, #tpu.memory_space<vmem>>, %arg3: memref<8x3xf32, #tpu.memory_space<vmem>>, %arg4: memref<8x8xf32, #tpu.memory_space<vmem>>, %arg5: memref<1568x32xbf16, #tpu.memory_space<vmem>>, %arg6: memref<736x128xbf16, #tpu.memory_space<vmem>>, %arg7: memref<16x128xf32, #tpu.memory_space<vmem>>, %arg8: memref<8x128xf32, #tpu.memory_space<vmem>>) attributes {dimension_semantics = [], scalar_prefetch = 0 : i64, scratch_operands = 0 : i64, tpu.core_type = #tpu.core_type<tc>} {
    %c0 = arith.constant 0 : index
    %c0_0 = arith.constant 0 : index
    %0 = vector.load %arg4[%c0, %c0_0] : memref<8x8xf32, #tpu.memory_space<vmem>>, vector<8x8xf32>
    %cst = arith.constant 0.000000e+00 : f32
    %1 = vector.broadcast %cst : f32 to vector<8x8xf32>
    %2 = arith.cmpf ogt, %0, %1 : vector<8x8xf32>
    %cst_1 = arith.constant 0.000000e+00 : f32
    %cst_2 = arith.constant -1.000000e+30 : f32
    %3 = vector.broadcast %cst_1 : f32 to vector<8x8xf32>
    %4 = vector.broadcast %cst_2 : f32 to vector<8x8xf32>
    %5 = arith.select %2, %3, %4 : vector<8x8xi1>, vector<8x8xf32>
    %c0_3 = arith.constant 0 : index
    %c0_4 = arith.constant 0 : index
    %6 = vector.load %arg0[%c0_3, %c0_4] : memref<8x768xf32, #tpu.memory_space<vmem>>, vector<8x768xf32>
    %7 = arith.truncf %6 : vector<8x768xf32> to vector<8x768xbf16>
    %c0_5 = arith.constant 0 : index
    %c0_6 = arith.constant 0 : index
    %8 = vector.load %arg5[%c0_5, %c0_6] : memref<1568x32xbf16, #tpu.memory_space<vmem>>, vector<768x32xbf16>
    %cst_7 = arith.constant dense<0.000000e+00> : vector<8x32xf32>
    %9 = tpu.matmul %7, %8, %cst_7 {dimension_numbers = #tpu.dot_dimension_numbers<[1], [0], [0], [1], [0, 0, 1, 1], [], []>} : vector<8x768xbf16>, vector<768x32xbf16>, vector<8x32xf32> -> vector<8x32xf32>
    %c0_8 = arith.constant 0 : index
    %c0_9 = arith.constant 0 : index
    %10 = vector.load %arg1[%c0_8, %c0_9] : memref<8x768xf32, #tpu.memory_space<vmem>>, vector<8x768xf32>
    %11 = arith.truncf %10 : vector<8x768xf32> to vector<8x768xbf16>
    %c768 = arith.constant 768 : index
    %c0_10 = arith.constant 0 : index
    %12 = vector.load %arg5[%c768, %c0_10] : memref<1568x32xbf16, #tpu.memory_space<vmem>>, vector<768x32xbf16>
    %cst_11 = arith.constant dense<0.000000e+00> : vector<8x32xf32>
    %13 = tpu.matmul %11, %12, %cst_11 {dimension_numbers = #tpu.dot_dimension_numbers<[1], [0], [0], [1], [0, 0, 1, 1], [], []>} : vector<8x768xbf16>, vector<768x32xbf16>, vector<8x32xf32> -> vector<8x32xf32>
    %14 = arith.addf %9, %13 : vector<8x32xf32>
    %c0_12 = arith.constant 0 : index
    %c0_13 = arith.constant 0 : index
    %15 = vector.load %arg2[%c0_12, %c0_13] : memref<8x5xf32, #tpu.memory_space<vmem>>, vector<8x5xf32>
    %16 = arith.truncf %15 : vector<8x5xf32> to vector<8x5xbf16>
    %c1536 = arith.constant 1536 : index
    %c0_14 = arith.constant 0 : index
    %17 = vector.load %arg5[%c1536, %c0_14] : memref<1568x32xbf16, #tpu.memory_space<vmem>>, vector<5x32xbf16>
    %cst_15 = arith.constant dense<0.000000e+00> : vector<8x32xf32>
    %18 = tpu.matmul %16, %17, %cst_15 {dimension_numbers = #tpu.dot_dimension_numbers<[1], [0], [0], [1], [0, 0, 1, 1], [], []>} : vector<8x5xbf16>, vector<5x32xbf16>, vector<8x32xf32> -> vector<8x32xf32>
    %19 = arith.addf %14, %18 : vector<8x32xf32>
    %c0_16 = arith.constant 0 : index
    %c0_17 = arith.constant 0 : index
    %20 = vector.load %arg3[%c0_16, %c0_17] : memref<8x3xf32, #tpu.memory_space<vmem>>, vector<8x3xf32>
    %21 = arith.truncf %20 : vector<8x3xf32> to vector<8x3xbf16>
    %c1552 = arith.constant 1552 : index
    %c0_18 = arith.constant 0 : index
    %22 = vector.load %arg5[%c1552, %c0_18] : memref<1568x32xbf16, #tpu.memory_space<vmem>>, vector<3x32xbf16>
    %cst_19 = arith.constant dense<0.000000e+00> : vector<8x32xf32>
    %23 = tpu.matmul %21, %22, %cst_19 {dimension_numbers = #tpu.dot_dimension_numbers<[1], [0], [0], [1], [0, 0, 1, 1], [], []>} : vector<8x3xbf16>, vector<3x32xbf16>, vector<8x32xf32> -> vector<8x32xf32>
    %24 = arith.addf %19, %23 : vector<8x32xf32>
    %c0_20 = arith.constant 0 : index
    %c0_21 = arith.constant 0 : index
    %25 = vector.load %arg7[%c0_20, %c0_21] : memref<16x128xf32, #tpu.memory_space<vmem>>, vector<1x32xf32>
    %26 = vector.broadcast %25 : vector<1x32xf32> to vector<8x32xf32>
    %27 = arith.addf %24, %26 : vector<8x32xf32>
    %cst_22 = arith.constant 0.000000e+00 : f32
    %28 = vector.broadcast %cst_22 : f32 to vector<8x32xf32>
    %29 = arith.cmpf oge, %27, %28 : vector<8x32xf32>
    %cst_23 = arith.constant 0.00999999977 : f32
    %30 = vector.broadcast %cst_23 : f32 to vector<8x32xf32>
    %31 = arith.mulf %30, %27 : vector<8x32xf32>
    %32 = arith.select %29, %27, %31 : vector<8x32xi1>, vector<8x32xf32>
    %c0_24 = arith.constant 0 : index
    %c0_25 = arith.constant 0 : index
    %33 = vector.load %arg6[%c0_24, %c0_25] : memref<736x128xbf16, #tpu.memory_space<vmem>>, vector<32x128xbf16>
    %34 = arith.truncf %32 : vector<8x32xf32> to vector<8x32xbf16>
    %cst_26 = arith.constant dense<0.000000e+00> : vector<8x128xf32>
    %35 = tpu.matmul %34, %33, %cst_26 {dimension_numbers = #tpu.dot_dimension_numbers<[1], [0], [0], [1], [0, 0, 1, 1], [], []>} : vector<8x32xbf16>, vector<32x128xbf16>, vector<8x128xf32> -> vector<8x128xf32>
    %c1 = arith.constant 1 : index
    %c0_27 = arith.constant 0 : index
    %36 = vector.load %arg7[%c1, %c0_27] : memref<16x128xf32, #tpu.memory_space<vmem>>, vector<1x128xf32>
    %37 = vector.broadcast %36 : vector<1x128xf32> to vector<8x128xf32>
    %38 = arith.addf %35, %37 : vector<8x128xf32>
    %cst_28 = arith.constant 0.000000e+00 : f32
    %39 = vector.broadcast %cst_28 : f32 to vector<8x128xf32>
    %40 = arith.maximumf %38, %39 : vector<8x128xf32>
    %c32 = arith.constant 32 : index
    %c0_29 = arith.constant 0 : index
    %41 = vector.load %arg6[%c32, %c0_29] : memref<736x128xbf16, #tpu.memory_space<vmem>>, vector<128x128xbf16>
    %42 = arith.truncf %40 : vector<8x128xf32> to vector<8x128xbf16>
    %cst_30 = arith.constant dense<0.000000e+00> : vector<8x128xf32>
    %43 = tpu.matmul %42, %41, %cst_30 {dimension_numbers = #tpu.dot_dimension_numbers<[1], [0], [0], [1], [0, 0, 1, 1], [], []>} : vector<8x128xbf16>, vector<128x128xbf16>, vector<8x128xf32> -> vector<8x128xf32>
    %c2 = arith.constant 2 : index
    %c0_31 = arith.constant 0 : index
    %44 = vector.load %arg7[%c2, %c0_31] : memref<16x128xf32, #tpu.memory_space<vmem>>, vector<1x128xf32>
    %45 = vector.broadcast %44 : vector<1x128xf32> to vector<8x128xf32>
    %46 = arith.addf %43, %45 : vector<8x128xf32>
    %cst_32 = arith.constant 0.000000e+00 : f32
    %47 = vector.broadcast %cst_32 : f32 to vector<8x128xf32>
    %48 = arith.maximumf %46, %47 : vector<8x128xf32>
    %c160 = arith.constant 160 : index
    %c0_33 = arith.constant 0 : index
    %49 = vector.load %arg6[%c160, %c0_33] : memref<736x128xbf16, #tpu.memory_space<vmem>>, vector<64x128xbf16>
    %50 = vector.extract_strided_slice %48 {offsets = [0, 0], sizes = [8, 64], strides = [1, 1]} : vector<8x128xf32> to vector<8x64xf32>
    %51 = arith.truncf %50 : vector<8x64xf32> to vector<8x64xbf16>
    %cst_34 = arith.constant dense<0.000000e+00> : vector<8x128xf32>
    %52 = tpu.matmul %51, %49, %cst_34 {dimension_numbers = #tpu.dot_dimension_numbers<[1], [0], [0], [1], [0, 0, 1, 1], [], []>} : vector<8x64xbf16>, vector<64x128xbf16>, vector<8x128xf32> -> vector<8x128xf32>
    %c3 = arith.constant 3 : index
    %c0_35 = arith.constant 0 : index
    %53 = vector.load %arg7[%c3, %c0_35] : memref<16x128xf32, #tpu.memory_space<vmem>>, vector<1x128xf32>
    %54 = vector.broadcast %53 : vector<1x128xf32> to vector<8x128xf32>
    %55 = arith.addf %52, %54 : vector<8x128xf32>
    %c224 = arith.constant 224 : index
    %c0_36 = arith.constant 0 : index
    %56 = vector.load %arg6[%c224, %c0_36] : memref<736x128xbf16, #tpu.memory_space<vmem>>, vector<32x128xbf16>
    %57 = vector.extract_strided_slice %55 {offsets = [0, 0], sizes = [8, 32], strides = [1, 1]} : vector<8x128xf32> to vector<8x32xf32>
    %58 = arith.truncf %57 : vector<8x32xf32> to vector<8x32xbf16>
    %cst_37 = arith.constant dense<0.000000e+00> : vector<8x128xf32>
    %59 = tpu.matmul %58, %56, %cst_37 {dimension_numbers = #tpu.dot_dimension_numbers<[1], [0], [0], [1], [0, 0, 1, 1], [], []>} : vector<8x32xbf16>, vector<32x128xbf16>, vector<8x128xf32> -> vector<8x128xf32>
    %c4 = arith.constant 4 : index
    %c0_38 = arith.constant 0 : index
    %60 = vector.load %arg7[%c4, %c0_38] : memref<16x128xf32, #tpu.memory_space<vmem>>, vector<1x128xf32>
    %61 = vector.broadcast %60 : vector<1x128xf32> to vector<8x128xf32>
    %62 = arith.addf %59, %61 : vector<8x128xf32>
    %cst_39 = arith.constant 0.000000e+00 : f32
    %63 = vector.broadcast %cst_39 : f32 to vector<8x128xf32>
    %64 = arith.cmpf oge, %62, %63 : vector<8x128xf32>
    %cst_40 = arith.constant 0.00999999977 : f32
    %65 = vector.broadcast %cst_40 : f32 to vector<8x128xf32>
    %66 = arith.mulf %65, %62 : vector<8x128xf32>
    %67 = arith.select %64, %62, %66 : vector<8x128xi1>, vector<8x128xf32>
    %c256 = arith.constant 256 : index
    %c0_41 = arith.constant 0 : index
    %68 = vector.load %arg6[%c256, %c0_41] : memref<736x128xbf16, #tpu.memory_space<vmem>>, vector<32x128xbf16>
    %69 = vector.extract_strided_slice %67 {offsets = [0, 0], sizes = [8, 32], strides = [1, 1]} : vector<8x128xf32> to vector<8x32xf32>
    %70 = arith.truncf %69 : vector<8x32xf32> to vector<8x32xbf16>
    %cst_42 = arith.constant dense<0.000000e+00> : vector<8x128xf32>
    %71 = tpu.matmul %70, %68, %cst_42 {dimension_numbers = #tpu.dot_dimension_numbers<[1], [0], [0], [1], [0, 0, 1, 1], [], []>} : vector<8x32xbf16>, vector<32x128xbf16>, vector<8x128xf32> -> vector<8x128xf32>
    %72 = vector.extract_strided_slice %71 {offsets = [0, 0], sizes = [8, 32], strides = [1, 1]} : vector<8x128xf32> to vector<8x32xf32>
    %73 = arith.truncf %72 : vector<8x32xf32> to vector<8x32xbf16>
    %c288 = arith.constant 288 : index
    %c0_43 = arith.constant 0 : index
    %74 = vector.load %arg6[%c288, %c0_43] : memref<736x128xbf16, #tpu.memory_space<vmem>>, vector<32x128xbf16>
    %cst_44 = arith.constant dense<0.000000e+00> : vector<8x128xf32>
    %75 = tpu.matmul %73, %74, %cst_44 {dimension_numbers = #tpu.dot_dimension_numbers<[1], [0], [0], [1], [0, 0, 1, 1], [], []>} : vector<8x32xbf16>, vector<32x128xbf16>, vector<8x128xf32> -> vector<8x128xf32>
    %c320 = arith.constant 320 : index
    %c0_45 = arith.constant 0 : index
    %76 = vector.load %arg6[%c320, %c0_45] : memref<736x128xbf16, #tpu.memory_space<vmem>>, vector<8x32xbf16>
    "tpu.trace_start"() <{level = 10 : i32, message = "hk,jk->hj"}> : () -> ()
    %cst_46 = arith.constant dense<0.000000e+00> : vector<8x8xf32>
    %77 = tpu.matmul %76, %73, %cst_46 {dimension_numbers = #tpu.dot_dimension_numbers<[1], [1], [0], [0], [0, 0, 1, 0], [], []>} : vector<8x32xbf16>, vector<8x32xbf16>, vector<8x8xf32> -> vector<8x8xf32>
    "tpu.trace_stop"() : () -> ()
    %78 = vector.extract_strided_slice %75 {offsets = [0, 0], sizes = [8, 1], strides = [1, 1]} : vector<8x128xf32> to vector<8x1xf32>
    %79 = vector.extract_strided_slice %77 {offsets = [0, 0], sizes = [1, 8], strides = [1, 1]} : vector<8x8xf32> to vector<1x8xf32>
    %80 = vector.broadcast %78 : vector<8x1xf32> to vector<8x8xf32>
    %81 = vector.broadcast %79 : vector<1x8xf32> to vector<8x8xf32>
    %82 = arith.addf %80, %81 : vector<8x8xf32>
    %cst_47 = arith.constant 0.000000e+00 : f32
    %83 = vector.broadcast %cst_47 : f32 to vector<8x8xf32>
    %84 = arith.cmpf oge, %82, %83 : vector<8x8xf32>
    %cst_48 = arith.constant 2.000000e-01 : f32
    %85 = vector.broadcast %cst_48 : f32 to vector<8x8xf32>
    %86 = arith.mulf %85, %82 : vector<8x8xf32>
    %87 = arith.select %84, %82, %86 : vector<8x8xi1>, vector<8x8xf32>
    %88 = arith.addf %87, %5 : vector<8x8xf32>
    %cst_49 = arith.constant dense<0xFF800000> : vector<8xf32>
    %89 = vector.multi_reduction <maximumf>, %88, %cst_49 [1] : vector<8x8xf32> to vector<8xf32>
    %90 = vector.shape_cast %89 : vector<8xf32> to vector<8x1xf32>
    %91 = vector.broadcast %90 : vector<8x1xf32> to vector<8x8xf32>
    %92 = arith.subf %88, %91 : vector<8x8xf32>
    %93 = math.exp %92 : vector<8x8xf32>
    %cst_50 = arith.constant dense<0.000000e+00> : vector<8xf32>
    %94 = vector.multi_reduction <add>, %93, %cst_50 [1] : vector<8x8xf32> to vector<8xf32>
    %95 = vector.shape_cast %94 : vector<8xf32> to vector<8x1xf32>
    %96 = tpu.reciprocal %95 {approx = true} : vector<8x1xf32> -> vector<8x1xf32>
    %97 = vector.broadcast %96 : vector<8x1xf32> to vector<8x8xf32>
    %98 = arith.mulf %93, %97 : vector<8x8xf32>
    %99 = vector.extract_strided_slice %71 {offsets = [0, 0], sizes = [8, 8], strides = [1, 1]} : vector<8x128xf32> to vector<8x8xf32>
    %cst_51 = arith.constant dense<0.000000e+00> : vector<8x8xf32>
    %100 = tpu.matmul %98, %99, %cst_51 {dimension_numbers = #tpu.dot_dimension_numbers<[1], [0], [0], [1], [0, 0, 1, 1], [], []>} : vector<8x8xf32>, vector<8x8xf32>, vector<8x8xf32> -> vector<8x8xf32>
    %101 = vector.extract_strided_slice %75 {offsets = [0, 1], sizes = [8, 1], strides = [1, 1]} : vector<8x128xf32> to vector<8x1xf32>
    %102 = vector.extract_strided_slice %77 {offsets = [1, 0], sizes = [1, 8], strides = [1, 1]} : vector<8x8xf32> to vector<1x8xf32>
    %103 = vector.broadcast %101 : vector<8x1xf32> to vector<8x8xf32>
    %104 = vector.broadcast %102 : vector<1x8xf32> to vector<8x8xf32>
    %105 = arith.addf %103, %104 : vector<8x8xf32>
    %cst_52 = arith.constant 0.000000e+00 : f32
    %106 = vector.broadcast %cst_52 : f32 to vector<8x8xf32>
    %107 = arith.cmpf oge, %105, %106 : vector<8x8xf32>
    %cst_53 = arith.constant 2.000000e-01 : f32
    %108 = vector.broadcast %cst_53 : f32 to vector<8x8xf32>
    %109 = arith.mulf %108, %105 : vector<8x8xf32>
    %110 = arith.select %107, %105, %109 : vector<8x8xi1>, vector<8x8xf32>
    %111 = arith.addf %110, %5 : vector<8x8xf32>
    %cst_54 = arith.constant dense<0xFF800000> : vector<8xf32>
    %112 = vector.multi_reduction <maximumf>, %111, %cst_54 [1] : vector<8x8xf32> to vector<8xf32>
    %113 = vector.shape_cast %112 : vector<8xf32> to vector<8x1xf32>
    %114 = vector.broadcast %113 : vector<8x1xf32> to vector<8x8xf32>
    %115 = arith.subf %111, %114 : vector<8x8xf32>
    %116 = math.exp %115 : vector<8x8xf32>
    %cst_55 = arith.constant dense<0.000000e+00> : vector<8xf32>
    %117 = vector.multi_reduction <add>, %116, %cst_55 [1] : vector<8x8xf32> to vector<8xf32>
    %118 = vector.shape_cast %117 : vector<8xf32> to vector<8x1xf32>
    %119 = tpu.reciprocal %118 {approx = true} : vector<8x1xf32> -> vector<8x1xf32>
    %120 = vector.broadcast %119 : vector<8x1xf32> to vector<8x8xf32>
    %121 = arith.mulf %116, %120 : vector<8x8xf32>
    %122 = vector.extract_strided_slice %71 {offsets = [0, 8], sizes = [8, 8], strides = [1, 1]} : vector<8x128xf32> to vector<8x8xf32>
    %cst_56 = arith.constant dense<0.000000e+00> : vector<8x8xf32>
    %123 = tpu.matmul %121, %122, %cst_56 {dimension_numbers = #tpu.dot_dimension_numbers<[1], [0], [0], [1], [0, 0, 1, 1], [], []>} : vector<8x8xf32>, vector<8x8xf32>, vector<8x8xf32> -> vector<8x8xf32>
    %124 = vector.extract_strided_slice %75 {offsets = [0, 2], sizes = [8, 1], strides = [1, 1]} : vector<8x128xf32> to vector<8x1xf32>
    %125 = vector.extract_strided_slice %77 {offsets = [2, 0], sizes = [1, 8], strides = [1, 1]} : vector<8x8xf32> to vector<1x8xf32>
    %126 = vector.broadcast %124 : vector<8x1xf32> to vector<8x8xf32>
    %127 = vector.broadcast %125 : vector<1x8xf32> to vector<8x8xf32>
    %128 = arith.addf %126, %127 : vector<8x8xf32>
    %cst_57 = arith.constant 0.000000e+00 : f32
    %129 = vector.broadcast %cst_57 : f32 to vector<8x8xf32>
    %130 = arith.cmpf oge, %128, %129 : vector<8x8xf32>
    %cst_58 = arith.constant 2.000000e-01 : f32
    %131 = vector.broadcast %cst_58 : f32 to vector<8x8xf32>
    %132 = arith.mulf %131, %128 : vector<8x8xf32>
    %133 = arith.select %130, %128, %132 : vector<8x8xi1>, vector<8x8xf32>
    %134 = arith.addf %133, %5 : vector<8x8xf32>
    %cst_59 = arith.constant dense<0xFF800000> : vector<8xf32>
    %135 = vector.multi_reduction <maximumf>, %134, %cst_59 [1] : vector<8x8xf32> to vector<8xf32>
    %136 = vector.shape_cast %135 : vector<8xf32> to vector<8x1xf32>
    %137 = vector.broadcast %136 : vector<8x1xf32> to vector<8x8xf32>
    %138 = arith.subf %134, %137 : vector<8x8xf32>
    %139 = math.exp %138 : vector<8x8xf32>
    %cst_60 = arith.constant dense<0.000000e+00> : vector<8xf32>
    %140 = vector.multi_reduction <add>, %139, %cst_60 [1] : vector<8x8xf32> to vector<8xf32>
    %141 = vector.shape_cast %140 : vector<8xf32> to vector<8x1xf32>
    %142 = tpu.reciprocal %141 {approx = true} : vector<8x1xf32> -> vector<8x1xf32>
    %143 = vector.broadcast %142 : vector<8x1xf32> to vector<8x8xf32>
    %144 = arith.mulf %139, %143 : vector<8x8xf32>
    %145 = vector.extract_strided_slice %71 {offsets = [0, 16], sizes = [8, 8], strides = [1, 1]} : vector<8x128xf32> to vector<8x8xf32>
    %cst_61 = arith.constant dense<0.000000e+00> : vector<8x8xf32>
    %146 = tpu.matmul %144, %145, %cst_61 {dimension_numbers = #tpu.dot_dimension_numbers<[1], [0], [0], [1], [0, 0, 1, 1], [], []>} : vector<8x8xf32>, vector<8x8xf32>, vector<8x8xf32> -> vector<8x8xf32>
    %147 = vector.extract_strided_slice %75 {offsets = [0, 3], sizes = [8, 1], strides = [1, 1]} : vector<8x128xf32> to vector<8x1xf32>
    %148 = vector.extract_strided_slice %77 {offsets = [3, 0], sizes = [1, 8], strides = [1, 1]} : vector<8x8xf32> to vector<1x8xf32>
    %149 = vector.broadcast %147 : vector<8x1xf32> to vector<8x8xf32>
    %150 = vector.broadcast %148 : vector<1x8xf32> to vector<8x8xf32>
    %151 = arith.addf %149, %150 : vector<8x8xf32>
    %cst_62 = arith.constant 0.000000e+00 : f32
    %152 = vector.broadcast %cst_62 : f32 to vector<8x8xf32>
    %153 = arith.cmpf oge, %151, %152 : vector<8x8xf32>
    %cst_63 = arith.constant 2.000000e-01 : f32
    %154 = vector.broadcast %cst_63 : f32 to vector<8x8xf32>
    %155 = arith.mulf %154, %151 : vector<8x8xf32>
    %156 = arith.select %153, %151, %155 : vector<8x8xi1>, vector<8x8xf32>
    %157 = arith.addf %156, %5 : vector<8x8xf32>
    %cst_64 = arith.constant dense<0xFF800000> : vector<8xf32>
    %158 = vector.multi_reduction <maximumf>, %157, %cst_64 [1] : vector<8x8xf32> to vector<8xf32>
    %159 = vector.shape_cast %158 : vector<8xf32> to vector<8x1xf32>
    %160 = vector.broadcast %159 : vector<8x1xf32> to vector<8x8xf32>
    %161 = arith.subf %157, %160 : vector<8x8xf32>
    %162 = math.exp %161 : vector<8x8xf32>
    %cst_65 = arith.constant dense<0.000000e+00> : vector<8xf32>
    %163 = vector.multi_reduction <add>, %162, %cst_65 [1] : vector<8x8xf32> to vector<8xf32>
    %164 = vector.shape_cast %163 : vector<8xf32> to vector<8x1xf32>
    %165 = tpu.reciprocal %164 {approx = true} : vector<8x1xf32> -> vector<8x1xf32>
    %166 = vector.broadcast %165 : vector<8x1xf32> to vector<8x8xf32>
    %167 = arith.mulf %162, %166 : vector<8x8xf32>
    %168 = vector.extract_strided_slice %71 {offsets = [0, 24], sizes = [8, 8], strides = [1, 1]} : vector<8x128xf32> to vector<8x8xf32>
    %cst_66 = arith.constant dense<0.000000e+00> : vector<8x8xf32>
    %169 = tpu.matmul %167, %168, %cst_66 {dimension_numbers = #tpu.dot_dimension_numbers<[1], [0], [0], [1], [0, 0, 1, 1], [], []>} : vector<8x8xf32>, vector<8x8xf32>, vector<8x8xf32> -> vector<8x8xf32>
    %170 = tpu.concatenate %100, %123, %146, %169 in 1 : vector<8x8xf32>, vector<8x8xf32>, vector<8x8xf32>, vector<8x8xf32> -> vector<8x32xf32>
    %c5 = arith.constant 5 : index
    %c0_67 = arith.constant 0 : index
    %171 = vector.load %arg7[%c5, %c0_67] : memref<16x128xf32, #tpu.memory_space<vmem>>, vector<1x32xf32>
    %172 = vector.broadcast %171 : vector<1x32xf32> to vector<8x32xf32>
    %173 = arith.addf %170, %172 : vector<8x32xf32>
    %c352 = arith.constant 352 : index
    %c0_68 = arith.constant 0 : index
    %174 = vector.load %arg6[%c352, %c0_68] : memref<736x128xbf16, #tpu.memory_space<vmem>>, vector<32x128xbf16>
    %175 = arith.truncf %173 : vector<8x32xf32> to vector<8x32xbf16>
    %cst_69 = arith.constant dense<0.000000e+00> : vector<8x128xf32>
    %176 = tpu.matmul %175, %174, %cst_69 {dimension_numbers = #tpu.dot_dimension_numbers<[1], [0], [0], [1], [0, 0, 1, 1], [], []>} : vector<8x32xbf16>, vector<32x128xbf16>, vector<8x128xf32> -> vector<8x128xf32>
    %177 = vector.extract_strided_slice %176 {offsets = [0, 0], sizes = [8, 32], strides = [1, 1]} : vector<8x128xf32> to vector<8x32xf32>
    %178 = arith.truncf %177 : vector<8x32xf32> to vector<8x32xbf16>
    %c384 = arith.constant 384 : index
    %c0_70 = arith.constant 0 : index
    %179 = vector.load %arg6[%c384, %c0_70] : memref<736x128xbf16, #tpu.memory_space<vmem>>, vector<32x128xbf16>
    %cst_71 = arith.constant dense<0.000000e+00> : vector<8x128xf32>
    %180 = tpu.matmul %178, %179, %cst_71 {dimension_numbers = #tpu.dot_dimension_numbers<[1], [0], [0], [1], [0, 0, 1, 1], [], []>} : vector<8x32xbf16>, vector<32x128xbf16>, vector<8x128xf32> -> vector<8x128xf32>
    %c416 = arith.constant 416 : index
    %c0_72 = arith.constant 0 : index
    %181 = vector.load %arg6[%c416, %c0_72] : memref<736x128xbf16, #tpu.memory_space<vmem>>, vector<8x32xbf16>
    "tpu.trace_start"() <{level = 10 : i32, message = "hk,jk->hj"}> : () -> ()
    %cst_73 = arith.constant dense<0.000000e+00> : vector<8x8xf32>
    %182 = tpu.matmul %181, %178, %cst_73 {dimension_numbers = #tpu.dot_dimension_numbers<[1], [1], [0], [0], [0, 0, 1, 0], [], []>} : vector<8x32xbf16>, vector<8x32xbf16>, vector<8x8xf32> -> vector<8x8xf32>
    "tpu.trace_stop"() : () -> ()
    %183 = vector.extract_strided_slice %180 {offsets = [0, 0], sizes = [8, 1], strides = [1, 1]} : vector<8x128xf32> to vector<8x1xf32>
    %184 = vector.extract_strided_slice %182 {offsets = [0, 0], sizes = [1, 8], strides = [1, 1]} : vector<8x8xf32> to vector<1x8xf32>
    %185 = vector.broadcast %183 : vector<8x1xf32> to vector<8x8xf32>
    %186 = vector.broadcast %184 : vector<1x8xf32> to vector<8x8xf32>
    %187 = arith.addf %185, %186 : vector<8x8xf32>
    %cst_74 = arith.constant 0.000000e+00 : f32
    %188 = vector.broadcast %cst_74 : f32 to vector<8x8xf32>
    %189 = arith.cmpf oge, %187, %188 : vector<8x8xf32>
    %cst_75 = arith.constant 2.000000e-01 : f32
    %190 = vector.broadcast %cst_75 : f32 to vector<8x8xf32>
    %191 = arith.mulf %190, %187 : vector<8x8xf32>
    %192 = arith.select %189, %187, %191 : vector<8x8xi1>, vector<8x8xf32>
    %193 = arith.addf %192, %5 : vector<8x8xf32>
    %cst_76 = arith.constant dense<0xFF800000> : vector<8xf32>
    %194 = vector.multi_reduction <maximumf>, %193, %cst_76 [1] : vector<8x8xf32> to vector<8xf32>
    %195 = vector.shape_cast %194 : vector<8xf32> to vector<8x1xf32>
    %196 = vector.broadcast %195 : vector<8x1xf32> to vector<8x8xf32>
    %197 = arith.subf %193, %196 : vector<8x8xf32>
    %198 = math.exp %197 : vector<8x8xf32>
    %cst_77 = arith.constant dense<0.000000e+00> : vector<8xf32>
    %199 = vector.multi_reduction <add>, %198, %cst_77 [1] : vector<8x8xf32> to vector<8xf32>
    %200 = vector.shape_cast %199 : vector<8xf32> to vector<8x1xf32>
    %201 = tpu.reciprocal %200 {approx = true} : vector<8x1xf32> -> vector<8x1xf32>
    %202 = vector.broadcast %201 : vector<8x1xf32> to vector<8x8xf32>
    %203 = arith.mulf %198, %202 : vector<8x8xf32>
    %204 = vector.extract_strided_slice %176 {offsets = [0, 0], sizes = [8, 32], strides = [1, 1]} : vector<8x128xf32> to vector<8x32xf32>
    %cst_78 = arith.constant dense<0.000000e+00> : vector<8x32xf32>
    %205 = tpu.matmul %203, %204, %cst_78 {dimension_numbers = #tpu.dot_dimension_numbers<[1], [0], [0], [1], [0, 0, 1, 1], [], []>} : vector<8x8xf32>, vector<8x32xf32>, vector<8x32xf32> -> vector<8x32xf32>
    %c6 = arith.constant 6 : index
    %c0_79 = arith.constant 0 : index
    %206 = vector.load %arg7[%c6, %c0_79] : memref<16x128xf32, #tpu.memory_space<vmem>>, vector<1x32xf32>
    %207 = vector.broadcast %206 : vector<1x32xf32> to vector<8x32xf32>
    %208 = arith.addf %205, %207 : vector<8x32xf32>
    %c448 = arith.constant 448 : index
    %c0_80 = arith.constant 0 : index
    %209 = vector.load %arg6[%c448, %c0_80] : memref<736x128xbf16, #tpu.memory_space<vmem>>, vector<32x128xbf16>
    %210 = arith.truncf %208 : vector<8x32xf32> to vector<8x32xbf16>
    %cst_81 = arith.constant dense<0.000000e+00> : vector<8x128xf32>
    %211 = tpu.matmul %210, %209, %cst_81 {dimension_numbers = #tpu.dot_dimension_numbers<[1], [0], [0], [1], [0, 0, 1, 1], [], []>} : vector<8x32xbf16>, vector<32x128xbf16>, vector<8x128xf32> -> vector<8x128xf32>
    %c7 = arith.constant 7 : index
    %c0_82 = arith.constant 0 : index
    %212 = vector.load %arg7[%c7, %c0_82] : memref<16x128xf32, #tpu.memory_space<vmem>>, vector<1x128xf32>
    %213 = vector.broadcast %212 : vector<1x128xf32> to vector<8x128xf32>
    %214 = arith.addf %211, %213 : vector<8x128xf32>
    %cst_83 = arith.constant 0.000000e+00 : f32
    %215 = vector.broadcast %cst_83 : f32 to vector<8x128xf32>
    %216 = arith.cmpf oge, %214, %215 : vector<8x128xf32>
    %cst_84 = arith.constant 0.00999999977 : f32
    %217 = vector.broadcast %cst_84 : f32 to vector<8x128xf32>
    %218 = arith.mulf %217, %214 : vector<8x128xf32>
    %219 = arith.select %216, %214, %218 : vector<8x128xi1>, vector<8x128xf32>
    %c480 = arith.constant 480 : index
    %c0_85 = arith.constant 0 : index
    %220 = vector.load %arg6[%c480, %c0_85] : memref<736x128xbf16, #tpu.memory_space<vmem>>, vector<32x128xbf16>
    %221 = vector.extract_strided_slice %219 {offsets = [0, 0], sizes = [8, 32], strides = [1, 1]} : vector<8x128xf32> to vector<8x32xf32>
    %222 = arith.truncf %221 : vector<8x32xf32> to vector<8x32xbf16>
    %cst_86 = arith.constant dense<0.000000e+00> : vector<8x128xf32>
    %223 = tpu.matmul %222, %220, %cst_86 {dimension_numbers = #tpu.dot_dimension_numbers<[1], [0], [0], [1], [0, 0, 1, 1], [], []>} : vector<8x32xbf16>, vector<32x128xbf16>, vector<8x128xf32> -> vector<8x128xf32>
    %c8 = arith.constant 8 : index
    %c0_87 = arith.constant 0 : index
    %224 = vector.load %arg7[%c8, %c0_87] : memref<16x128xf32, #tpu.memory_space<vmem>>, vector<1x128xf32>
    %225 = vector.broadcast %224 : vector<1x128xf32> to vector<8x128xf32>
    %226 = arith.addf %223, %225 : vector<8x128xf32>
    %cst_88 = arith.constant 0.000000e+00 : f32
    %227 = vector.broadcast %cst_88 : f32 to vector<8x128xf32>
    %228 = arith.maximumf %226, %227 : vector<8x128xf32>
    %c512 = arith.constant 512 : index
    %c0_89 = arith.constant 0 : index
    %229 = vector.load %arg6[%c512, %c0_89] : memref<736x128xbf16, #tpu.memory_space<vmem>>, vector<128x128xbf16>
    %230 = arith.truncf %228 : vector<8x128xf32> to vector<8x128xbf16>
    %cst_90 = arith.constant dense<0.000000e+00> : vector<8x128xf32>
    %231 = tpu.matmul %230, %229, %cst_90 {dimension_numbers = #tpu.dot_dimension_numbers<[1], [0], [0], [1], [0, 0, 1, 1], [], []>} : vector<8x128xbf16>, vector<128x128xbf16>, vector<8x128xf32> -> vector<8x128xf32>
    %c9 = arith.constant 9 : index
    %c0_91 = arith.constant 0 : index
    %232 = vector.load %arg7[%c9, %c0_91] : memref<16x128xf32, #tpu.memory_space<vmem>>, vector<1x128xf32>
    %233 = vector.broadcast %232 : vector<1x128xf32> to vector<8x128xf32>
    %234 = arith.addf %231, %233 : vector<8x128xf32>
    %cst_92 = arith.constant 0.000000e+00 : f32
    %235 = vector.broadcast %cst_92 : f32 to vector<8x128xf32>
    %236 = arith.maximumf %234, %235 : vector<8x128xf32>
    %c640 = arith.constant 640 : index
    %c0_93 = arith.constant 0 : index
    %237 = vector.load %arg6[%c640, %c0_93] : memref<736x128xbf16, #tpu.memory_space<vmem>>, vector<64x128xbf16>
    %238 = vector.extract_strided_slice %236 {offsets = [0, 0], sizes = [8, 64], strides = [1, 1]} : vector<8x128xf32> to vector<8x64xf32>
    %239 = arith.truncf %238 : vector<8x64xf32> to vector<8x64xbf16>
    %cst_94 = arith.constant dense<0.000000e+00> : vector<8x128xf32>
    %240 = tpu.matmul %239, %237, %cst_94 {dimension_numbers = #tpu.dot_dimension_numbers<[1], [0], [0], [1], [0, 0, 1, 1], [], []>} : vector<8x64xbf16>, vector<64x128xbf16>, vector<8x128xf32> -> vector<8x128xf32>
    %c10 = arith.constant 10 : index
    %c0_95 = arith.constant 0 : index
    %241 = vector.load %arg7[%c10, %c0_95] : memref<16x128xf32, #tpu.memory_space<vmem>>, vector<1x128xf32>
    %242 = vector.broadcast %241 : vector<1x128xf32> to vector<8x128xf32>
    %243 = arith.addf %240, %242 : vector<8x128xf32>
    %c704 = arith.constant 704 : index
    %c0_96 = arith.constant 0 : index
    %244 = vector.load %arg6[%c704, %c0_96] : memref<736x128xbf16, #tpu.memory_space<vmem>>, vector<32x128xbf16>
    %245 = vector.extract_strided_slice %243 {offsets = [0, 0], sizes = [8, 32], strides = [1, 1]} : vector<8x128xf32> to vector<8x32xf32>
    %246 = arith.truncf %245 : vector<8x32xf32> to vector<8x32xbf16>
    %cst_97 = arith.constant dense<0.000000e+00> : vector<8x128xf32>
    %247 = tpu.matmul %246, %244, %cst_97 {dimension_numbers = #tpu.dot_dimension_numbers<[1], [0], [0], [1], [0, 0, 1, 1], [], []>} : vector<8x32xbf16>, vector<32x128xbf16>, vector<8x128xf32> -> vector<8x128xf32>
    %c11 = arith.constant 11 : index
    %c0_98 = arith.constant 0 : index
    %248 = vector.load %arg7[%c11, %c0_98] : memref<16x128xf32, #tpu.memory_space<vmem>>, vector<1x128xf32>
    %249 = vector.broadcast %248 : vector<1x128xf32> to vector<8x128xf32>
    %250 = arith.addf %247, %249 : vector<8x128xf32>
    %c0_99 = arith.constant 0 : index
    %c0_100 = arith.constant 0 : index
    %251 = vector.load %arg8[%c0_99, %c0_100] : memref<8x128xf32, #tpu.memory_space<vmem>>, vector<8x128xf32>
    tpu.vector_store %arg8[%c0_99, %c0_100], %250 {strides = array<i32>} : memref<8x128xf32, #tpu.memory_space<vmem>>, vector<8x128xf32>,
    return
  }
}

</mosaic_0001>

<llo_original>
// kernel: botgat_mlp_forward.1
$region0: #{botgat_mlp_forward.1}
  #allocation0 [shape = 'u32[]', space=smem, size = 0x4, offset = 0x4, fixed_abs, tag = 'smem constant byte address 0x4 - core index']
  #allocation1 [shape = 'u32[144,128]{1,0:T(1,128)}', space=vmem, size = 0x12000, scoped, tag = 'internal scratch']
  %s0 = inlined_call_operand.vmem [shape: f32[8,768], index: 0, kind: input, shape index: {}]
  %s1 = inlined_call_operand.vmem [shape: f32[8,768], index: 1, kind: input, shape index: {}]
  %s2 = inlined_call_operand.vmem [shape: f32[8,5], index: 2, kind: input, shape index: {}]
  %s3 = inlined_call_operand.vmem [shape: f32[8,3], index: 3, kind: input, shape index: {}]
  %s4 = inlined_call_operand.vmem [shape: f32[8,8], index: 4, kind: input, shape index: {}]
  %s5 = inlined_call_operand.vmem [shape: bf16[1568,32], index: 5, kind: input, shape index: {}]
  %s6 = inlined_call_operand.vmem [shape: bf16[736,128], index: 6, kind: input, shape index: {}]
  %s7 = inlined_call_operand.vmem [shape: f32[16,128], index: 7, kind: input, shape index: {}]
  %s8 = inlined_call_operand.vmem [shape: f32[8,128], index: 8, kind: output, shape index: {}]
  %s9 = sld [smem:[#allocation0]]
  $region42: #{botgat_mlp_forward.1} parent=0
    _
  %s11 = ssub.s32 1, %s9
  %s12 = scalar_select 0, %s11, %s9
  // Predicated region
  $region2: #{botgat_mlp_forward.1} parent=0 // pred_check
    _
  $region3: #{botgat_mlp_forward.1} parent=0 // pred_check_branch
    %14 = sbr.rel (0) target = $region5
  $region4: #{botgat_mlp_forward.1} parent=0 // pred_region
    _
  $region5: #{botgat_mlp_forward.1} parent=0 // pred_fallthru
    _
  // Predicated region
  $region6: #{botgat_mlp_forward.1} parent=0 // pred_check
    _
  $region7: #{botgat_mlp_forward.1} parent=0 // pred_check_branch
    %16 = sbr.rel (0) target = $region9
  $region8: #{botgat_mlp_forward.1} parent=0 // pred_region
    _
  $region9: #{botgat_mlp_forward.1} parent=0 // pred_fallthru
    _
  // Predicated region
  $region10: #{botgat_mlp_forward.1} parent=0 // pred_check
    _
  $region11: #{botgat_mlp_forward.1} parent=0 // pred_check_branch
    %18 = sbr.rel (0) target = $region13
  $region12: #{botgat_mlp_forward.1} parent=0 // pred_region
    _
  $region13: #{botgat_mlp_forward.1} parent=0 // pred_fallthru
    _
  // Predicated region
  $region14: #{botgat_mlp_forward.1} parent=0 // pred_check
    _
  $region15: #{botgat_mlp_forward.1} parent=0 // pred_check_branch
    %20 = sbr.rel (0) target = $region17
  $region16: #{botgat_mlp_forward.1} parent=0 // pred_region
    _
  $region17: #{botgat_mlp_forward.1} parent=0 // pred_fallthru
    _
  // Predicated region
  $region18: #{botgat_mlp_forward.1} parent=0 // pred_check
    _
  $region19: #{botgat_mlp_forward.1} parent=0 // pred_check_branch
    %22 = sbr.rel (0) target = $region21
  $region20: #{botgat_mlp_forward.1} parent=0 // pred_region
    _
  $region21: #{botgat_mlp_forward.1} parent=0 // pred_fallthru
    _
  // Predicated region
  $region22: #{botgat_mlp_forward.1} parent=0 // pred_check
    _
  $region23: #{botgat_mlp_forward.1} parent=0 // pred_check_branch
    %24 = sbr.rel (0) target = $region25
  $region24: #{botgat_mlp_forward.1} parent=0 // pred_region
    _
  $region25: #{botgat_mlp_forward.1} parent=0 // pred_fallthru
    _
  // Predicated region
  $region26: #{botgat_mlp_forward.1} parent=0 // pred_check
    _
  $region27: #{botgat_mlp_forward.1} parent=0 // pred_check_branch
    %26 = sbr.rel (0) target = $region29
  $region28: #{botgat_mlp_forward.1} parent=0 // pred_region
    _
  $region29: #{botgat_mlp_forward.1} parent=0 // pred_fallthru
    _
  // Predicated region
  $region30: #{botgat_mlp_forward.1} parent=0 // pred_check
    _
  $region31: #{botgat_mlp_forward.1} parent=0 // pred_check_branch
    %28 = sbr.rel (0) target = $region33
  $region32: #{botgat_mlp_forward.1} parent=0 // pred_region
    _
  $region33: #{botgat_mlp_forward.1} parent=0 // pred_fallthru
    _
  %v30 = vld [vmem:[%s4] sm:$0xff]
  %vm31 = vcmp.gt.f32.partialorder %v30, 0.0
  %v32 = vsel %vm31, 0.0, -1e+30
  %v33 = vld [vmem:[%s0] sm:$0xff]
  %v34 = vld [vmem:[%s0 + $0x8] sm:$0xff]
  %v35 = vld [vmem:[%s0 + $0x10] sm:$0xff]
  %v36 = vld [vmem:[%s0 + $0x18] sm:$0xff]
  %v37 = vld [vmem:[%s0 + $0x20] sm:$0xff]
  %v38 = vld [vmem:[%s0 + $0x28] sm:$0xff]
  %v39 = vpack.c.bf16 %v33, %v33
  %v40 = vpack.c.bf16 %v34, %v34
  %v41 = vpack.c.bf16 %v35, %v35
  %v42 = vpack.c.bf16 %v36, %v36
  %v43 = vpack.c.bf16 %v37, %v37
  %v44 = vpack.c.bf16 %v38, %v38
  %v45 = vld [vmem:[%s5] sm:$0xf]
  %v46 = vld [vmem:[%s5 + $0x4] sm:$0xf]
  %v47 = vld [vmem:[%s5 + $0x8] sm:$0xf]
  %v48 = vld [vmem:[%s5 + $0xc] sm:$0xf]
  %v49 = vld [vmem:[%s5 + $0x10] sm:$0xf]
  %v50 = vld [vmem:[%s5 + $0x14] sm:$0xf]
  %v51 = vld [vmem:[%s5 + $0x18] sm:$0xf]
  %v52 = vld [vmem:[%s5 + $0x1c] sm:$0xf]
  %v53 = vld [vmem:[%s5 + $0x20] sm:$0xf]
  %v54 = vld [vmem:[%s5 + $0x24] sm:$0xf]
  %v55 = vld [vmem:[%s5 + $0x28] sm:$0xf]
  %v56 = vld [vmem:[%s5 + $0x2c] sm:$0xf]
  %v57 = vld [vmem:[%s5 + $0x30] sm:$0xf]
  %v58 = vld [vmem:[%s5 + $0x34] sm:$0xf]
  %v59 = vld [vmem:[%s5 + $0x38] sm:$0xf]
  %v60 = vld [vmem:[%s5 + $0x3c] sm:$0xf]
  %v61 = vld [vmem:[%s5 + $0x40] sm:$0xf]
  %v62 = vld [vmem:[%s5 + $0x44] sm:$0xf]
  %v63 = vld [vmem:[%s5 + $0x48] sm:$0xf]
  %v64 = vld [vmem:[%s5 + $0x4c] sm:$0xf]
  %v65 = vld [vmem:[%s5 + $0x50] sm:$0xf]
  %v66 = vld [vmem:[%s5 + $0x54] sm:$0xf]
  %v67 = vld [vmem:[%s5 + $0x58] sm:$0xf]
  %v68 = vld [vmem:[%s5 + $0x5c] sm:$0xf]
  %v69 = vld [vmem:[%s5 + $0x60] sm:$0xf]
  %v70 = vld [vmem:[%s5 + $0x64] sm:$0xf]
  %v71 = vld [vmem:[%s5 + $0x68] sm:$0xf]
  %v72 = vld [vmem:[%s5 + $0x6c] sm:$0xf]
  %v73 = vld [vmem:[%s5 + $0x70] sm:$0xf]
  %v74 = vld [vmem:[%s5 + $0x74] sm:$0xf]
  %v75 = vld [vmem:[%s5 + $0x78] sm:$0xf]
  %v76 = vld [vmem:[%s5 + $0x7c] sm:$0xf]
  %v77 = vld [vmem:[%s5 + $0x80] sm:$0xf]
  %v78 = vld [vmem:[%s5 + $0x84] sm:$0xf]
  %v79 = vld [vmem:[%s5 + $0x88] sm:$0xf]
  %v80 = vld [vmem:[%s5 + $0x8c] sm:$0xf]
  %v81 = vld [vmem:[%s5 + $0x90] sm:$0xf]
  %v82 = vld [vmem:[%s5 + $0x94] sm:$0xf]
  %v83 = vld [vmem:[%s5 + $0x98] sm:$0xf]
  %v84 = vld [vmem:[%s5 + $0x9c] sm:$0xf]
  %v85 = vld [vmem:[%s5 + $0xa0] sm:$0xf]
  %v86 = vld [vmem:[%s5 + $0xa4] sm:$0xf]
  %v87 = vld [vmem:[%s5 + $0xa8] sm:$0xf]
  %v88 = vld [vmem:[%s5 + $0xac] sm:$0xf]
  %v89 = vld [vmem:[%s5 + $0xb0] sm:$0xf]
  %v90 = vld [vmem:[%s5 + $0xb4] sm:$0xf]
  %v91 = vld [vmem:[%s5 + $0xb8] sm:$0xf]
  %v92 = vld [vmem:[%s5 + $0xbc] sm:$0xf]
  %v93 = vld [vmem:[%s5 + $0xc0] sm:$0xf]
  %v94 = vld [vmem:[%s5 + $0xc4] sm:$0xf]
  %v95 = vld [vmem:[%s5 + $0xc8] sm:$0xf]
  %v96 = vld [vmem:[%s5 + $0xcc] sm:$0xf]
  %v97 = vld [vmem:[%s5 + $0xd0] sm:$0xf]
  %v98 = vld [vmem:[%s5 + $0xd4] sm:$0xf]
  %v99 = vld [vmem:[%s5 + $0xd8] sm:$0xf]
  %v100 = vld [vmem:[%s5 + $0xdc] sm:$0xf]
  %v101 = vld [vmem:[%s5 + $0xe0] sm:$0xf]
  %v102 = vld [vmem:[%s5 + $0xe4] sm:$0xf]
  %v103 = vld [vmem:[%s5 + $0xe8] sm:$0xf]
  %v104 = vld [vmem:[%s5 + $0xec] sm:$0xf]
  %v105 = vld [vmem:[%s5 + $0xf0] sm:$0xf]
  %v106 = vld [vmem:[%s5 + $0xf4] sm:$0xf]
  %v107 = vld [vmem:[%s5 + $0xf8] sm:$0xf]
  %v108 = vld [vmem:[%s5 + $0xfc] sm:$0xf]
  %v109 = vld [vmem:[%s5 + $0x100] sm:$0xf]
  %v110 = vld [vmem:[%s5 + $0x104] sm:$0xf]
  %v111 = vld [vmem:[%s5 + $0x108] sm:$0xf]
  %v112 = vld [vmem:[%s5 + $0x10c] sm:$0xf]
  %v113 = vld [vmem:[%s5 + $0x110] sm:$0xf]
  %v114 = vld [vmem:[%s5 + $0x114] sm:$0xf]
  %v115 = vld [vmem:[%s5 + $0x118] sm:$0xf]
  %v116 = vld [vmem:[%s5 + $0x11c] sm:$0xf]
  %v117 = vld [vmem:[%s5 + $0x120] sm:$0xf]
  %v118 = vld [vmem:[%s5 + $0x124] sm:$0xf]
  %v119 = vld [vmem:[%s5 + $0x128] sm:$0xf]
  %v120 = vld [vmem:[%s5 + $0x12c] sm:$0xf]
  %v121 = vld [vmem:[%s5 + $0x130] sm:$0xf]
  %v122 = vld [vmem:[%s5 + $0x134] sm:$0xf]
  %v123 = vld [vmem:[%s5 + $0x138] sm:$0xf]
  %v124 = vld [vmem:[%s5 + $0x13c] sm:$0xf]
  %v125 = vld [vmem:[%s5 + $0x140] sm:$0xf]
  %v126 = vld [vmem:[%s5 + $0x144] sm:$0xf]
  %v127 = vld [vmem:[%s5 + $0x148] sm:$0xf]
  %v128 = vld [vmem:[%s5 + $0x14c] sm:$0xf]
  %v129 = vld [vmem:[%s5 + $0x150] sm:$0xf]
  %v130 = vld [vmem:[%s5 + $0x154] sm:$0xf]
  %v131 = vld [vmem:[%s5 + $0x158] sm:$0xf]
  %v132 = vld [vmem:[%s5 + $0x15c] sm:$0xf]
  %v133 = vld [vmem:[%s5 + $0x160] sm:$0xf]
  %v134 = vld [vmem:[%s5 + $0x164] sm:$0xf]
  %v135 = vld [vmem:[%s5 + $0x168] sm:$0xf]
  %v136 = vld [vmem:[%s5 + $0x16c] sm:$0xf]
  %v137 = vld [vmem:[%s5 + $0x170] sm:$0xf]
  %v138 = vld [vmem:[%s5 + $0x174] sm:$0xf]
  %v139 = vld [vmem:[%s5 + $0x178] sm:$0xf]
  %v140 = vld [vmem:[%s5 + $0x17c] sm:$0xf]
  %v141 = vld [vmem:[%s1] sm:$0xff]
  %v142 = vld [vmem:[%s1 + $0x8] sm:$0xff]
  %v143 = vld [vmem:[%s1 + $0x10] sm:$0xff]
  %v144 = vld [vmem:[%s1 + $0x18] sm:$0xff]
  %v145 = vld [vmem:[%s1 + $0x20] sm:$0xff]
  %v146 = vld [vmem:[%s1 + $0x28] sm:$0xff]
  %v147 = vpack.c.bf16 %v141, %v141
  %v148 = vpack.c.bf16 %v142, %v142
  %v149 = vpack.c.bf16 %v143, %v143
  %v150 = vpack.c.bf16 %v144, %v144
  %v151 = vpack.c.bf16 %v145, %v145
  %v152 = vpack.c.bf16 %v146, %v146
  %v153 = vld [vmem:[%s5 + $0x180] sm:$0xf]
  %v154 = vld [vmem:[%s5 + $0x184] sm:$0xf]
  %v155 = vld [vmem:[%s5 + $0x188] sm:$0xf]
  %v156 = vld [vmem:[%s5 + $0x18c] sm:$0xf]
  %v157 = vld [vmem:[%s5 + $0x190] sm:$0xf]
  %v158 = vld [vmem:[%s5 + $0x194] sm:$0xf]
  %v159 = vld [vmem:[%s5 + $0x198] sm:$0xf]
  %v160 = vld [vmem:[%s5 + $0x19c] sm:$0xf]
  %v161 = vld [vmem:[%s5 + $0x1a0] sm:$0xf]
  %v162 = vld [vmem:[%s5 + $0x1a4] sm:$0xf]
  %v163 = vld [vmem:[%s5 + $0x1a8] sm:$0xf]
  %v164 = vld [vmem:[%s5 + $0x1ac] sm:$0xf]
  %v165 = vld [vmem:[%s5 + $0x1b0] sm:$0xf]
  %v166 = vld [vmem:[%s5 + $0x1b4] sm:$0xf]
  %v167 = vld [vmem:[%s5 + $0x1b8] sm:$0xf]
  %v168 = vld [vmem:[%s5 + $0x1bc] sm:$0xf]
  %v169 = vld [vmem:[%s5 + $0x1c0] sm:$0xf]
  %v170 = vld [vmem:[%s5 + $0x1c4] sm:$0xf]
  %v171 = vld [vmem:[%s5 + $0x1c8] sm:$0xf]
  %v172 = vld [vmem:[%s5 + $0x1cc] sm:$0xf]
  %v173 = vld [vmem:[%s5 + $0x1d0] sm:$0xf]
  %v174 = vld [vmem:[%s5 + $0x1d4] sm:$0xf]
  %v175 = vld [vmem:[%s5 + $0x1d8] sm:$0xf]
  %v176 = vld [vmem:[%s5 + $0x1dc] sm:$0xf]
  %v177 = vld [vmem:[%s5 + $0x1e0] sm:$0xf]
  %v178 = vld [vmem:[%s5 + $0x1e4] sm:$0xf]
  %v179 = vld [vmem:[%s5 + $0x1e8] sm:$0xf]
  %v180 = vld [vmem:[%s5 + $0x1ec] sm:$0xf]
  %v181 = vld [vmem:[%s5 + $0x1f0] sm:$0xf]
  %v182 = vld [vmem:[%s5 + $0x1f4] sm:$0xf]
  %v183 = vld [vmem:[%s5 + $0x1f8] sm:$0xf]
  %v184 = vld [vmem:[%s5 + $0x1fc] sm:$0xf]
  %v185 = vld [vmem:[%s5 + $0x200] sm:$0xf]
  %v186 = vld [vmem:[%s5 + $0x204] sm:$0xf]
  %v187 = vld [vmem:[%s5 + $0x208] sm:$0xf]
  %v188 = vld [vmem:[%s5 + $0x20c] sm:$0xf]
  %v189 = vld [vmem:[%s5 + $0x210] sm:$0xf]
  %v190 = vld [vmem:[%s5 + $0x214] sm:$0xf]
  %v191 = vld [vmem:[%s5 + $0x218] sm:$0xf]
  %v192 = vld [vmem:[%s5 + $0x21c] sm:$0xf]
  %v193 = vld [vmem:[%s5 + $0x220] sm:$0xf]
  %v194 = vld [vmem:[%s5 + $0x224] sm:$0xf]
  %v195 = vld [vmem:[%s5 + $0x228] sm:$0xf]
  %v196 = vld [vmem:[%s5 + $0x22c] sm:$0xf]
  %v197 = vld [vmem:[%s5 + $0x230] sm:$0xf]
  %v198 = vld [vmem:[%s5 + $0x234] sm:$0xf]
  %v199 = vld [vmem:[%s5 + $0x238] sm:$0xf]
  %v200 = vld [vmem:[%s5 + $0x23c] sm:$0xf]
  %v201 = vld [vmem:[%s5 + $0x240] sm:$0xf]
  %v202 = vld [vmem:[%s5 + $0x244] sm:$0xf]
  %v203 = vld [vmem:[%s5 + $0x248] sm:$0xf]
  %v204 = vld [vmem:[%s5 + $0x24c] sm:$0xf]
  %v205 = vld [vmem:[%s5 + $0x250] sm:$0xf]
  %v206 = vld [vmem:[%s5 + $0x254] sm:$0xf]
  %v207 = vld [vmem:[%s5 + $0x258] sm:$0xf]
  %v208 = vld [vmem:[%s5 + $0x25c] sm:$0xf]
  %v209 = vld [vmem:[%s5 + $0x260] sm:$0xf]
  %v210 = vld [vmem:[%s5 + $0x264] sm:$0xf]
  %v211 = vld [vmem:[%s5 + $0x268] sm:$0xf]
  %v212 = vld [vmem:[%s5 + $0x26c] sm:$0xf]
  %v213 = vld [vmem:[%s5 + $0x270] sm:$0xf]
  %v214 = vld [vmem:[%s5 + $0x274] sm:$0xf]
  %v215 = vld [vmem:[%s5 + $0x278] sm:$0xf]
  %v216 = vld [vmem:[%s5 + $0x27c] sm:$0xf]
  %v217 = vld [vmem:[%s5 + $0x280] sm:$0xf]
  %v218 = vld [vmem:[%s5 + $0x284] sm:$0xf]
  %v219 = vld [vmem:[%s5 + $0x288] sm:$0xf]
  %v220 = vld [vmem:[%s5 + $0x28c] sm:$0xf]
  %v221 = vld [vmem:[%s5 + $0x290] sm:$0xf]
  %v222 = vld [vmem:[%s5 + $0x294] sm:$0xf]
  %v223 = vld [vmem:[%s5 + $0x298] sm:$0xf]
  %v224 = vld [vmem:[%s5 + $0x29c] sm:$0xf]
  %v225 = vld [vmem:[%s5 + $0x2a0] sm:$0xf]
  %v226 = vld [vmem:[%s5 + $0x2a4] sm:$0xf]
  %v227 = vld [vmem:[%s5 + $0x2a8] sm:$0xf]
  %v228 = vld [vmem:[%s5 + $0x2ac] sm:$0xf]
  %v229 = vld [vmem:[%s5 + $0x2b0] sm:$0xf]
  %v230 = vld [vmem:[%s5 + $0x2b4] sm:$0xf]
  %v231 = vld [vmem:[%s5 + $0x2b8] sm:$0xf]
  %v232 = vld [vmem:[%s5 + $0x2bc] sm:$0xf]
  %v233 = vld [vmem:[%s5 + $0x2c0] sm:$0xf]
  %v234 = vld [vmem:[%s5 + $0x2c4] sm:$0xf]
  %v235 = vld [vmem:[%s5 + $0x2c8] sm:$0xf]
  %v236 = vld [vmem:[%s5 + $0x2cc] sm:$0xf]
  %v237 = vld [vmem:[%s5 + $0x2d0] sm:$0xf]
  %v238 = vld [vmem:[%s5 + $0x2d4] sm:$0xf]
  %v239 = vld [vmem:[%s5 + $0x2d8] sm:$0xf]
  %v240 = vld [vmem:[%s5 + $0x2dc] sm:$0xf]
  %v241 = vld [vmem:[%s5 + $0x2e0] sm:$0xf]
  %v242 = vld [vmem:[%s5 + $0x2e4] sm:$0xf]
  %v243 = vld [vmem:[%s5 + $0x2e8] sm:$0xf]
  %v244 = vld [vmem:[%s5 + $0x2ec] sm:$0xf]
  %v245 = vld [vmem:[%s5 + $0x2f0] sm:$0xf]
  %v246 = vld [vmem:[%s5 + $0x2f4] sm:$0xf]
  %v247 = vld [vmem:[%s5 + $0x2f8] sm:$0xf]
  %v248 = vld [vmem:[%s5 + $0x2fc] sm:$0xf]
  %v345 = vunpack.c.l.b16 %v153
  %v346 = vunpack.c.l.b16 %v154
  %v347 = vunpack.c.l.b16 %v155
  %v348 = vunpack.c.l.b16 %v156
  %v349 = vunpack.c.l.b16 %v157
  %v350 = vunpack.c.l.b16 %v158
  %v351 = vunpack.c.l.b16 %v159
  %v352 = vunpack.c.l.b16 %v160
  %v353 = vunpack.c.l.b16 %v161
  %v354 = vunpack.c.l.b16 %v162
  %v355 = vunpack.c.l.b16 %v163
  %v356 = vunpack.c.l.b16 %v164
  %v357 = vunpack.c.l.b16 %v165
  %v358 = vunpack.c.l.b16 %v166
  %v359 = vunpack.c.l.b16 %v167
  %v360 = vunpack.c.l.b16 %v168
  %v361 = vunpack.c.l.b16 %v169
  %v362 = vunpack.c.l.b16 %v170
  %v363 = vunpack.c.l.b16 %v171
  %v364 = vunpack.c.l.b16 %v172
  %v365 = vunpack.c.l.b16 %v173
  %v366 = vunpack.c.l.b16 %v174
  %v367 = vunpack.c.l.b16 %v175
  %v368 = vunpack.c.l.b16 %v176
  %v369 = vunpack.c.l.b16 %v177
  %v370 = vunpack.c.l.b16 %v178
  %v371 = vunpack.c.l.b16 %v179
  %v372 = vunpack.c.l.b16 %v180
  %v373 = vunpack.c.l.b16 %v181
  %v374 = vunpack.c.l.b16 %v182
  %v375 = vunpack.c.l.b16 %v183
  %v376 = vunpack.c.l.b16 %v184
  %v377 = vunpack.c.l.b16 %v185
  %v378 = vunpack.c.l.b16 %v186
  %v379 = vunpack.c.l.b16 %v187
  %v380 = vunpack.c.l.b16 %v188
  %v381 = vunpack.c.l.b16 %v189
  %v382 = vunpack.c.l.b16 %v190
  %v383 = vunpack.c.l.b16 %v191
  %v384 = vunpack.c.l.b16 %v192
  %v385 = vunpack.c.l.b16 %v193
  %v386 = vunpack.c.l.b16 %v194
  %v387 = vunpack.c.l.b16 %v195
  %v388 = vunpack.c.l.b16 %v196
  %v389 = vunpack.c.l.b16 %v197
  %v390 = vunpack.c.l.b16 %v198
  %v391 = vunpack.c.l.b16 %v199
  %v392 = vunpack.c.l.b16 %v200
  %v393 = vunpack.c.l.b16 %v201
  %v394 = vunpack.c.l.b16 %v202
  %v395 = vunpack.c.l.b16 %v203
  %v396 = vunpack.c.l.b16 %v204
  %v397 = vunpack.c.l.b16 %v205
  %v398 = vunpack.c.l.b16 %v206
  %v399 = vunpack.c.l.b16 %v207
  %v400 = vunpack.c.l.b16 %v208
  %v401 = vunpack.c.l.b16 %v209
  %v402 = vunpack.c.l.b16 %v210
  %v403 = vunpack.c.l.b16 %v211
  %v404 = vunpack.c.l.b16 %v212
  %v405 = vunpack.c.l.b16 %v213
  %v406 = vunpack.c.l.b16 %v214
  %v407 = vunpack.c.l.b16 %v215
  %v408 = vunpack.c.l.b16 %v216
  %v409 = vunpack.c.l.b16 %v217
  %v410 = vunpack.c.l.b16 %v218
  %v411 = vunpack.c.l.b16 %v219
  %v412 = vunpack.c.l.b16 %v220
  %v413 = vunpack.c.l.b16 %v221
  %v414 = vunpack.c.l.b16 %v222
  %v415 = vunpack.c.l.b16 %v223
  %v416 = vunpack.c.l.b16 %v224
  %v417 = vunpack.c.l.b16 %v225
  %v418 = vunpack.c.l.b16 %v226
  %v419 = vunpack.c.l.b16 %v227
  %v420 = vunpack.c.l.b16 %v228
  %v421 = vunpack.c.l.b16 %v229
  %v422 = vunpack.c.l.b16 %v230
  %v423 = vunpack.c.l.b16 %v231
  %v424 = vunpack.c.l.b16 %v232
  %v425 = vunpack.c.l.b16 %v233
  %v426 = vunpack.c.l.b16 %v234
  %v427 = vunpack.c.l.b16 %v235
  %v428 = vunpack.c.l.b16 %v236
  %v429 = vunpack.c.l.b16 %v237
  %v430 = vunpack.c.l.b16 %v238
  %v431 = vunpack.c.l.b16 %v239
  %v432 = vunpack.c.l.b16 %v240
  %v433 = vunpack.c.l.b16 %v241
  %v434 = vunpack.c.l.b16 %v242
  %v435 = vunpack.c.l.b16 %v243
  %v436 = vunpack.c.l.b16 %v244
  %v437 = vunpack.c.l.b16 %v245
  %v438 = vunpack.c.l.b16 %v246
  %v439 = vunpack.c.l.b16 %v247
  %v440 = vunpack.c.l.b16 %v248
  %v441 = vpack.c.b16 %v346, %v345
  %v442 = vpack.c.b16 %v348, %v347
  %v443 = vpack.c.b16 %v350, %v349
  %v444 = vpack.c.b16 %v352, %v351
  %v445 = vpack.c.b16 %v354, %v353
  %v446 = vpack.c.b16 %v356, %v355
  %v447 = vpack.c.b16 %v358, %v357
  %v448 = vpack.c.b16 %v360, %v359
  %v449 = vpack.c.b16 %v362, %v361
  %v450 = vpack.c.b16 %v364, %v363
  %v451 = vpack.c.b16 %v366, %v365
  %v452 = vpack.c.b16 %v368, %v367
  %v453 = vpack.c.b16 %v370, %v369
  %v454 = vpack.c.b16 %v372, %v371
  %v455 = vpack.c.b16 %v374, %v373
  %v456 = vpack.c.b16 %v376, %v375
  %v457 = vpack.c.b16 %v378, %v377
  %v458 = vpack.c.b16 %v380, %v379
  %v459 = vpack.c.b16 %v382, %v381
  %v460 = vpack.c.b16 %v384, %v383
  %v461 = vpack.c.b16 %v386, %v385
  %v462 = vpack.c.b16 %v388, %v387
  %v463 = vpack.c.b16 %v390, %v389
  %v464 = vpack.c.b16 %v392, %v391
  %v465 = vpack.c.b16 %v394, %v393
  %v466 = vpack.c.b16 %v396, %v395
  %v467 = vpack.c.b16 %v398, %v397
  %v468 = vpack.c.b16 %v400, %v399
  %v469 = vpack.c.b16 %v402, %v401
  %v470 = vpack.c.b16 %v404, %v403
  %v471 = vpack.c.b16 %v406, %v405
  %v472 = vpack.c.b16 %v408, %v407
  %v473 = vpack.c.b16 %v410, %v409
  %v474 = vpack.c.b16 %v412, %v411
  %v475 = vpack.c.b16 %v414, %v413
  %v476 = vpack.c.b16 %v416, %v415
  %v477 = vpack.c.b16 %v418, %v417
  %v478 = vpack.c.b16 %v420, %v419
  %v479 = vpack.c.b16 %v422, %v421
  %v480 = vpack.c.b16 %v424, %v423
  %v481 = vpack.c.b16 %v426, %v425
  %v482 = vpack.c.b16 %v428, %v427
  %v483 = vpack.c.b16 %v430, %v429
  %v484 = vpack.c.b16 %v432, %v431
  %v485 = vpack.c.b16 %v434, %v433
  %v486 = vpack.c.b16 %v436, %v435
  %v487 = vpack.c.b16 %v438, %v437
  %v488 = vpack.c.b16 %v440, %v439
  %537 = vmatprep.subr.bf16.mxu0 0
  %538 = vmatpush1.bf16.msra.mxu0 %v441
  %539 = vmatprep.subr.bf16.mxu0 0
  %540 = vmatpush1.bf16.msra.mxu0 %v442
  %541 = vmatprep.subr.bf16.mxu0 0
  %542 = vmatpush1.bf16.msra.mxu0 %v443
  %543 = vmatprep.subr.bf16.mxu0 0
  %544 = vmatpush1.bf16.msra.mxu0 %v444
  %545 = vmatprep.subr.bf16.mxu0 0
  %546 = vmatpush1.bf16.msra.mxu0 %v445
  %547 = vmatprep.subr.bf16.mxu0 0
  %548 = vmatpush1.bf16.msra.mxu0 %v446
  %549 = vmatprep.subr.bf16.mxu0 0
  %550 = vmatpush1.bf16.msra.mxu0 %v447
  %551 = vmatprep.subr.bf16.mxu0 0
  %552 = vmatpush1.bf16.msra.mxu0 %v448
  %553 = vmatprep.subr.bf16.mxu0 0
  %554 = vmatpush1.bf16.msra.mxu0 %v449
  %555 = vmatprep.subr.bf16.mxu0 0
  %556 = vmatpush1.bf16.msra.mxu0 %v450
  %557 = vmatprep.subr.bf16.mxu0 0
  %558 = vmatpush1.bf16.msra.mxu0 %v451
  %559 = vmatprep.subr.bf16.mxu0 0
  %560 = vmatpush1.bf16.msra.mxu0 %v452
  %561 = vmatprep.subr.bf16.mxu0 0
  %562 = vmatpush1.bf16.msra.mxu0 %v453
  %563 = vmatprep.subr.bf16.mxu0 0
  %564 = vmatpush1.bf16.msra.mxu0 %v454
  %565 = vmatprep.subr.bf16.mxu0 0
  %566 = vmatpush1.bf16.msra.mxu0 %v455
  %567 = vmatprep.subr.bf16.mxu0 0
  %568 = vmatpush1.bf16.msra.mxu0 %v456
  %569 = vmatprep.mubr.bf16.mxu0 %v148
  %570 = vmatmul.mubr.bf16.gmra.mrb[0].mxu0 %v147
  %v571 = vpop.f32.mrb[0].mxu0
  %v572 = vadd.f32 0.0, %v571
  %v573 = vpop.f32.mrb[0].mxu0
  %v574 = vpop.f32.mrb[0].mxu0
  %v575 = vpop.f32.mrb[0].mxu0
  %576 = vdwg.mxu0
  %577 = vmatprep.subr.bf16.mxu0 0
  %578 = vmatpush1.bf16.msra.mxu0 %v457
  %579 = vmatprep.subr.bf16.mxu0 0
  %580 = vmatpush1.bf16.msra.mxu0 %v458
  %581 = vmatprep.subr.bf16.mxu0 0
  %582 = vmatpush1.bf16.msra.mxu0 %v459
  %583 = vmatprep.subr.bf16.mxu0 0
  %584 = vmatpush1.bf16.msra.mxu0 %v460
  %585 = vmatprep.subr.bf16.mxu0 0
  %586 = vmatpush1.bf16.msra.mxu0 %v461
  %587 = vmatprep.subr.bf16.mxu0 0
  %588 = vmatpush1.bf16.msra.mxu0 %v462
  %589 = vmatprep.subr.bf16.mxu0 0
  %590 = vmatpush1.bf16.msra.mxu0 %v463
  %591 = vmatprep.subr.bf16.mxu0 0
  %592 = vmatpush1.bf16.msra.mxu0 %v464
  %593 = vmatprep.subr.bf16.mxu0 0
  %594 = vmatpush1.bf16.msra.mxu0 %v465
  %595 = vmatprep.subr.bf16.mxu0 0
  %596 = vmatpush1.bf16.msra.mxu0 %v466
  %597 = vmatprep.subr.bf16.mxu0 0
  %598 = vmatpush1.bf16.msra.mxu0 %v467
  %599 = vmatprep.subr.bf16.mxu0 0
  %600 = vmatpush1.bf16.msra.mxu0 %v468
  %601 = vmatprep.subr.bf16.mxu0 0
  %602 = vmatpush1.bf16.msra.mxu0 %v469
  %603 = vmatprep.subr.bf16.mxu0 0
  %604 = vmatpush1.bf16.msra.mxu0 %v470
  %605 = vmatprep.subr.bf16.mxu0 0
  %606 = vmatpush1.bf16.msra.mxu0 %v471
  %607 = vmatprep.subr.bf16.mxu0 0
  %608 = vmatpush1.bf16.msra.mxu0 %v472
  %609 = vmatprep.mubr.bf16.mxu0 %v150
  %610 = vmatmul.mubr.bf16.gmra.mrb[0].mxu0 %v149
  %v611 = vpop.f32.mrb[0].mxu0
  %v612 = vadd.f32 %v572, %v611
  %v613 = vpop.f32.mrb[0].mxu0
  %v614 = vpop.f32.mrb[0].mxu0
  %v615 = vpop.f32.mrb[0].mxu0
  %616 = vdwg.mxu0
  %617 = vmatprep.subr.bf16.mxu0 0
  %618 = vmatpush1.bf16.msra.mxu0 %v473
  %619 = vmatprep.subr.bf16.mxu0 0
  %620 = vmatpush1.bf16.msra.mxu0 %v474
  %621 = vmatprep.subr.bf16.mxu0 0
  %622 = vmatpush1.bf16.msra.mxu0 %v475
  %623 = vmatprep.subr.bf16.mxu0 0
  %624 = vmatpush1.bf16.msra.mxu0 %v476
  %625 = vmatprep.subr.bf16.mxu0 0
  %626 = vmatpush1.bf16.msra.mxu0 %v477
  %627 = vmatprep.subr.bf16.mxu0 0
  %628 = vmatpush1.bf16.msra.mxu0 %v478
  %629 = vmatprep.subr.bf16.mxu0 0
  %630 = vmatpush1.bf16.msra.mxu0 %v479
  %631 = vmatprep.subr.bf16.mxu0 0
  %632 = vmatpush1.bf16.msra.mxu0 %v480
  %633 = vmatprep.subr.bf16.mxu0 0
  %634 = vmatpush1.bf16.msra.mxu0 %v481
  %635 = vmatprep.subr.bf16.mxu0 0
  %636 = vmatpush1.bf16.msra.mxu0 %v482
  %637 = vmatprep.subr.bf16.mxu0 0
  %638 = vmatpush1.bf16.msra.mxu0 %v483
  %639 = vmatprep.subr.bf16.mxu0 0
  %640 = vmatpush1.bf16.msra.mxu0 %v484
  %641 = vmatprep.subr.bf16.mxu0 0
  %642 = vmatpush1.bf16.msra.mxu0 %v485
  %643 = vmatprep.subr.bf16.mxu0 0
  %644 = vmatpush1.bf16.msra.mxu0 %v486
  %645 = vmatprep.subr.bf16.mxu0 0
  %646 = vmatpush1.bf16.msra.mxu0 %v487
  %647 = vmatprep.subr.bf16.mxu0 0
  %648 = vmatpush1.bf16.msra.mxu0 %v488
  %649 = vmatprep.mubr.bf16.mxu0 %v152
  %650 = vmatmul.mubr.bf16.gmra.mrb[0].mxu0 %v151
  %v651 = vpop.f32.mrb[0].mxu0
  %v652 = vadd.f32 %v612, %v651
  %v653 = vpop.f32.mrb[0].mxu0
  %v654 = vpop.f32.mrb[0].mxu0
  %v655 = vpop.f32.mrb[0].mxu0
  %656 = vdwg.mxu0
  %v753 = vunpack.c.l.b16 %v45
  %v754 = vunpack.c.l.b16 %v46
  %v755 = vunpack.c.l.b16 %v47
  %v756 = vunpack.c.l.b16 %v48
  %v757 = vunpack.c.l.b16 %v49
  %v758 = vunpack.c.l.b16 %v50
  %v759 = vunpack.c.l.b16 %v51
  %v760 = vunpack.c.l.b16 %v52
  %v761 = vunpack.c.l.b16 %v53
  %v762 = vunpack.c.l.b16 %v54
  %v763 = vunpack.c.l.b16 %v55
  %v764 = vunpack.c.l.b16 %v56
  %v765 = vunpack.c.l.b16 %v57
  %v766 = vunpack.c.l.b16 %v58
  %v767 = vunpack.c.l.b16 %v59
  %v768 = vunpack.c.l.b16 %v60
  %v769 = vunpack.c.l.b16 %v61
  %v770 = vunpack.c.l.b16 %v62
  %v771 = vunpack.c.l.b16 %v63
  %v772 = vunpack.c.l.b16 %v64
  %v773 = vunpack.c.l.b16 %v65
  %v774 = vunpack.c.l.b16 %v66
  %v775 = vunpack.c.l.b16 %v67
  %v776 = vunpack.c.l.b16 %v68
  %v777 = vunpack.c.l.b16 %v69
  %v778 = vunpack.c.l.b16 %v70
  %v779 = vunpack.c.l.b16 %v71
  %v780 = vunpack.c.l.b16 %v72
  %v781 = vunpack.c.l.b16 %v73
  %v782 = vunpack.c.l.b16 %v74
  %v783 = vunpack.c.l.b16 %v75
  %v784 = vunpack.c.l.b16 %v76
  %v785 = vunpack.c.l.b16 %v77
  %v786 = vunpack.c.l.b16 %v78
  %v787 = vunpack.c.l.b16 %v79
  %v788 = vunpack.c.l.b16 %v80
  %v789 = vunpack.c.l.b16 %v81
  %v790 = vunpack.c.l.b16 %v82
  %v791 = vunpack.c.l.b16 %v83
  %v792 = vunpack.c.l.b16 %v84
  %v793 = vunpack.c.l.b16 %v85
  %v794 = vunpack.c.l.b16 %v86
  %v795 = vunpack.c.l.b16 %v87
  %v796 = vunpack.c.l.b16 %v88
  %v797 = vunpack.c.l.b16 %v89
  %v798 = vunpack.c.l.b16 %v90
  %v799 = vunpack.c.l.b16 %v91
  %v800 = vunpack.c.l.b16 %v92
  %v801 = vunpack.c.l.b16 %v93
  %v802 = vunpack.c.l.b16 %v94
  %v803 = vunpack.c.l.b16 %v95
  %v804 = vunpack.c.l.b16 %v96
  %v805 = vunpack.c.l.b16 %v97
  %v806 = vunpack.c.l.b16 %v98
  %v807 = vunpack.c.l.b16 %v99
  %v808 = vunpack.c.l.b16 %v100
  %v809 = vunpack.c.l.b16 %v101
  %v810 = vunpack.c.l.b16 %v102
  %v811 = vunpack.c.l.b16 %v103
  %v812 = vunpack.c.l.b16 %v104
  %v813 = vunpack.c.l.b16 %v105
  %v814 = vunpack.c.l.b16 %v106
  %v815 = vunpack.c.l.b16 %v107
  %v816 = vunpack.c.l.b16 %v108
  %v817 = vunpack.c.l.b16 %v109
  %v818 = vunpack.c.l.b16 %v110
  %v819 = vunpack.c.l.b16 %v111
  %v820 = vunpack.c.l.b16 %v112
  %v821 = vunpack.c.l.b16 %v113
  %v822 = vunpack.c.l.b16 %v114
  %v823 = vunpack.c.l.b16 %v115
  %v824 = vunpack.c.l.b16 %v116
  %v825 = vunpack.c.l.b16 %v117
  %v826 = vunpack.c.l.b16 %v118
  %v827 = vunpack.c.l.b16 %v119
  %v828 = vunpack.c.l.b16 %v120
  %v829 = vunpack.c.l.b16 %v121
  %v830 = vunpack.c.l.b16 %v122
  %v831 = vunpack.c.l.b16 %v123
  %v832 = vunpack.c.l.b16 %v124
  %v833 = vunpack.c.l.b16 %v125
  %v834 = vunpack.c.l.b16 %v126
  %v835 = vunpack.c.l.b16 %v127
  %v836 = vunpack.c.l.b16 %v128
  %v837 = vunpack.c.l.b16 %v129
  %v838 = vunpack.c.l.b16 %v130
  %v839 = vunpack.c.l.b16 %v131
  %v840 = vunpack.c.l.b16 %v132
  %v841 = vunpack.c.l.b16 %v133
  %v842 = vunpack.c.l.b16 %v134
  %v843 = vunpack.c.l.b16 %v135
  %v844 = vunpack.c.l.b16 %v136
  %v845 = vunpack.c.l.b16 %v137
  %v846 = vunpack.c.l.b16 %v138
  %v847 = vunpack.c.l.b16 %v139
  %v848 = vunpack.c.l.b16 %v140
  %v849 = vpack.c.b16 %v754, %v753
  %v850 = vpack.c.b16 %v756, %v755
  %v851 = vpack.c.b16 %v758, %v757
  %v852 = vpack.c.b16 %v760, %v759
  %v853 = vpack.c.b16 %v762, %v761
  %v854 = vpack.c.b16 %v764, %v763
  %v855 = vpack.c.b16 %v766, %v765
  %v856 = vpack.c.b16 %v768, %v767
  %v857 = vpack.c.b16 %v770, %v769
  %v858 = vpack.c.b16 %v772, %v771
  %v859 = vpack.c.b16 %v774, %v773
  %v860 = vpack.c.b16 %v776, %v775
  %v861 = vpack.c.b16 %v778, %v777
  %v862 = vpack.c.b16 %v780, %v779
  %v863 = vpack.c.b16 %v782, %v781
  %v864 = vpack.c.b16 %v784, %v783
  %v865 = vpack.c.b16 %v786, %v785
  %v866 = vpack.c.b16 %v788, %v787
  %v867 = vpack.c.b16 %v790, %v789
  %v868 = vpack.c.b16 %v792, %v791
  %v869 = vpack.c.b16 %v794, %v793
  %v870 = vpack.c.b16 %v796, %v795
  %v871 = vpack.c.b16 %v798, %v797
  %v872 = vpack.c.b16 %v800, %v799
  %v873 = vpack.c.b16 %v802, %v801
  %v874 = vpack.c.b16 %v804, %v803
  %v875 = vpack.c.b16 %v806, %v805
  %v876 = vpack.c.b16 %v808, %v807
  %v877 = vpack.c.b16 %v810, %v809
  %v878 = vpack.c.b16 %v812, %v811
  %v879 = vpack.c.b16 %v814, %v813
  %v880 = vpack.c.b16 %v816, %v815
  %v881 = vpack.c.b16 %v818, %v817
  %v882 = vpack.c.b16 %v820, %v819
  %v883 = vpack.c.b16 %v822, %v821
  %v884 = vpack.c.b16 %v824, %v823
  %v885 = vpack.c.b16 %v826, %v825
  %v886 = vpack.c.b16 %v828, %v827
  %v887 = vpack.c.b16 %v830, %v829
  %v888 = vpack.c.b16 %v832, %v831
  %v889 = vpack.c.b16 %v834, %v833
  %v890 = vpack.c.b16 %v836, %v835
  %v891 = vpack.c.b16 %v838, %v837
  %v892 = vpack.c.b16 %v840, %v839
  %v893 = vpack.c.b16 %v842, %v841
  %v894 = vpack.c.b16 %v844, %v843
  %v895 = vpack.c.b16 %v846, %v845
  %v896 = vpack.c.b16 %v848, %v847
  %945 = vmatprep.subr.bf16.mxu0 0
  %946 = vmatpush1.bf16.msra.mxu0 %v849
  %947 = vmatprep.subr.bf16.mxu0 0
  %948 = vmatpush1.bf16.msra.mxu0 %v850
  %949 = vmatprep.subr.bf16.mxu0 0
  %950 = vmatpush1.bf16.msra.mxu0 %v851
  %951 = vmatprep.subr.bf16.mxu0 0
  %952 = vmatpush1.bf16.msra.mxu0 %v852
  %953 = vmatprep.subr.bf16.mxu0 0
  %954 = vmatpush1.bf16.msra.mxu0 %v853
  %955 = vmatprep.subr.bf16.mxu0 0
  %956 = vmatpush1.bf16.msra.mxu0 %v854
  %957 = vmatprep.subr.bf16.mxu0 0
  %958 = vmatpush1.bf16.msra.mxu0 %v855
  %959 = vmatprep.subr.bf16.mxu0 0
  %960 = vmatpush1.bf16.msra.mxu0 %v856
  %961 = vmatprep.subr.bf16.mxu0 0
  %962 = vmatpush1.bf16.msra.mxu0 %v857
  %963 = vmatprep.subr.bf16.mxu0 0
  %964 = vmatpush1.bf16.msra.mxu0 %v858
  %965 = vmatprep.subr.bf16.mxu0 0
  %966 = vmatpush1.bf16.msra.mxu0 %v859
  %967 = vmatprep.subr.bf16.mxu0 0
  %968 = vmatpush1.bf16.msra.mxu0 %v860
  %969 = vmatprep.subr.bf16.mxu0 0
  %970 = vmatpush1.bf16.msra.mxu0 %v861
  %971 = vmatprep.subr.bf16.mxu0 0
  %972 = vmatpush1.bf16.msra.mxu0 %v862
  %973 = vmatprep.subr.bf16.mxu0 0
  %974 = vmatpush1.bf16.msra.mxu0 %v863
  %975 = vmatprep.subr.bf16.mxu0 0
  %976 = vmatpush1.bf16.msra.mxu0 %v864
  %977 = vmatprep.mubr.bf16.mxu0 %v40
  %978 = vmatmul.mubr.bf16.gmra.mrb[0].mxu0 %v39
  %v979 = vpop.f32.mrb[0].mxu0
  %v980 = vadd.f32 %v652, %v979
  %v981 = vpop.f32.mrb[0].mxu0
  %v982 = vpop.f32.mrb[0].mxu0
  %v983 = vpop.f32.mrb[0].mxu0
  %984 = vdwg.mxu0
  %985 = vmatprep.subr.bf16.mxu0 0
  %986 = vmatpush1.bf16.msra.mxu0 %v865
  %987 = vmatprep.subr.bf16.mxu0 0
  %988 = vmatpush1.bf16.msra.mxu0 %v866
  %989 = vmatprep.subr.bf16.mxu0 0
  %990 = vmatpush1.bf16.msra.mxu0 %v867
  %991 = vmatprep.subr.bf16.mxu0 0
  %992 = vmatpush1.bf16.msra.mxu0 %v868
  %993 = vmatprep.subr.bf16.mxu0 0
  %994 = vmatpush1.bf16.msra.mxu0 %v869
  %995 = vmatprep.subr.bf16.mxu0 0
  %996 = vmatpush1.bf16.msra.mxu0 %v870
  %997 = vmatprep.subr.bf16.mxu0 0
  %998 = vmatpush1.bf16.msra.mxu0 %v871
  %999 = vmatprep.subr.bf16.mxu0 0
  %1000 = vmatpush1.bf16.msra.mxu0 %v872
  %1001 = vmatprep.subr.bf16.mxu0 0
  %1002 = vmatpush1.bf16.msra.mxu0 %v873
  %1003 = vmatprep.subr.bf16.mxu0 0
  %1004 = vmatpush1.bf16.msra.mxu0 %v874
  %1005 = vmatprep.subr.bf16.mxu0 0
  %1006 = vmatpush1.bf16.msra.mxu0 %v875
  %1007 = vmatprep.subr.bf16.mxu0 0
  %1008 = vmatpush1.bf16.msra.mxu0 %v876
  %1009 = vmatprep.subr.bf16.mxu0 0
  %1010 = vmatpush1.bf16.msra.mxu0 %v877
  %1011 = vmatprep.subr.bf16.mxu0 0
  %1012 = vmatpush1.bf16.msra.mxu0 %v878
  %1013 = vmatprep.subr.bf16.mxu0 0
  %1014 = vmatpush1.bf16.msra.mxu0 %v879
  %1015 = vmatprep.subr.bf16.mxu0 0
  %1016 = vmatpush1.bf16.msra.mxu0 %v880
  %1017 = vmatprep.mubr.bf16.mxu0 %v42
  %1018 = vmatmul.mubr.bf16.gmra.mrb[0].mxu0 %v41
  %v1019 = vpop.f32.mrb[0].mxu0
  %v1020 = vadd.f32 %v980, %v1019
  %v1021 = vpop.f32.mrb[0].mxu0
  %v1022 = vpop.f32.mrb[0].mxu0
  %v1023 = vpop.f32.mrb[0].mxu0
  %1024 = vdwg.mxu0
  %1025 = vmatprep.subr.bf16.mxu0 0
  %1026 = vmatpush1.bf16.msra.mxu0 %v881
  %1027 = vmatprep.subr.bf16.mxu0 0
  %1028 = vmatpush1.bf16.msra.mxu0 %v882
  %1029 = vmatprep.subr.bf16.mxu0 0
  %1030 = vmatpush1.bf16.msra.mxu0 %v883
  %1031 = vmatprep.subr.bf16.mxu0 0
  %1032 = vmatpush1.bf16.msra.mxu0 %v884
  %1033 = vmatprep.subr.bf16.mxu0 0
  %1034 = vmatpush1.bf16.msra.mxu0 %v885
  %1035 = vmatprep.subr.bf16.mxu0 0
  %1036 = vmatpush1.bf16.msra.mxu0 %v886
  %1037 = vmatprep.subr.bf16.mxu0 0
  %1038 = vmatpush1.bf16.msra.mxu0 %v887
  %1039 = vmatprep.subr.bf16.mxu0 0
  %1040 = vmatpush1.bf16.msra.mxu0 %v888
  %1041 = vmatprep.subr.bf16.mxu0 0
  %1042 = vmatpush1.bf16.msra.mxu0 %v889
  %1043 = vmatprep.subr.bf16.mxu0 0
  %1044 = vmatpush1.bf16.msra.mxu0 %v890
  %1045 = vmatprep.subr.bf16.mxu0 0
  %1046 = vmatpush1.bf16.msra.mxu0 %v891
  %1047 = vmatprep.subr.bf16.mxu0 0
  %1048 = vmatpush1.bf16.msra.mxu0 %v892
  %1049 = vmatprep.subr.bf16.mxu0 0
  %1050 = vmatpush1.bf16.msra.mxu0 %v893
  %1051 = vmatprep.subr.bf16.mxu0 0
  %1052 = vmatpush1.bf16.msra.mxu0 %v894
  %1053 = vmatprep.subr.bf16.mxu0 0
  %1054 = vmatpush1.bf16.msra.mxu0 %v895
  %1055 = vmatprep.subr.bf16.mxu0 0
  %1056 = vmatpush1.bf16.msra.mxu0 %v896
  %1057 = vmatprep.mubr.bf16.mxu0 %v44
  %1058 = vmatmul.mubr.bf16.gmra.mrb[0].mxu0 %v43
  %v1059 = vpop.f32.mrb[0].mxu0
  %v1060 = vadd.f32 %v1020, %v1059
  %v1061 = vpop.f32.mrb[0].mxu0
  %v1062 = vpop.f32.mrb[0].mxu0
  %v1063 = vpop.f32.mrb[0].mxu0
  %1064 = vdwg.mxu0
  %v1065 = vld [vmem:[%s2] sm:$0xff]
  %v1066 = vpack.c.bf16 %v1065, %v1065
  %v1067 = vld [vmem:[%s5 + $0x300] sm:$0x7]
  %vm1068 = vcmask 39936
  %v1070 = vsel %vm1068, %v1066, 0
  %vm1072 = vcmask 1041408
  %vm1073 = vcmask 1042432
  %v1074 = vsel %vm1072, 4294967295, 65535
  %v1075 = vsel %vm1073, %v1074, 0
  %v1077 = vand.u32 %v1067, %v1075
  %1079 = vmatprep.subr.bf16.mxu0 0
  %1080 = vmatpush1.bf16.msra.mxu0 %v1077
  %1081 = vmatprep.subr.bf16.mxu0 0
  %1082 = vmatpush1.bf16.msra.mxu0 0
  %1083 = vmatprep.subr.bf16.mxu0 0
  %1084 = vmatpush1.bf16.msra.mxu0 0
  %1085 = vmatprep.subr.bf16.mxu0 0
  %1086 = vmatpush1.bf16.msra.mxu0 0
  %1087 = vmatprep.subr.bf16.mxu0 0
  %1088 = vmatpush1.bf16.msra.mxu0 0
  %1089 = vmatprep.subr.bf16.mxu0 0
  %1090 = vmatpush1.bf16.msra.mxu0 0
  %1091 = vmatprep.subr.bf16.mxu0 0
  %1092 = vmatpush1.bf16.msra.mxu0 0
  %1093 = vmatprep.subr.bf16.mxu0 0
  %1094 = vmatpush1.bf16.msra.mxu0 0
  %1095 = vmatprep.subr.bf16.mxu0 0
  %1096 = vmatpush1.bf16.msra.mxu0 0
  %1097 = vmatprep.subr.bf16.mxu0 0
  %1098 = vmatpush1.bf16.msra.mxu0 0
  %1099 = vmatprep.subr.bf16.mxu0 0
  %1100 = vmatpush1.bf16.msra.mxu0 0
  %1101 = vmatprep.subr.bf16.mxu0 0
  %1102 = vmatpush1.bf16.msra.mxu0 0
  %1103 = vmatprep.subr.bf16.mxu0 0
  %1104 = vmatpush1.bf16.msra.mxu0 0
  %1105 = vmatprep.subr.bf16.mxu0 0
  %1106 = vmatpush1.bf16.msra.mxu0 0
  %1107 = vmatprep.subr.bf16.mxu0 0
  %1108 = vmatpush1.bf16.msra.mxu0 0
  %1109 = vmatprep.subr.bf16.mxu0 0
  %1110 = vmatpush1.bf16.msra.mxu0 0
  %1111 = vmatprep.mubr.bf16.mxu0 0
  %1112 = vmatmul.mubr.bf16.gmra.mrb[0].mxu0 %v1070
  %v1113 = vpop.f32.mrb[0].mxu0
  %v1114 = vadd.f32 0.0, %v1113
  %v1115 = vpop.f32.mrb[0].mxu0
  %v1116 = vpop.f32.mrb[0].mxu0
  %v1117 = vpop.f32.mrb[0].mxu0
  %1118 = vdwg.mxu0
  %v1119 = vadd.f32 %v1060, %v1114
  %v1120 = vld [vmem:[%s3] sm:$0xff]
  %v1121 = vpack.c.bf16 %v1120, %v1120
  %v1122 = vld [vmem:[%s5 + $0x308] sm:$0x3]
  %vm1123 = vcmask 23552
  %v1125 = vsel %vm1123, %v1121, 0
  %vm1127 = vcmask 1040384
  %v1128 = vsel %vm1127, 4294967295, 65535
  %v1129 = vsel %vm1072, %v1128, 0
  %v1131 = vand.u32 %v1122, %v1129
  %1133 = vmatprep.subr.bf16.mxu0 0
  %1134 = vmatpush1.bf16.msra.mxu0 %v1131
  %1135 = vmatprep.subr.bf16.mxu0 0
  %1136 = vmatpush1.bf16.msra.mxu0 0
  %1137 = vmatprep.subr.bf16.mxu0 0
  %1138 = vmatpush1.bf16.msra.mxu0 0
  %1139 = vmatprep.subr.bf16.mxu0 0
  %1140 = vmatpush1.bf16.msra.mxu0 0
  %1141 = vmatprep.subr.bf16.mxu0 0
  %1142 = vmatpush1.bf16.msra.mxu0 0
  %1143 = vmatprep.subr.bf16.mxu0 0
  %1144 = vmatpush1.bf16.msra.mxu0 0
  %1145 = vmatprep.subr.bf16.mxu0 0
  %1146 = vmatpush1.bf16.msra.mxu0 0
  %1147 = vmatprep.subr.bf16.mxu0 0
  %1148 = vmatpush1.bf16.msra.mxu0 0
  %1149 = vmatprep.subr.bf16.mxu0 0
  %1150 = vmatpush1.bf16.msra.mxu0 0
  %1151 = vmatprep.subr.bf16.mxu0 0
  %1152 = vmatpush1.bf16.msra.mxu0 0
  %1153 = vmatprep.subr.bf16.mxu0 0
  %1154 = vmatpush1.bf16.msra.mxu0 0
  %1155 = vmatprep.subr.bf16.mxu0 0
  %1156 = vmatpush1.bf16.msra.mxu0 0
  %1157 = vmatprep.subr.bf16.mxu0 0
  %1158 = vmatpush1.bf16.msra.mxu0 0
  %1159 = vmatprep.subr.bf16.mxu0 0
  %1160 = vmatpush1.bf16.msra.mxu0 0
  %1161 = vmatprep.subr.bf16.mxu0 0
  %1162 = vmatpush1.bf16.msra.mxu0 0
  %1163 = vmatprep.subr.bf16.mxu0 0
  %1164 = vmatpush1.bf16.msra.mxu0 0
  %1165 = vmatprep.mubr.bf16.mxu0 0
  %1166 = vmatmul.mubr.bf16.gmra.mrb[0].mxu0 %v1125
  %v1167 = vpop.f32.mrb[0].mxu0
  %v1168 = vadd.f32 0.0, %v1167
  %v1169 = vpop.f32.mrb[0].mxu0
  %v1170 = vpop.f32.mrb[0].mxu0
  %v1171 = vpop.f32.mrb[0].mxu0
  %1172 = vdwg.mxu0
  %v1173 = vadd.f32 %v1119, %v1168
  %v1174 = vld [vmem:[%s7] sm:$0x1]
  %v1175 = vlaneseq
  %v1176 = vshrl.u32 %v1175, 7
  %v1177 = vsub.s32 0, %v1176
  %v1178 = vrot.slane %v1174, %v1177
  %v1179 = vadd.f32 %v1173, %v1178
  %vm1180 = vcmp.ge.f32.partialorder %v1179, 0.0
  %v1181 = vmul.f32 %v1179, 0.01
  %v1182 = vsel %vm1180, %v1179, %v1181
  %v1183 = vld [vmem:[%s6] sm:$0xf]
  %v1184 = vld [vmem:[%s6 + $0x4] sm:$0xf]
  %v1185 = vld [vmem:[%s6 + $0x8] sm:$0xf]
  %v1186 = vld [vmem:[%s6 + $0xc] sm:$0xf]
  %v1187 = vpack.c.bf16 %v1182, %v1182
  %v1188 = vld [vmem:[%s7 + $0x1] sm:$0x1]
  %v1189 = vlaneseq
  %v1190 = vshrl.u32 %v1189, 7
  %v1191 = vsub.s32 0, %v1190
  %v1192 = vrot.slane %v1188, %v1191
  %v1197 = vunpack.c.l.b16 %v1183
  %v1198 = vunpack.c.l.b16 %v1184
  %v1199 = vunpack.c.l.b16 %v1185
  %v1200 = vunpack.c.l.b16 %v1186
  %v1201 = vpack.c.b16 %v1198, %v1197
  %v1202 = vpack.c.b16 %v1200, %v1199
  %vm1205 = vcmask 261120
  %v1207 = vsel %vm1205, %v1187, 0
  %1209 = vmatprep.subr.bf16.mxu0 0
  %1210 = vmatpush1.bf16.msra.mxu0 %v1201
  %1211 = vmatprep.subr.bf16.mxu0 0
  %1212 = vmatpush1.bf16.msra.mxu0 %v1202
  %1213 = vmatprep.subr.bf16.mxu0 0
  %1214 = vmatpush1.bf16.msra.mxu0 0
  %1215 = vmatprep.subr.bf16.mxu0 0
  %1216 = vmatpush1.bf16.msra.mxu0 0
  %1217 = vmatprep.subr.bf16.mxu0 0
  %1218 = vmatpush1.bf16.msra.mxu0 0
  %1219 = vmatprep.subr.bf16.mxu0 0
  %1220 = vmatpush1.bf16.msra.mxu0 0
  %1221 = vmatprep.subr.bf16.mxu0 0
  %1222 = vmatpush1.bf16.msra.mxu0 0
  %1223 = vmatprep.subr.bf16.mxu0 0
  %1224 = vmatpush1.bf16.msra.mxu0 0
  %1225 = vmatprep.subr.bf16.mxu0 0
  %1226 = vmatpush1.bf16.msra.mxu0 0
  %1227 = vmatprep.subr.bf16.mxu0 0
  %1228 = vmatpush1.bf16.msra.mxu0 0
  %1229 = vmatprep.subr.bf16.mxu0 0
  %1230 = vmatpush1.bf16.msra.mxu0 0
  %1231 = vmatprep.subr.bf16.mxu0 0
  %1232 = vmatpush1.bf16.msra.mxu0 0
  %1233 = vmatprep.subr.bf16.mxu0 0
  %1234 = vmatpush1.bf16.msra.mxu0 0
  %1235 = vmatprep.subr.bf16.mxu0 0
  %1236 = vmatpush1.bf16.msra.mxu0 0
  %1237 = vmatprep.subr.bf16.mxu0 0
  %1238 = vmatpush1.bf16.msra.mxu0 0
  %1239 = vmatprep.subr.bf16.mxu0 0
  %1240 = vmatpush1.bf16.msra.mxu0 0
  %1241 = vmatprep.mubr.bf16.mxu0 0
  %1242 = vmatmul.mubr.bf16.gmra.mrb[0].mxu0 %v1207
  %v1243 = vpop.f32.mrb[0].mxu0
  %v1244 = vadd.f32 %v1192, %v1243
  %v1245 = vpop.f32.mrb[0].mxu0
  %v1246 = vpop.f32.mrb[0].mxu0
  %v1247 = vpop.f32.mrb[0].mxu0
  %1248 = vdwg.mxu0
  %v1249 = vmax.f32 %v1244, 0.0
  %v1250 = vld [vmem:[%s6 + $0x10] sm:$0xf]
  %v1251 = vld [vmem:[%s6 + $0x14] sm:$0xf]
  %v1252 = vld [vmem:[%s6 + $0x18] sm:$0xf]
  %v1253 = vld [vmem:[%s6 + $0x1c] sm:$0xf]
  %v1254 = vld [vmem:[%s6 + $0x20] sm:$0xf]
  %v1255 = vld [vmem:[%s6 + $0x24] sm:$0xf]
  %v1256 = vld [vmem:[%s6 + $0x28] sm:$0xf]
  %v1257 = vld [vmem:[%s6 + $0x2c] sm:$0xf]
  %v1258 = vld [vmem:[%s6 + $0x30] sm:$0xf]
  %v1259 = vld [vmem:[%s6 + $0x34] sm:$0xf]
  %v1260 = vld [vmem:[%s6 + $0x38] sm:$0xf]
  %v1261 = vld [vmem:[%s6 + $0x3c] sm:$0xf]
  %v1262 = vld [vmem:[%s6 + $0x40] sm:$0xf]
  %v1263 = vld [vmem:[%s6 + $0x44] sm:$0xf]
  %v1264 = vld [vmem:[%s6 + $0x48] sm:$0xf]
  %v1265 = vld [vmem:[%s6 + $0x4c] sm:$0xf]
  %v1266 = vpack.c.bf16 %v1249, %v1249
  %v1267 = vld [vmem:[%s7 + $0x2] sm:$0x1]
  %v1268 = vlaneseq
  %v1269 = vshrl.u32 %v1268, 7
  %v1270 = vsub.s32 0, %v1269
  %v1271 = vrot.slane %v1267, %v1270
  %v1288 = vunpack.c.l.b16 %v1250
  %v1289 = vunpack.c.l.b16 %v1251
  %v1290 = vunpack.c.l.b16 %v1252
  %v1291 = vunpack.c.l.b16 %v1253
  %v1292 = vunpack.c.l.b16 %v1254
  %v1293 = vunpack.c.l.b16 %v1255
  %v1294 = vunpack.c.l.b16 %v1256
  %v1295 = vunpack.c.l.b16 %v1257
  %v1296 = vunpack.c.l.b16 %v1258
  %v1297 = vunpack.c.l.b16 %v1259
  %v1298 = vunpack.c.l.b16 %v1260
  %v1299 = vunpack.c.l.b16 %v1261
  %v1300 = vunpack.c.l.b16 %v1262
  %v1301 = vunpack.c.l.b16 %v1263
  %v1302 = vunpack.c.l.b16 %v1264
  %v1303 = vunpack.c.l.b16 %v1265
  %v1304 = vpack.c.b16 %v1289, %v1288
  %v1305 = vpack.c.b16 %v1291, %v1290
  %v1306 = vpack.c.b16 %v1293, %v1292
  %v1307 = vpack.c.b16 %v1295, %v1294
  %v1308 = vpack.c.b16 %v1297, %v1296
  %v1309 = vpack.c.b16 %v1299, %v1298
  %v1310 = vpack.c.b16 %v1301, %v1300
  %v1311 = vpack.c.b16 %v1303, %v1302
  %1320 = vmatprep.subr.bf16.mxu0 0
  %1321 = vmatpush1.bf16.msra.mxu0 %v1304
  %1322 = vmatprep.subr.bf16.mxu0 0
  %1323 = vmatpush1.bf16.msra.mxu0 %v1305
  %1324 = vmatprep.subr.bf16.mxu0 0
  %1325 = vmatpush1.bf16.msra.mxu0 %v1306
  %1326 = vmatprep.subr.bf16.mxu0 0
  %1327 = vmatpush1.bf16.msra.mxu0 %v1307
  %1328 = vmatprep.subr.bf16.mxu0 0
  %1329 = vmatpush1.bf16.msra.mxu0 %v1308
  %1330 = vmatprep.subr.bf16.mxu0 0
  %1331 = vmatpush1.bf16.msra.mxu0 %v1309
  %1332 = vmatprep.subr.bf16.mxu0 0
  %1333 = vmatpush1.bf16.msra.mxu0 %v1310
  %1334 = vmatprep.subr.bf16.mxu0 0
  %1335 = vmatpush1.bf16.msra.mxu0 %v1311
  %1336 = vmatprep.subr.bf16.mxu0 0
  %1337 = vmatpush1.bf16.msra.mxu0 0
  %1338 = vmatprep.subr.bf16.mxu0 0
  %1339 = vmatpush1.bf16.msra.mxu0 0
  %1340 = vmatprep.subr.bf16.mxu0 0
  %1341 = vmatpush1.bf16.msra.mxu0 0
  %1342 = vmatprep.subr.bf16.mxu0 0
  %1343 = vmatpush1.bf16.msra.mxu0 0
  %1344 = vmatprep.subr.bf16.mxu0 0
  %1345 = vmatpush1.bf16.msra.mxu0 0
  %1346 = vmatprep.subr.bf16.mxu0 0
  %1347 = vmatpush1.bf16.msra.mxu0 0
  %1348 = vmatprep.subr.bf16.mxu0 0
  %1349 = vmatpush1.bf16.msra.mxu0 0
  %1350 = vmatprep.subr.bf16.mxu0 0
  %1351 = vmatpush1.bf16.msra.mxu0 0
  %1352 = vmatprep.mubr.bf16.mxu0 0
  %1353 = vmatmul.mubr.bf16.gmra.mrb[0].mxu0 %v1266
  %v1354 = vpop.f32.mrb[0].mxu0
  %v1355 = vadd.f32 %v1271, %v1354
  %v1356 = vpop.f32.mrb[0].mxu0
  %v1357 = vpop.f32.mrb[0].mxu0
  %v1358 = vpop.f32.mrb[0].mxu0
  %1359 = vdwg.mxu0
  %v1360 = vmax.f32 %v1355, 0.0
  %v1361 = vld [vmem:[%s6 + $0x50] sm:$0xf]
  %v1362 = vld [vmem:[%s6 + $0x54] sm:$0xf]
  %v1363 = vld [vmem:[%s6 + $0x58] sm:$0xf]
  %v1364 = vld [vmem:[%s6 + $0x5c] sm:$0xf]
  %v1365 = vld [vmem:[%s6 + $0x60] sm:$0xf]
  %v1366 = vld [vmem:[%s6 + $0x64] sm:$0xf]
  %v1367 = vld [vmem:[%s6 + $0x68] sm:$0xf]
  %v1368 = vld [vmem:[%s6 + $0x6c] sm:$0xf]
  %v1369 = vpack.c.bf16 %v1360, %v1360
  %v1370 = vld [vmem:[%s7 + $0x3] sm:$0x1]
  %v1371 = vlaneseq
  %v1372 = vshrl.u32 %v1371, 7
  %v1373 = vsub.s32 0, %v1372
  %v1374 = vrot.slane %v1370, %v1373
  %v1383 = vunpack.c.l.b16 %v1361
  %v1384 = vunpack.c.l.b16 %v1362
  %v1385 = vunpack.c.l.b16 %v1363
  %v1386 = vunpack.c.l.b16 %v1364
  %v1387 = vunpack.c.l.b16 %v1365
  %v1388 = vunpack.c.l.b16 %v1366
  %v1389 = vunpack.c.l.b16 %v1367
  %v1390 = vunpack.c.l.b16 %v1368
  %v1391 = vpack.c.b16 %v1384, %v1383
  %v1392 = vpack.c.b16 %v1386, %v1385
  %v1393 = vpack.c.b16 %v1388, %v1387
  %v1394 = vpack.c.b16 %v1390, %v1389
  %vm1399 = vcmask 523264
  %v1401 = vsel %vm1399, %v1369, 0
  %1403 = vmatprep.subr.bf16.mxu0 0
  %1404 = vmatpush1.bf16.msra.mxu0 %v1391
  %1405 = vmatprep.subr.bf16.mxu0 0
  %1406 = vmatpush1.bf16.msra.mxu0 %v1392
  %1407 = vmatprep.subr.bf16.mxu0 0
  %1408 = vmatpush1.bf16.msra.mxu0 %v1393
  %1409 = vmatprep.subr.bf16.mxu0 0
  %1410 = vmatpush1.bf16.msra.mxu0 %v1394
  %1411 = vmatprep.subr.bf16.mxu0 0
  %1412 = vmatpush1.bf16.msra.mxu0 0
  %1413 = vmatprep.subr.bf16.mxu0 0
  %1414 = vmatpush1.bf16.msra.mxu0 0
  %1415 = vmatprep.subr.bf16.mxu0 0
  %1416 = vmatpush1.bf16.msra.mxu0 0
  %1417 = vmatprep.subr.bf16.mxu0 0
  %1418 = vmatpush1.bf16.msra.mxu0 0
  %1419 = vmatprep.subr.bf16.mxu0 0
  %1420 = vmatpush1.bf16.msra.mxu0 0
  %1421 = vmatprep.subr.bf16.mxu0 0
  %1422 = vmatpush1.bf16.msra.mxu0 0
  %1423 = vmatprep.subr.bf16.mxu0 0
  %1424 = vmatpush1.bf16.msra.mxu0 0
  %1425 = vmatprep.subr.bf16.mxu0 0
  %1426 = vmatpush1.bf16.msra.mxu0 0
  %1427 = vmatprep.subr.bf16.mxu0 0
  %1428 = vmatpush1.bf16.msra.mxu0 0
  %1429 = vmatprep.subr.bf16.mxu0 0
  %1430 = vmatpush1.bf16.msra.mxu0 0
  %1431 = vmatprep.subr.bf16.mxu0 0
  %1432 = vmatpush1.bf16.msra.mxu0 0
  %1433 = vmatprep.subr.bf16.mxu0 0
  %1434 = vmatpush1.bf16.msra.mxu0 0
  %1435 = vmatprep.mubr.bf16.mxu0 0
  %1436 = vmatmul.mubr.bf16.gmra.mrb[0].mxu0 %v1401
  %v1437 = vpop.f32.mrb[0].mxu0
  %v1438 = vadd.f32 %v1374, %v1437
  %v1439 = vpop.f32.mrb[0].mxu0
  %v1440 = vpop.f32.mrb[0].mxu0
  %v1441 = vpop.f32.mrb[0].mxu0
  %1442 = vdwg.mxu0
  %v1443 = vld [vmem:[%s6 + $0x70] sm:$0xf]
  %v1444 = vld [vmem:[%s6 + $0x74] sm:$0xf]
  %v1445 = vld [vmem:[%s6 + $0x78] sm:$0xf]
  %v1446 = vld [vmem:[%s6 + $0x7c] sm:$0xf]
  %v1447 = vpack.c.bf16 %v1438, %v1438
  %v1448 = vld [vmem:[%s7 + $0x4] sm:$0x1]
  %v1449 = vlaneseq
  %v1450 = vshrl.u32 %v1449, 7
  %v1451 = vsub.s32 0, %v1450
  %v1452 = vrot.slane %v1448, %v1451
  %v1457 = vunpack.c.l.b16 %v1443
  %v1458 = vunpack.c.l.b16 %v1444
  %v1459 = vunpack.c.l.b16 %v1445
  %v1460 = vunpack.c.l.b16 %v1446
  %v1461 = vpack.c.b16 %v1458, %v1457
  %v1462 = vpack.c.b16 %v1460, %v1459
  %v1466 = vsel %vm1205, %v1447, 0
  %1468 = vmatprep.subr.bf16.mxu0 0
  %1469 = vmatpush1.bf16.msra.mxu0 %v1461
  %1470 = vmatprep.subr.bf16.mxu0 0
  %1471 = vmatpush1.bf16.msra.mxu0 %v1462
  %1472 = vmatprep.subr.bf16.mxu0 0
  %1473 = vmatpush1.bf16.msra.mxu0 0
  %1474 = vmatprep.subr.bf16.mxu0 0
  %1475 = vmatpush1.bf16.msra.mxu0 0
  %1476 = vmatprep.subr.bf16.mxu0 0
  %1477 = vmatpush1.bf16.msra.mxu0 0
  %1478 = vmatprep.subr.bf16.mxu0 0
  %1479 = vmatpush1.bf16.msra.mxu0 0
  %1480 = vmatprep.subr.bf16.mxu0 0
  %1481 = vmatpush1.bf16.msra.mxu0 0
  %1482 = vmatprep.subr.bf16.mxu0 0
  %1483 = vmatpush1.bf16.msra.mxu0 0
  %1484 = vmatprep.subr.bf16.mxu0 0
  %1485 = vmatpush1.bf16.msra.mxu0 0
  %1486 = vmatprep.subr.bf16.mxu0 0
  %1487 = vmatpush1.bf16.msra.mxu0 0
  %1488 = vmatprep.subr.bf16.mxu0 0
  %1489 = vmatpush1.bf16.msra.mxu0 0
  %1490 = vmatprep.subr.bf16.mxu0 0
  %1491 = vmatpush1.bf16.msra.mxu0 0
  %1492 = vmatprep.subr.bf16.mxu0 0
  %1493 = vmatpush1.bf16.msra.mxu0 0
  %1494 = vmatprep.subr.bf16.mxu0 0
  %1495 = vmatpush1.bf16.msra.mxu0 0
  %1496 = vmatprep.subr.bf16.mxu0 0
  %1497 = vmatpush1.bf16.msra.mxu0 0
  %1498 = vmatprep.subr.bf16.mxu0 0
  %1499 = vmatpush1.bf16.msra.mxu0 0
  %1500 = vmatprep.mubr.bf16.mxu0 0
  %1501 = vmatmul.mubr.bf16.gmra.mrb[0].mxu0 %v1466
  %v1502 = vpop.f32.mrb[0].mxu0
  %v1503 = vadd.f32 %v1452, %v1502
  %v1504 = vpop.f32.mrb[0].mxu0
  %v1505 = vpop.f32.mrb[0].mxu0
  %v1506 = vpop.f32.mrb[0].mxu0
  %1507 = vdwg.mxu0
  %vm1508 = vcmp.ge.f32.partialorder %v1503, 0.0
  %v1509 = vmul.f32 %v1503, 0.01
  %v1510 = vsel %vm1508, %v1503, %v1509
  %v1511 = vld [vmem:[%s6 + $0x80] sm:$0xf]
  %v1512 = vld [vmem:[%s6 + $0x84] sm:$0xf]
  %v1513 = vld [vmem:[%s6 + $0x88] sm:$0xf]
  %v1514 = vld [vmem:[%s6 + $0x8c] sm:$0xf]
  %v1515 = vpack.c.bf16 %v1510, %v1510
  %v1520 = vunpack.c.l.b16 %v1511
  %v1521 = vunpack.c.l.b16 %v1512
  %v1522 = vunpack.c.l.b16 %v1513
  %v1523 = vunpack.c.l.b16 %v1514
  %v1524 = vpack.c.b16 %v1521, %v1520
  %v1525 = vpack.c.b16 %v1523, %v1522
  %v1529 = vsel %vm1205, %v1515, 0
  %1531 = vmatprep.subr.bf16.mxu0 0
  %1532 = vmatpush1.bf16.msra.mxu0 %v1524
  %1533 = vmatprep.subr.bf16.mxu0 0
  %1534 = vmatpush1.bf16.msra.mxu0 %v1525
  %1535 = vmatprep.subr.bf16.mxu0 0
  %1536 = vmatpush1.bf16.msra.mxu0 0
  %1537 = vmatprep.subr.bf16.mxu0 0
  %1538 = vmatpush1.bf16.msra.mxu0 0
  %1539 = vmatprep.subr.bf16.mxu0 0
  %1540 = vmatpush1.bf16.msra.mxu0 0
  %1541 = vmatprep.subr.bf16.mxu0 0
  %1542 = vmatpush1.bf16.msra.mxu0 0
  %1543 = vmatprep.subr.bf16.mxu0 0
  %1544 = vmatpush1.bf16.msra.mxu0 0
  %1545 = vmatprep.subr.bf16.mxu0 0
  %1546 = vmatpush1.bf16.msra.mxu0 0
  %1547 = vmatprep.subr.bf16.mxu0 0
  %1548 = vmatpush1.bf16.msra.mxu0 0
  %1549 = vmatprep.subr.bf16.mxu0 0
  %1550 = vmatpush1.bf16.msra.mxu0 0
  %1551 = vmatprep.subr.bf16.mxu0 0
  %1552 = vmatpush1.bf16.msra.mxu0 0
  %1553 = vmatprep.subr.bf16.mxu0 0
  %1554 = vmatpush1.bf16.msra.mxu0 0
  %1555 = vmatprep.subr.bf16.mxu0 0
  %1556 = vmatpush1.bf16.msra.mxu0 0
  %1557 = vmatprep.subr.bf16.mxu0 0
  %1558 = vmatpush1.bf16.msra.mxu0 0
  %1559 = vmatprep.subr.bf16.mxu0 0
  %1560 = vmatpush1.bf16.msra.mxu0 0
  %1561 = vmatprep.subr.bf16.mxu0 0
  %1562 = vmatpush1.bf16.msra.mxu0 0
  %1563 = vmatprep.mubr.bf16.mxu0 0
  %1564 = vmatmul.mubr.bf16.gmra.mrb[0].mxu0 %v1529
  %v1565 = vpop.f32.mrb[0].mxu0
  %v1566 = vadd.f32 0.0, %v1565
  %v1567 = vpop.f32.mrb[0].mxu0
  %v1568 = vpop.f32.mrb[0].mxu0
  %v1569 = vpop.f32.mrb[0].mxu0
  %1570 = vdwg.mxu0
  %v1571 = vpack.c.bf16 %v1566, %v1566
  %v1572 = vld [vmem:[%s6 + $0x90] sm:$0xf]
  %v1573 = vld [vmem:[%s6 + $0x94] sm:$0xf]
  %v1574 = vld [vmem:[%s6 + $0x98] sm:$0xf]
  %v1575 = vld [vmem:[%s6 + $0x9c] sm:$0xf]
  %v1580 = vunpack.c.l.b16 %v1572
  %v1581 = vunpack.c.l.b16 %v1573
  %v1582 = vunpack.c.l.b16 %v1574
  %v1583 = vunpack.c.l.b16 %v1575
  %v1584 = vpack.c.b16 %v1581, %v1580
  %v1585 = vpack.c.b16 %v1583, %v1582
  %v1589 = vsel %vm1205, %v1571, 0
  %1591 = vmatprep.subr.bf16.mxu0 0
  %1592 = vmatpush1.bf16.msra.mxu0 %v1584
  %1593 = vmatprep.subr.bf16.mxu0 0
  %1594 = vmatpush1.bf16.msra.mxu0 %v1585
  %1595 = vmatprep.subr.bf16.mxu0 0
  %1596 = vmatpush1.bf16.msra.mxu0 0
  %1597 = vmatprep.subr.bf16.mxu0 0
  %1598 = vmatpush1.bf16.msra.mxu0 0
  %1599 = vmatprep.subr.bf16.mxu0 0
  %1600 = vmatpush1.bf16.msra.mxu0 0
  %1601 = vmatprep.subr.bf16.mxu0 0
  %1602 = vmatpush1.bf16.msra.mxu0 0
  %1603 = vmatprep.subr.bf16.mxu0 0
  %1604 = vmatpush1.bf16.msra.mxu0 0
  %1605 = vmatprep.subr.bf16.mxu0 0
  %1606 = vmatpush1.bf16.msra.mxu0 0
  %1607 = vmatprep.subr.bf16.mxu0 0
  %1608 = vmatpush1.bf16.msra.mxu0 0
  %1609 = vmatprep.subr.bf16.mxu0 0
  %1610 = vmatpush1.bf16.msra.mxu0 0
  %1611 = vmatprep.subr.bf16.mxu0 0
  %1612 = vmatpush1.bf16.msra.mxu0 0
  %1613 = vmatprep.subr.bf16.mxu0 0
  %1614 = vmatpush1.bf16.msra.mxu0 0
  %1615 = vmatprep.subr.bf16.mxu0 0
  %1616 = vmatpush1.bf16.msra.mxu0 0
  %1617 = vmatprep.subr.bf16.mxu0 0
  %1618 = vmatpush1.bf16.msra.mxu0 0
  %1619 = vmatprep.subr.bf16.mxu0 0
  %1620 = vmatpush1.bf16.msra.mxu0 0
  %1621 = vmatprep.subr.bf16.mxu0 0
  %1622 = vmatpush1.bf16.msra.mxu0 0
  %1623 = vmatprep.mubr.bf16.mxu0 0
  %1624 = vmatmul.mubr.bf16.gmra.mrb[0].mxu0 %v1589
  %v1625 = vpop.f32.mrb[0].mxu0
  %v1626 = vadd.f32 0.0, %v1625
  %v1627 = vpop.f32.mrb[0].mxu0
  %v1628 = vpop.f32.mrb[0].mxu0
  %v1629 = vpop.f32.mrb[0].mxu0
  %1630 = vdwg.mxu0
  %v1631 = vld [vmem:[%s6 + $0xa0] sm:$0xf]
  %v1633 = vsel %vm1205, %v1631, 0
  %1635 = vmatprep.subr.bf16.mxu0 0
  %1636 = vmatpush1.bf16.xpose.msra.mxu0 %v1589
  %1637 = vmatprep.subr.bf16.mxu0 0
  %1638 = vmatpush1.bf16.xpose.msra.mxu0 0
  %1639 = vmatprep.subr.bf16.mxu0 0
  %1640 = vmatpush1.bf16.xpose.msra.mxu0 0
  %1641 = vmatprep.subr.bf16.mxu0 0
  %1642 = vmatpush1.bf16.xpose.msra.mxu0 0
  %1643 = vmatprep.subr.bf16.mxu0 0
  %1644 = vmatpush1.bf16.xpose.msra.mxu0 0
  %1645 = vmatprep.subr.bf16.mxu0 0
  %1646 = vmatpush1.bf16.xpose.msra.mxu0 0
  %1647 = vmatprep.subr.bf16.mxu0 0
  %1648 = vmatpush1.bf16.xpose.msra.mxu0 0
  %1649 = vmatprep.subr.bf16.mxu0 0
  %1650 = vmatpush1.bf16.xpose.msra.mxu0 0
  %1651 = vmatprep.subr.bf16.mxu0 0
  %1652 = vmatpush1.bf16.xpose.msra.mxu0 0
  %1653 = vmatprep.subr.bf16.mxu0 0
  %1654 = vmatpush1.bf16.xpose.msra.mxu0 0
  %1655 = vmatprep.subr.bf16.mxu0 0
  %1656 = vmatpush1.bf16.xpose.msra.mxu0 0
  %1657 = vmatprep.subr.bf16.mxu0 0
  %1658 = vmatpush1.bf16.xpose.msra.mxu0 0
  %1659 = vmatprep.subr.bf16.mxu0 0
  %1660 = vmatpush1.bf16.xpose.msra.mxu0 0
  %1661 = vmatprep.subr.bf16.mxu0 0
  %1662 = vmatpush1.bf16.xpose.msra.mxu0 0
  %1663 = vmatprep.subr.bf16.mxu0 0
  %1664 = vmatpush1.bf16.xpose.msra.mxu0 0
  %1665 = vmatprep.subr.bf16.mxu0 0
  %1666 = vmatpush1.bf16.xpose.msra.mxu0 0
  %1667 = vmatprep.mubr.bf16.mxu0 0
  %1668 = vmatmul.mubr.bf16.gmra.mrb[0].mxu0 %v1633
  %v1669 = vpop.f32.mrb[0].mxu0
  %v1670 = vadd.f32 0.0, %v1669
  %v1671 = vpop.f32.mrb[0].mxu0
  %v1672 = vpop.f32.mrb[0].mxu0
  %v1673 = vpop.f32.mrb[0].mxu0
  %1674 = vdwg.mxu0
  %1676 = vset.pattern.permute.xlu0 0
  %1677 = vperm.xlu0 %1676, %v1626
  %v1678 = vpop.permute.xlu0 %1677
  %v1680 = vlaneseq
  %v1681 = vshrl.u32 %v1680, 7
  %v1682 = vsub.s32 0, %v1681
  %v1683 = vrot.slane %v1670, %v1682
  %v1684 = vadd.f32 %v1678, %v1683
  %vm1685 = vcmp.ge.f32.partialorder %v1684, 0.0
  %v1686 = vmul.f32 %v1684, 0.2
  %v1687 = vsel %vm1685, %v1684, %v1686
  %v1688 = vadd.f32 %v1687, %v32
  %vm1689 = vcmask 64512
  %v1690 = vsel %vm1689, %v1688, -inf
  %1691 = vmax.xlane.f32.xlu0 %v1690
  %v1692 = vpop.xlane.xlu0 %1691
  %v1693 = vsub.f32 %v1688, %v1692
  %v1694 = vmul.f32 %v1693, 1.442695
  %v1695 = vpow.pop %v1694
  %v1696 = vsel %vm1689, %v1695, 0.0
  %1697 = vadd.xlane.f32.xlu0 %v1696
  %v1698 = vpop.xlane.xlu0 %1697
  %v1699 = vrcp.pop %v1698
  %v1700 = vmul.f32 %v1695, %v1699
  %v1702 = vsel %vm1689, %v1700, 0
  %1704 = vmatprep.subr.mxu0 0.0
  %1705 = vmatpush1.msra.mxu0 %v1566
  %1706 = vmatprep.subr.mxu0 0.0
  %1707 = vmatpush1.msra.mxu0 0.0
  %1708 = vmatprep.subr.mxu0 0.0
  %1709 = vmatpush1.msra.mxu0 0.0
  %1710 = vmatprep.subr.mxu0 0.0
  %1711 = vmatpush1.msra.mxu0 0.0
  %1712 = vmatprep.subr.mxu0 0.0
  %1713 = vmatpush1.msra.mxu0 0.0
  %1714 = vmatprep.subr.mxu0 0.0
  %1715 = vmatpush1.msra.mxu0 0.0
  %1716 = vmatprep.subr.mxu0 0.0
  %1717 = vmatpush1.msra.mxu0 0.0
  %1718 = vmatprep.subr.mxu0 0.0
  %1719 = vmatpush1.msra.mxu0 0.0
  %1720 = vmatprep.subr.mxu0 0.0
  %1721 = vmatpush1.msra.mxu0 0.0
  %1722 = vmatprep.subr.mxu0 0.0
  %1723 = vmatpush1.msra.mxu0 0.0
  %1724 = vmatprep.subr.mxu0 0.0
  %1725 = vmatpush1.msra.mxu0 0.0
  %1726 = vmatprep.subr.mxu0 0.0
  %1727 = vmatpush1.msra.mxu0 0.0
  %1728 = vmatprep.subr.mxu0 0.0
  %1729 = vmatpush1.msra.mxu0 0.0
  %1730 = vmatprep.subr.mxu0 0.0
  %1731 = vmatpush1.msra.mxu0 0.0
  %1732 = vmatprep.subr.mxu0 0.0
  %1733 = vmatpush1.msra.mxu0 0.0
  %1734 = vmatprep.subr.mxu0 0.0
  %1735 = vmatpush1.msra.mxu0 0.0
  %1736 = vmatprep.subr.mxu0 0.0
  %1737 = vmatpush1.msra.mxu0 0.0
  %1738 = vmatprep.subr.mxu0 0.0
  %1739 = vmatpush1.msra.mxu0 0.0
  %1740 = vmatprep.subr.mxu0 0.0
  %1741 = vmatpush1.msra.mxu0 0.0
  %1742 = vmatprep.subr.mxu0 0.0
  %1743 = vmatpush1.msra.mxu0 0.0
  %1744 = vmatprep.subr.mxu0 0.0
  %1745 = vmatpush1.msra.mxu0 0.0
  %1746 = vmatprep.subr.mxu0 0.0
  %1747 = vmatpush1.msra.mxu0 0.0
  %1748 = vmatprep.subr.mxu0 0.0
  %1749 = vmatpush1.msra.mxu0 0.0
  %1750 = vmatprep.subr.mxu0 0.0
  %1751 = vmatpush1.msra.mxu0 0.0
  %1752 = vmatprep.subr.mxu0 0.0
  %1753 = vmatpush1.msra.mxu0 0.0
  %1754 = vmatprep.subr.mxu0 0.0
  %1755 = vmatpush1.msra.mxu0 0.0
  %1756 = vmatprep.subr.mxu0 0.0
  %1757 = vmatpush1.msra.mxu0 0.0
  %1758 = vmatprep.subr.mxu0 0.0
  %1759 = vmatpush1.msra.mxu0 0.0
  %1760 = vmatprep.subr.mxu0 0.0
  %1761 = vmatpush1.msra.mxu0 0.0
  %1762 = vmatprep.subr.mxu0 0.0
  %1763 = vmatpush1.msra.mxu0 0.0
  %1764 = vmatprep.subr.mxu0 0.0
  %1765 = vmatpush1.msra.mxu0 0.0
  %1766 = vmatprep.subr.mxu0 0.0
  %1767 = vmatpush1.msra.mxu0 0.0
  %1768 = vmatprep.mubr.f32.mxu0 0.0
  %1769 = vmatmul.mubr.f32.gmra.mrb[0].mxu0 %v1702
  %v1770 = vpop.f32.mrb[0].mxu0
  %v1771 = vadd.f32 0.0, %v1770
  %v1772 = vpop.f32.mrb[0].mxu0
  %1773 = vdwg.mxu0
  %1774 = vset.pattern.permute.xlu0 1
  %1775 = vperm.xlu0 %1774, %v1626
  %v1776 = vpop.permute.xlu0 %1775
  %v1778 = vlaneseq
  %v1779 = vshrl.u32 %v1778, 7
  %v1780 = vsub.s32 1, %v1779
  %v1781 = vrot.slane %v1670, %v1780
  %v1782 = vadd.f32 %v1776, %v1781
  %vm1783 = vcmp.ge.f32.partialorder %v1782, 0.0
  %v1784 = vmul.f32 %v1782, 0.2
  %v1785 = vsel %vm1783, %v1782, %v1784
  %v1786 = vadd.f32 %v1785, %v32
  %v1787 = vsel %vm1689, %v1786, -inf
  %1788 = vmax.xlane.f32.xlu0 %v1787
  %v1789 = vpop.xlane.xlu0 %1788
  %v1790 = vsub.f32 %v1786, %v1789
  %v1791 = vmul.f32 %v1790, 1.442695
  %v1792 = vpow.pop %v1791
  %v1793 = vsel %vm1689, %v1792, 0.0
  %1794 = vadd.xlane.f32.xlu0 %v1793
  %v1795 = vpop.xlane.xlu0 %1794
  %v1796 = vrcp.pop %v1795
  %v1797 = vmul.f32 %v1792, %v1796
  %1799 = vrot.lane.b32.xlu0 %v1566, 120
  %v1800 = vpop.permute.xlu0 %1799
  %v1803 = vsel %vm1689, %v1797, 0
  %1805 = vmatprep.subr.mxu0 0.0
  %1806 = vmatpush1.msra.mxu0 %v1800
  %1807 = vmatprep.subr.mxu0 0.0
  %1808 = vmatpush1.msra.mxu0 0.0
  %1809 = vmatprep.subr.mxu0 0.0
  %1810 = vmatpush1.msra.mxu0 0.0
  %1811 = vmatprep.subr.mxu0 0.0
  %1812 = vmatpush1.msra.mxu0 0.0
  %1813 = vmatprep.subr.mxu0 0.0
  %1814 = vmatpush1.msra.mxu0 0.0
  %1815 = vmatprep.subr.mxu0 0.0
  %1816 = vmatpush1.msra.mxu0 0.0
  %1817 = vmatprep.subr.mxu0 0.0
  %1818 = vmatpush1.msra.mxu0 0.0
  %1819 = vmatprep.subr.mxu0 0.0
  %1820 = vmatpush1.msra.mxu0 0.0
  %1821 = vmatprep.subr.mxu0 0.0
  %1822 = vmatpush1.msra.mxu0 0.0
  %1823 = vmatprep.subr.mxu0 0.0
  %1824 = vmatpush1.msra.mxu0 0.0
  %1825 = vmatprep.subr.mxu0 0.0
  %1826 = vmatpush1.msra.mxu0 0.0
  %1827 = vmatprep.subr.mxu0 0.0
  %1828 = vmatpush1.msra.mxu0 0.0
  %1829 = vmatprep.subr.mxu0 0.0
  %1830 = vmatpush1.msra.mxu0 0.0
  %1831 = vmatprep.subr.mxu0 0.0
  %1832 = vmatpush1.msra.mxu0 0.0
  %1833 = vmatprep.subr.mxu0 0.0
  %1834 = vmatpush1.msra.mxu0 0.0
  %1835 = vmatprep.subr.mxu0 0.0
  %1836 = vmatpush1.msra.mxu0 0.0
  %1837 = vmatprep.subr.mxu0 0.0
  %1838 = vmatpush1.msra.mxu0 0.0
  %1839 = vmatprep.subr.mxu0 0.0
  %1840 = vmatpush1.msra.mxu0 0.0
  %1841 = vmatprep.subr.mxu0 0.0
  %1842 = vmatpush1.msra.mxu0 0.0
  %1843 = vmatprep.subr.mxu0 0.0
  %1844 = vmatpush1.msra.mxu0 0.0
  %1845 = vmatprep.subr.mxu0 0.0
  %1846 = vmatpush1.msra.mxu0 0.0
  %1847 = vmatprep.subr.mxu0 0.0
  %1848 = vmatpush1.msra.mxu0 0.0
  %1849 = vmatprep.subr.mxu0 0.0
  %1850 = vmatpush1.msra.mxu0 0.0
  %1851 = vmatprep.subr.mxu0 0.0
  %1852 = vmatpush1.msra.mxu0 0.0
  %1853 = vmatprep.subr.mxu0 0.0
  %1854 = vmatpush1.msra.mxu0 0.0
  %1855 = vmatprep.subr.mxu0 0.0
  %1856 = vmatpush1.msra.mxu0 0.0
  %1857 = vmatprep.subr.mxu0 0.0
  %1858 = vmatpush1.msra.mxu0 0.0
  %1859 = vmatprep.subr.mxu0 0.0
  %1860 = vmatpush1.msra.mxu0 0.0
  %1861 = vmatprep.subr.mxu0 0.0
  %1862 = vmatpush1.msra.mxu0 0.0
  %1863 = vmatprep.subr.mxu0 0.0
  %1864 = vmatpush1.msra.mxu0 0.0
  %1865 = vmatprep.subr.mxu0 0.0
  %1866 = vmatpush1.msra.mxu0 0.0
  %1867 = vmatprep.subr.mxu0 0.0
  %1868 = vmatpush1.msra.mxu0 0.0
  %1869 = vmatprep.mubr.f32.mxu0 0.0
  %1870 = vmatmul.mubr.f32.gmra.mrb[0].mxu0 %v1803
  %v1871 = vpop.f32.mrb[0].mxu0
  %v1872 = vadd.f32 0.0, %v1871
  %v1873 = vpop.f32.mrb[0].mxu0
  %1874 = vdwg.mxu0
  %1875 = vset.pattern.permute.xlu0 2
  %1876 = vperm.xlu0 %1875, %v1626
  %v1877 = vpop.permute.xlu0 %1876
  %v1879 = vlaneseq
  %v1880 = vshrl.u32 %v1879, 7
  %v1881 = vsub.s32 2, %v1880
  %v1882 = vrot.slane %v1670, %v1881
  %v1883 = vadd.f32 %v1877, %v1882
  %vm1884 = vcmp.ge.f32.partialorder %v1883, 0.0
  %v1885 = vmul.f32 %v1883, 0.2
  %v1886 = vsel %vm1884, %v1883, %v1885
  %v1887 = vadd.f32 %v1886, %v32
  %v1888 = vsel %vm1689, %v1887, -inf
  %1889 = vmax.xlane.f32.xlu0 %v1888
  %v1890 = vpop.xlane.xlu0 %1889
  %v1891 = vsub.f32 %v1887, %v1890
  %v1892 = vmul.f32 %v1891, 1.442695
  %v1893 = vpow.pop %v1892
  %v1894 = vsel %vm1689, %v1893, 0.0
  %1895 = vadd.xlane.f32.xlu0 %v1894
  %v1896 = vpop.xlane.xlu0 %1895
  %v1897 = vrcp.pop %v1896
  %v1898 = vmul.f32 %v1893, %v1897
  %1899 = vrot.lane.b32.xlu0 %v1566, 112
  %v1900 = vpop.permute.xlu0 %1899
  %v1903 = vsel %vm1689, %v1898, 0
  %1905 = vmatprep.subr.mxu0 0.0
  %1906 = vmatpush1.msra.mxu0 %v1900
  %1907 = vmatprep.subr.mxu0 0.0
  %1908 = vmatpush1.msra.mxu0 0.0
  %1909 = vmatprep.subr.mxu0 0.0
  %1910 = vmatpush1.msra.mxu0 0.0
  %1911 = vmatprep.subr.mxu0 0.0
  %1912 = vmatpush1.msra.mxu0 0.0
  %1913 = vmatprep.subr.mxu0 0.0
  %1914 = vmatpush1.msra.mxu0 0.0
  %1915 = vmatprep.subr.mxu0 0.0
  %1916 = vmatpush1.msra.mxu0 0.0
  %1917 = vmatprep.subr.mxu0 0.0
  %1918 = vmatpush1.msra.mxu0 0.0
  %1919 = vmatprep.subr.mxu0 0.0
  %1920 = vmatpush1.msra.mxu0 0.0
  %1921 = vmatprep.subr.mxu0 0.0
  %1922 = vmatpush1.msra.mxu0 0.0
  %1923 = vmatprep.subr.mxu0 0.0
  %1924 = vmatpush1.msra.mxu0 0.0
  %1925 = vmatprep.subr.mxu0 0.0
  %1926 = vmatpush1.msra.mxu0 0.0
  %1927 = vmatprep.subr.mxu0 0.0
  %1928 = vmatpush1.msra.mxu0 0.0
  %1929 = vmatprep.subr.mxu0 0.0
  %1930 = vmatpush1.msra.mxu0 0.0
  %1931 = vmatprep.subr.mxu0 0.0
  %1932 = vmatpush1.msra.mxu0 0.0
  %1933 = vmatprep.subr.mxu0 0.0
  %1934 = vmatpush1.msra.mxu0 0.0
  %1935 = vmatprep.subr.mxu0 0.0
  %1936 = vmatpush1.msra.mxu0 0.0
  %1937 = vmatprep.subr.mxu0 0.0
  %1938 = vmatpush1.msra.mxu0 0.0
  %1939 = vmatprep.subr.mxu0 0.0
  %1940 = vmatpush1.msra.mxu0 0.0
  %1941 = vmatprep.subr.mxu0 0.0
  %1942 = vmatpush1.msra.mxu0 0.0
  %1943 = vmatprep.subr.mxu0 0.0
  %1944 = vmatpush1.msra.mxu0 0.0
  %1945 = vmatprep.subr.mxu0 0.0
  %1946 = vmatpush1.msra.mxu0 0.0
  %1947 = vmatprep.subr.mxu0 0.0
  %1948 = vmatpush1.msra.mxu0 0.0
  %1949 = vmatprep.subr.mxu0 0.0
  %1950 = vmatpush1.msra.mxu0 0.0
  %1951 = vmatprep.subr.mxu0 0.0
  %1952 = vmatpush1.msra.mxu0 0.0
  %1953 = vmatprep.subr.mxu0 0.0
  %1954 = vmatpush1.msra.mxu0 0.0
  %1955 = vmatprep.subr.mxu0 0.0
  %1956 = vmatpush1.msra.mxu0 0.0
  %1957 = vmatprep.subr.mxu0 0.0
  %1958 = vmatpush1.msra.mxu0 0.0
  %1959 = vmatprep.subr.mxu0 0.0
  %1960 = vmatpush1.msra.mxu0 0.0
  %1961 = vmatprep.subr.mxu0 0.0
  %1962 = vmatpush1.msra.mxu0 0.0
  %1963 = vmatprep.subr.mxu0 0.0
  %1964 = vmatpush1.msra.mxu0 0.0
  %1965 = vmatprep.subr.mxu0 0.0
  %1966 = vmatpush1.msra.mxu0 0.0
  %1967 = vmatprep.subr.mxu0 0.0
  %1968 = vmatpush1.msra.mxu0 0.0
  %1969 = vmatprep.mubr.f32.mxu0 0.0
  %1970 = vmatmul.mubr.f32.gmra.mrb[0].mxu0 %v1903
  %v1971 = vpop.f32.mrb[0].mxu0
  %v1972 = vadd.f32 0.0, %v1971
  %v1973 = vpop.f32.mrb[0].mxu0
  %1974 = vdwg.mxu0
  %1975 = vset.pattern.permute.xlu0 3
  %1976 = vperm.xlu0 %1975, %v1626
  %v1977 = vpop.permute.xlu0 %1976
  %v1979 = vlaneseq
  %v1980 = vshrl.u32 %v1979, 7
  %v1981 = vsub.s32 3, %v1980
  %v1982 = vrot.slane %v1670, %v1981
  %v1983 = vadd.f32 %v1977, %v1982
  %vm1984 = vcmp.ge.f32.partialorder %v1983, 0.0
  %v1985 = vmul.f32 %v1983, 0.2
  %v1986 = vsel %vm1984, %v1983, %v1985
  %v1987 = vadd.f32 %v1986, %v32
  %v1988 = vsel %vm1689, %v1987, -inf
  %1989 = vmax.xlane.f32.xlu0 %v1988
  %v1990 = vpop.xlane.xlu0 %1989
  %v1991 = vsub.f32 %v1987, %v1990
  %v1992 = vmul.f32 %v1991, 1.442695
  %v1993 = vpow.pop %v1992
  %v1994 = vsel %vm1689, %v1993, 0.0
  %1995 = vadd.xlane.f32.xlu0 %v1994
  %v1996 = vpop.xlane.xlu0 %1995
  %v1997 = vrcp.pop %v1996
  %v1998 = vmul.f32 %v1993, %v1997
  %1999 = vrot.lane.b32.xlu0 %v1566, 104
  %v2000 = vpop.permute.xlu0 %1999
  %v2003 = vsel %vm1689, %v1998, 0
  %2005 = vmatprep.subr.mxu0 0.0
  %2006 = vmatpush1.msra.mxu0 %v2000
  %2007 = vmatprep.subr.mxu0 0.0
  %2008 = vmatpush1.msra.mxu0 0.0
  %2009 = vmatprep.subr.mxu0 0.0
  %2010 = vmatpush1.msra.mxu0 0.0
  %2011 = vmatprep.subr.mxu0 0.0
  %2012 = vmatpush1.msra.mxu0 0.0
  %2013 = vmatprep.subr.mxu0 0.0
  %2014 = vmatpush1.msra.mxu0 0.0
  %2015 = vmatprep.subr.mxu0 0.0
  %2016 = vmatpush1.msra.mxu0 0.0
  %2017 = vmatprep.subr.mxu0 0.0
  %2018 = vmatpush1.msra.mxu0 0.0
  %2019 = vmatprep.subr.mxu0 0.0
  %2020 = vmatpush1.msra.mxu0 0.0
  %2021 = vmatprep.subr.mxu0 0.0
  %2022 = vmatpush1.msra.mxu0 0.0
  %2023 = vmatprep.subr.mxu0 0.0
  %2024 = vmatpush1.msra.mxu0 0.0
  %2025 = vmatprep.subr.mxu0 0.0
  %2026 = vmatpush1.msra.mxu0 0.0
  %2027 = vmatprep.subr.mxu0 0.0
  %2028 = vmatpush1.msra.mxu0 0.0
  %2029 = vmatprep.subr.mxu0 0.0
  %2030 = vmatpush1.msra.mxu0 0.0
  %2031 = vmatprep.subr.mxu0 0.0
  %2032 = vmatpush1.msra.mxu0 0.0
  %2033 = vmatprep.subr.mxu0 0.0
  %2034 = vmatpush1.msra.mxu0 0.0
  %2035 = vmatprep.subr.mxu0 0.0
  %2036 = vmatpush1.msra.mxu0 0.0
  %2037 = vmatprep.subr.mxu0 0.0
  %2038 = vmatpush1.msra.mxu0 0.0
  %2039 = vmatprep.subr.mxu0 0.0
  %2040 = vmatpush1.msra.mxu0 0.0
  %2041 = vmatprep.subr.mxu0 0.0
  %2042 = vmatpush1.msra.mxu0 0.0
  %2043 = vmatprep.subr.mxu0 0.0
  %2044 = vmatpush1.msra.mxu0 0.0
  %2045 = vmatprep.subr.mxu0 0.0
  %2046 = vmatpush1.msra.mxu0 0.0
  %2047 = vmatprep.subr.mxu0 0.0
  %2048 = vmatpush1.msra.mxu0 0.0
  %2049 = vmatprep.subr.mxu0 0.0
  %2050 = vmatpush1.msra.mxu0 0.0
  %2051 = vmatprep.subr.mxu0 0.0
  %2052 = vmatpush1.msra.mxu0 0.0
  %2053 = vmatprep.subr.mxu0 0.0
  %2054 = vmatpush1.msra.mxu0 0.0
  %2055 = vmatprep.subr.mxu0 0.0
  %2056 = vmatpush1.msra.mxu0 0.0
  %2057 = vmatprep.subr.mxu0 0.0
  %2058 = vmatpush1.msra.mxu0 0.0
  %2059 = vmatprep.subr.mxu0 0.0
  %2060 = vmatpush1.msra.mxu0 0.0
  %2061 = vmatprep.subr.mxu0 0.0
  %2062 = vmatpush1.msra.mxu0 0.0
  %2063 = vmatprep.subr.mxu0 0.0
  %2064 = vmatpush1.msra.mxu0 0.0
  %2065 = vmatprep.subr.mxu0 0.0
  %2066 = vmatpush1.msra.mxu0 0.0
  %2067 = vmatprep.subr.mxu0 0.0
  %2068 = vmatpush1.msra.mxu0 0.0
  %2069 = vmatprep.mubr.f32.mxu0 0.0
  %2070 = vmatmul.mubr.f32.gmra.mrb[0].mxu0 %v2003
  %v2071 = vpop.f32.mrb[0].mxu0
  %v2072 = vadd.f32 0.0, %v2071
  %v2073 = vpop.f32.mrb[0].mxu0
  %2074 = vdwg.mxu0
  %2076 = vrot.lane.b32.xlu0 %v1872, 8
  %v2077 = vpop.permute.xlu0 %2076
  %2080 = vrot.lane.b32.xlu0 %v1972, 16
  %v2081 = vpop.permute.xlu0 %2080
  %2084 = vrot.lane.b32.xlu0 %v2072, 24
  %v2085 = vpop.permute.xlu0 %2084
  %v2087 = vsel %vm1689, %v1771, %v2077
  %vm2088 = vcmask 130048
  %v2089 = vsel %vm2088, %v2087, %v2081
  %vm2090 = vcmask 195584
  %v2091 = vsel %vm2090, %v2089, %v2085
  %v2092 = vld [vmem:[%s7 + $0x5] sm:$0x1]
  %v2093 = vlaneseq
  %v2094 = vshrl.u32 %v2093, 7
  %v2095 = vsub.s32 0, %v2094
  %v2096 = vrot.slane %v2092, %v2095
  %v2097 = vadd.f32 %v2091, %v2096
  %v2098 = vld [vmem:[%s6 + $0xb0] sm:$0xf]
  %v2099 = vld [vmem:[%s6 + $0xb4] sm:$0xf]
  %v2100 = vld [vmem:[%s6 + $0xb8] sm:$0xf]
  %v2101 = vld [vmem:[%s6 + $0xbc] sm:$0xf]
  %v2102 = vpack.c.bf16 %v2097, %v2097
  %v2107 = vunpack.c.l.b16 %v2098
  %v2108 = vunpack.c.l.b16 %v2099
  %v2109 = vunpack.c.l.b16 %v2100
  %v2110 = vunpack.c.l.b16 %v2101
  %v2111 = vpack.c.b16 %v2108, %v2107
  %v2112 = vpack.c.b16 %v2110, %v2109
  %v2116 = vsel %vm1205, %v2102, 0
  %2118 = vmatprep.subr.bf16.mxu0 0
  %2119 = vmatpush1.bf16.msra.mxu0 %v2111
  %2120 = vmatprep.subr.bf16.mxu0 0
  %2121 = vmatpush1.bf16.msra.mxu0 %v2112
  %2122 = vmatprep.subr.bf16.mxu0 0
  %2123 = vmatpush1.bf16.msra.mxu0 0
  %2124 = vmatprep.subr.bf16.mxu0 0
  %2125 = vmatpush1.bf16.msra.mxu0 0
  %2126 = vmatprep.subr.bf16.mxu0 0
  %2127 = vmatpush1.bf16.msra.mxu0 0
  %2128 = vmatprep.subr.bf16.mxu0 0
  %2129 = vmatpush1.bf16.msra.mxu0 0
  %2130 = vmatprep.subr.bf16.mxu0 0
  %2131 = vmatpush1.bf16.msra.mxu0 0
  %2132 = vmatprep.subr.bf16.mxu0 0
  %2133 = vmatpush1.bf16.msra.mxu0 0
  %2134 = vmatprep.subr.bf16.mxu0 0
  %2135 = vmatpush1.bf16.msra.mxu0 0
  %2136 = vmatprep.subr.bf16.mxu0 0
  %2137 = vmatpush1.bf16.msra.mxu0 0
  %2138 = vmatprep.subr.bf16.mxu0 0
  %2139 = vmatpush1.bf16.msra.mxu0 0
  %2140 = vmatprep.subr.bf16.mxu0 0
  %2141 = vmatpush1.bf16.msra.mxu0 0
  %2142 = vmatprep.subr.bf16.mxu0 0
  %2143 = vmatpush1.bf16.msra.mxu0 0
  %2144 = vmatprep.subr.bf16.mxu0 0
  %2145 = vmatpush1.bf16.msra.mxu0 0
  %2146 = vmatprep.subr.bf16.mxu0 0
  %2147 = vmatpush1.bf16.msra.mxu0 0
  %2148 = vmatprep.subr.bf16.mxu0 0
  %2149 = vmatpush1.bf16.msra.mxu0 0
  %2150 = vmatprep.mubr.bf16.mxu0 0
  %2151 = vmatmul.mubr.bf16.gmra.mrb[0].mxu0 %v2116
  %v2152 = vpop.f32.mrb[0].mxu0
  %v2153 = vadd.f32 0.0, %v2152
  %v2154 = vpop.f32.mrb[0].mxu0
  %v2155 = vpop.f32.mrb[0].mxu0
  %v2156 = vpop.f32.mrb[0].mxu0
  %2157 = vdwg.mxu0
  %v2158 = vpack.c.bf16 %v2153, %v2153
  %v2159 = vld [vmem:[%s6 + $0xc0] sm:$0xf]
  %v2160 = vld [vmem:[%s6 + $0xc4] sm:$0xf]
  %v2161 = vld [vmem:[%s6 + $0xc8] sm:$0xf]
  %v2162 = vld [vmem:[%s6 + $0xcc] sm:$0xf]
  %v2167 = vunpack.c.l.b16 %v2159
  %v2168 = vunpack.c.l.b16 %v2160
  %v2169 = vunpack.c.l.b16 %v2161
  %v2170 = vunpack.c.l.b16 %v2162
  %v2171 = vpack.c.b16 %v2168, %v2167
  %v2172 = vpack.c.b16 %v2170, %v2169
  %v2176 = vsel %vm1205, %v2158, 0
  %2178 = vmatprep.subr.bf16.mxu0 0
  %2179 = vmatpush1.bf16.msra.mxu0 %v2171
  %2180 = vmatprep.subr.bf16.mxu0 0
  %2181 = vmatpush1.bf16.msra.mxu0 %v2172
  %2182 = vmatprep.subr.bf16.mxu0 0
  %2183 = vmatpush1.bf16.msra.mxu0 0
  %2184 = vmatprep.subr.bf16.mxu0 0
  %2185 = vmatpush1.bf16.msra.mxu0 0
  %2186 = vmatprep.subr.bf16.mxu0 0
  %2187 = vmatpush1.bf16.msra.mxu0 0
  %2188 = vmatprep.subr.bf16.mxu0 0
  %2189 = vmatpush1.bf16.msra.mxu0 0
  %2190 = vmatprep.subr.bf16.mxu0 0
  %2191 = vmatpush1.bf16.msra.mxu0 0
  %2192 = vmatprep.subr.bf16.mxu0 0
  %2193 = vmatpush1.bf16.msra.mxu0 0
  %2194 = vmatprep.subr.bf16.mxu0 0
  %2195 = vmatpush1.bf16.msra.mxu0 0
  %2196 = vmatprep.subr.bf16.mxu0 0
  %2197 = vmatpush1.bf16.msra.mxu0 0
  %2198 = vmatprep.subr.bf16.mxu0 0
  %2199 = vmatpush1.bf16.msra.mxu0 0
  %2200 = vmatprep.subr.bf16.mxu0 0
  %2201 = vmatpush1.bf16.msra.mxu0 0
  %2202 = vmatprep.subr.bf16.mxu0 0
  %2203 = vmatpush1.bf16.msra.mxu0 0
  %2204 = vmatprep.subr.bf16.mxu0 0
  %2205 = vmatpush1.bf16.msra.mxu0 0
  %2206 = vmatprep.subr.bf16.mxu0 0
  %2207 = vmatpush1.bf16.msra.mxu0 0
  %2208 = vmatprep.subr.bf16.mxu0 0
  %2209 = vmatpush1.bf16.msra.mxu0 0
  %2210 = vmatprep.mubr.bf16.mxu0 0
  %2211 = vmatmul.mubr.bf16.gmra.mrb[0].mxu0 %v2176
  %v2212 = vpop.f32.mrb[0].mxu0
  %v2213 = vadd.f32 0.0, %v2212
  %v2214 = vpop.f32.mrb[0].mxu0
  %v2215 = vpop.f32.mrb[0].mxu0
  %v2216 = vpop.f32.mrb[0].mxu0
  %2217 = vdwg.mxu0
  %v2218 = vld [vmem:[%s6 + $0xd0] sm:$0xf]
  %v2220 = vsel %vm1205, %v2218, 0
  %2222 = vmatprep.subr.bf16.mxu0 0
  %2223 = vmatpush1.bf16.xpose.msra.mxu0 %v2176
  %2224 = vmatprep.subr.bf16.mxu0 0
  %2225 = vmatpush1.bf16.xpose.msra.mxu0 0
  %2226 = vmatprep.subr.bf16.mxu0 0
  %2227 = vmatpush1.bf16.xpose.msra.mxu0 0
  %2228 = vmatprep.subr.bf16.mxu0 0
  %2229 = vmatpush1.bf16.xpose.msra.mxu0 0
  %2230 = vmatprep.subr.bf16.mxu0 0
  %2231 = vmatpush1.bf16.xpose.msra.mxu0 0
  %2232 = vmatprep.subr.bf16.mxu0 0
  %2233 = vmatpush1.bf16.xpose.msra.mxu0 0
  %2234 = vmatprep.subr.bf16.mxu0 0
  %2235 = vmatpush1.bf16.xpose.msra.mxu0 0
  %2236 = vmatprep.subr.bf16.mxu0 0
  %2237 = vmatpush1.bf16.xpose.msra.mxu0 0
  %2238 = vmatprep.subr.bf16.mxu0 0
  %2239 = vmatpush1.bf16.xpose.msra.mxu0 0
  %2240 = vmatprep.subr.bf16.mxu0 0
  %2241 = vmatpush1.bf16.xpose.msra.mxu0 0
  %2242 = vmatprep.subr.bf16.mxu0 0
  %2243 = vmatpush1.bf16.xpose.msra.mxu0 0
  %2244 = vmatprep.subr.bf16.mxu0 0
  %2245 = vmatpush1.bf16.xpose.msra.mxu0 0
  %2246 = vmatprep.subr.bf16.mxu0 0
  %2247 = vmatpush1.bf16.xpose.msra.mxu0 0
  %2248 = vmatprep.subr.bf16.mxu0 0
  %2249 = vmatpush1.bf16.xpose.msra.mxu0 0
  %2250 = vmatprep.subr.bf16.mxu0 0
  %2251 = vmatpush1.bf16.xpose.msra.mxu0 0
  %2252 = vmatprep.subr.bf16.mxu0 0
  %2253 = vmatpush1.bf16.xpose.msra.mxu0 0
  %2254 = vmatprep.mubr.bf16.mxu0 0
  %2255 = vmatmul.mubr.bf16.gmra.mrb[0].mxu0 %v2220
  %v2256 = vpop.f32.mrb[0].mxu0
  %v2257 = vadd.f32 0.0, %v2256
  %v2258 = vpop.f32.mrb[0].mxu0
  %v2259 = vpop.f32.mrb[0].mxu0
  %v2260 = vpop.f32.mrb[0].mxu0
  %2261 = vdwg.mxu0
  %2263 = vset.pattern.permute.xlu0 0
  %2264 = vperm.xlu0 %2263, %v2213
  %v2265 = vpop.permute.xlu0 %2264
  %v2267 = vlaneseq
  %v2268 = vshrl.u32 %v2267, 7
  %v2269 = vsub.s32 0, %v2268
  %v2270 = vrot.slane %v2257, %v2269
  %v2271 = vadd.f32 %v2265, %v2270
  %vm2272 = vcmp.ge.f32.partialorder %v2271, 0.0
  %v2273 = vmul.f32 %v2271, 0.2
  %v2274 = vsel %vm2272, %v2271, %v2273
  %v2275 = vadd.f32 %v2274, %v32
  %v2276 = vsel %vm1689, %v2275, -inf
  %2277 = vmax.xlane.f32.xlu0 %v2276
  %v2278 = vpop.xlane.xlu0 %2277
  %v2279 = vsub.f32 %v2275, %v2278
  %v2280 = vmul.f32 %v2279, 1.442695
  %v2281 = vpow.pop %v2280
  %v2282 = vsel %vm1689, %v2281, 0.0
  %2283 = vadd.xlane.f32.xlu0 %v2282
  %v2284 = vpop.xlane.xlu0 %2283
  %v2285 = vrcp.pop %v2284
  %v2286 = vmul.f32 %v2281, %v2285
  %v2287 = vld [vmem:[%s7 + $0x6] sm:$0x1]
  %v2288 = vlaneseq
  %v2289 = vshrl.u32 %v2288, 7
  %v2290 = vsub.s32 0, %v2289
  %v2291 = vrot.slane %v2287, %v2290
  %v2293 = vsel %vm1689, %v2286, 0
  %2295 = vmatprep.subr.mxu0 0.0
  %2296 = vmatpush1.msra.mxu0 %v2153
  %2297 = vmatprep.subr.mxu0 0.0
  %2298 = vmatpush1.msra.mxu0 0.0
  %2299 = vmatprep.subr.mxu0 0.0
  %2300 = vmatpush1.msra.mxu0 0.0
  %2301 = vmatprep.subr.mxu0 0.0
  %2302 = vmatpush1.msra.mxu0 0.0
  %2303 = vmatprep.subr.mxu0 0.0
  %2304 = vmatpush1.msra.mxu0 0.0
  %2305 = vmatprep.subr.mxu0 0.0
  %2306 = vmatpush1.msra.mxu0 0.0
  %2307 = vmatprep.subr.mxu0 0.0
  %2308 = vmatpush1.msra.mxu0 0.0
  %2309 = vmatprep.subr.mxu0 0.0
  %2310 = vmatpush1.msra.mxu0 0.0
  %2311 = vmatprep.subr.mxu0 0.0
  %2312 = vmatpush1.msra.mxu0 0.0
  %2313 = vmatprep.subr.mxu0 0.0
  %2314 = vmatpush1.msra.mxu0 0.0
  %2315 = vmatprep.subr.mxu0 0.0
  %2316 = vmatpush1.msra.mxu0 0.0
  %2317 = vmatprep.subr.mxu0 0.0
  %2318 = vmatpush1.msra.mxu0 0.0
  %2319 = vmatprep.subr.mxu0 0.0
  %2320 = vmatpush1.msra.mxu0 0.0
  %2321 = vmatprep.subr.mxu0 0.0
  %2322 = vmatpush1.msra.mxu0 0.0
  %2323 = vmatprep.subr.mxu0 0.0
  %2324 = vmatpush1.msra.mxu0 0.0
  %2325 = vmatprep.subr.mxu0 0.0
  %2326 = vmatpush1.msra.mxu0 0.0
  %2327 = vmatprep.subr.mxu0 0.0
  %2328 = vmatpush1.msra.mxu0 0.0
  %2329 = vmatprep.subr.mxu0 0.0
  %2330 = vmatpush1.msra.mxu0 0.0
  %2331 = vmatprep.subr.mxu0 0.0
  %2332 = vmatpush1.msra.mxu0 0.0
  %2333 = vmatprep.subr.mxu0 0.0
  %2334 = vmatpush1.msra.mxu0 0.0
  %2335 = vmatprep.subr.mxu0 0.0
  %2336 = vmatpush1.msra.mxu0 0.0
  %2337 = vmatprep.subr.mxu0 0.0
  %2338 = vmatpush1.msra.mxu0 0.0
  %2339 = vmatprep.subr.mxu0 0.0
  %2340 = vmatpush1.msra.mxu0 0.0
  %2341 = vmatprep.subr.mxu0 0.0
  %2342 = vmatpush1.msra.mxu0 0.0
  %2343 = vmatprep.subr.mxu0 0.0
  %2344 = vmatpush1.msra.mxu0 0.0
  %2345 = vmatprep.subr.mxu0 0.0
  %2346 = vmatpush1.msra.mxu0 0.0
  %2347 = vmatprep.subr.mxu0 0.0
  %2348 = vmatpush1.msra.mxu0 0.0
  %2349 = vmatprep.subr.mxu0 0.0
  %2350 = vmatpush1.msra.mxu0 0.0
  %2351 = vmatprep.subr.mxu0 0.0
  %2352 = vmatpush1.msra.mxu0 0.0
  %2353 = vmatprep.subr.mxu0 0.0
  %2354 = vmatpush1.msra.mxu0 0.0
  %2355 = vmatprep.subr.mxu0 0.0
  %2356 = vmatpush1.msra.mxu0 0.0
  %2357 = vmatprep.subr.mxu0 0.0
  %2358 = vmatpush1.msra.mxu0 0.0
  %2359 = vmatprep.mubr.f32.mxu0 0.0
  %2360 = vmatmul.mubr.f32.gmra.mrb[0].mxu0 %v2293
  %v2361 = vpop.f32.mrb[0].mxu0
  %v2362 = vadd.f32 %v2291, %v2361
  %v2363 = vpop.f32.mrb[0].mxu0
  %2364 = vdwg.mxu0
  %v2365 = vld [vmem:[%s6 + $0xe0] sm:$0xf]
  %v2366 = vld [vmem:[%s6 + $0xe4] sm:$0xf]
  %v2367 = vld [vmem:[%s6 + $0xe8] sm:$0xf]
  %v2368 = vld [vmem:[%s6 + $0xec] sm:$0xf]
  %v2369 = vpack.c.bf16 %v2362, %v2362
  %v2370 = vld [vmem:[%s7 + $0x7] sm:$0x1]
  %v2371 = vlaneseq
  %v2372 = vshrl.u32 %v2371, 7
  %v2373 = vsub.s32 0, %v2372
  %v2374 = vrot.slane %v2370, %v2373
  %v2379 = vunpack.c.l.b16 %v2365
  %v2380 = vunpack.c.l.b16 %v2366
  %v2381 = vunpack.c.l.b16 %v2367
  %v2382 = vunpack.c.l.b16 %v2368
  %v2383 = vpack.c.b16 %v2380, %v2379
  %v2384 = vpack.c.b16 %v2382, %v2381
  %v2388 = vsel %vm1205, %v2369, 0
  %2390 = vmatprep.subr.bf16.mxu0 0
  %2391 = vmatpush1.bf16.msra.mxu0 %v2383
  %2392 = vmatprep.subr.bf16.mxu0 0
  %2393 = vmatpush1.bf16.msra.mxu0 %v2384
  %2394 = vmatprep.subr.bf16.mxu0 0
  %2395 = vmatpush1.bf16.msra.mxu0 0
  %2396 = vmatprep.subr.bf16.mxu0 0
  %2397 = vmatpush1.bf16.msra.mxu0 0
  %2398 = vmatprep.subr.bf16.mxu0 0
  %2399 = vmatpush1.bf16.msra.mxu0 0
  %2400 = vmatprep.subr.bf16.mxu0 0
  %2401 = vmatpush1.bf16.msra.mxu0 0
  %2402 = vmatprep.subr.bf16.mxu0 0
  %2403 = vmatpush1.bf16.msra.mxu0 0
  %2404 = vmatprep.subr.bf16.mxu0 0
  %2405 = vmatpush1.bf16.msra.mxu0 0
  %2406 = vmatprep.subr.bf16.mxu0 0
  %2407 = vmatpush1.bf16.msra.mxu0 0
  %2408 = vmatprep.subr.bf16.mxu0 0
  %2409 = vmatpush1.bf16.msra.mxu0 0
  %2410 = vmatprep.subr.bf16.mxu0 0
  %2411 = vmatpush1.bf16.msra.mxu0 0
  %2412 = vmatprep.subr.bf16.mxu0 0
  %2413 = vmatpush1.bf16.msra.mxu0 0
  %2414 = vmatprep.subr.bf16.mxu0 0
  %2415 = vmatpush1.bf16.msra.mxu0 0
  %2416 = vmatprep.subr.bf16.mxu0 0
  %2417 = vmatpush1.bf16.msra.mxu0 0
  %2418 = vmatprep.subr.bf16.mxu0 0
  %2419 = vmatpush1.bf16.msra.mxu0 0
  %2420 = vmatprep.subr.bf16.mxu0 0
  %2421 = vmatpush1.bf16.msra.mxu0 0
  %2422 = vmatprep.mubr.bf16.mxu0 0
  %2423 = vmatmul.mubr.bf16.gmra.mrb[0].mxu0 %v2388
  %v2424 = vpop.f32.mrb[0].mxu0
  %v2425 = vadd.f32 %v2374, %v2424
  %v2426 = vpop.f32.mrb[0].mxu0
  %v2427 = vpop.f32.mrb[0].mxu0
  %v2428 = vpop.f32.mrb[0].mxu0
  %2429 = vdwg.mxu0
  %vm2430 = vcmp.ge.f32.partialorder %v2425, 0.0
  %v2431 = vmul.f32 %v2425, 0.01
  %v2432 = vsel %vm2430, %v2425, %v2431
  %v2433 = vld [vmem:[%s6 + $0xf0] sm:$0xf]
  %v2434 = vld [vmem:[%s6 + $0xf4] sm:$0xf]
  %v2435 = vld [vmem:[%s6 + $0xf8] sm:$0xf]
  %v2436 = vld [vmem:[%s6 + $0xfc] sm:$0xf]
  %v2437 = vpack.c.bf16 %v2432, %v2432
  %v2438 = vld [vmem:[%s7 + $0x8] sm:$0x1]
  %v2439 = vlaneseq
  %v2440 = vshrl.u32 %v2439, 7
  %v2441 = vsub.s32 0, %v2440
  %v2442 = vrot.slane %v2438, %v2441
  %v2447 = vunpack.c.l.b16 %v2433
  %v2448 = vunpack.c.l.b16 %v2434
  %v2449 = vunpack.c.l.b16 %v2435
  %v2450 = vunpack.c.l.b16 %v2436
  %v2451 = vpack.c.b16 %v2448, %v2447
  %v2452 = vpack.c.b16 %v2450, %v2449
  %v2456 = vsel %vm1205, %v2437, 0
  %2458 = vmatprep.subr.bf16.mxu0 0
  %2459 = vmatpush1.bf16.msra.mxu0 %v2451
  %2460 = vmatprep.subr.bf16.mxu0 0
  %2461 = vmatpush1.bf16.msra.mxu0 %v2452
  %2462 = vmatprep.subr.bf16.mxu0 0
  %2463 = vmatpush1.bf16.msra.mxu0 0
  %2464 = vmatprep.subr.bf16.mxu0 0
  %2465 = vmatpush1.bf16.msra.mxu0 0
  %2466 = vmatprep.subr.bf16.mxu0 0
  %2467 = vmatpush1.bf16.msra.mxu0 0
  %2468 = vmatprep.subr.bf16.mxu0 0
  %2469 = vmatpush1.bf16.msra.mxu0 0
  %2470 = vmatprep.subr.bf16.mxu0 0
  %2471 = vmatpush1.bf16.msra.mxu0 0
  %2472 = vmatprep.subr.bf16.mxu0 0
  %2473 = vmatpush1.bf16.msra.mxu0 0
  %2474 = vmatprep.subr.bf16.mxu0 0
  %2475 = vmatpush1.bf16.msra.mxu0 0
  %2476 = vmatprep.subr.bf16.mxu0 0
  %2477 = vmatpush1.bf16.msra.mxu0 0
  %2478 = vmatprep.subr.bf16.mxu0 0
  %2479 = vmatpush1.bf16.msra.mxu0 0
  %2480 = vmatprep.subr.bf16.mxu0 0
  %2481 = vmatpush1.bf16.msra.mxu0 0
  %2482 = vmatprep.subr.bf16.mxu0 0
  %2483 = vmatpush1.bf16.msra.mxu0 0
  %2484 = vmatprep.subr.bf16.mxu0 0
  %2485 = vmatpush1.bf16.msra.mxu0 0
  %2486 = vmatprep.subr.bf16.mxu0 0
  %2487 = vmatpush1.bf16.msra.mxu0 0
  %2488 = vmatprep.subr.bf16.mxu0 0
  %2489 = vmatpush1.bf16.msra.mxu0 0
  %2490 = vmatprep.mubr.bf16.mxu0 0
  %2491 = vmatmul.mubr.bf16.gmra.mrb[0].mxu0 %v2456
  %v2492 = vpop.f32.mrb[0].mxu0
  %v2493 = vadd.f32 %v2442, %v2492
  %v2494 = vpop.f32.mrb[0].mxu0
  %v2495 = vpop.f32.mrb[0].mxu0
  %v2496 = vpop.f32.mrb[0].mxu0
  %2497 = vdwg.mxu0
  %v2498 = vmax.f32 %v2493, 0.0
  %v2499 = vld [vmem:[%s6 + $0x100] sm:$0xf]
  %v2500 = vld [vmem:[%s6 + $0x104] sm:$0xf]
  %v2501 = vld [vmem:[%s6 + $0x108] sm:$0xf]
  %v2502 = vld [vmem:[%s6 + $0x10c] sm:$0xf]
  %v2503 = vld [vmem:[%s6 + $0x110] sm:$0xf]
  %v2504 = vld [vmem:[%s6 + $0x114] sm:$0xf]
  %v2505 = vld [vmem:[%s6 + $0x118] sm:$0xf]
  %v2506 = vld [vmem:[%s6 + $0x11c] sm:$0xf]
  %v2507 = vld [vmem:[%s6 + $0x120] sm:$0xf]
  %v2508 = vld [vmem:[%s6 + $0x124] sm:$0xf]
  %v2509 = vld [vmem:[%s6 + $0x128] sm:$0xf]
  %v2510 = vld [vmem:[%s6 + $0x12c] sm:$0xf]
  %v2511 = vld [vmem:[%s6 + $0x130] sm:$0xf]
  %v2512 = vld [vmem:[%s6 + $0x134] sm:$0xf]
  %v2513 = vld [vmem:[%s6 + $0x138] sm:$0xf]
  %v2514 = vld [vmem:[%s6 + $0x13c] sm:$0xf]
  %v2515 = vpack.c.bf16 %v2498, %v2498
  %v2516 = vld [vmem:[%s7 + $0x9] sm:$0x1]
  %v2517 = vlaneseq
  %v2518 = vshrl.u32 %v2517, 7
  %v2519 = vsub.s32 0, %v2518
  %v2520 = vrot.slane %v2516, %v2519
  %v2537 = vunpack.c.l.b16 %v2499
  %v2538 = vunpack.c.l.b16 %v2500
  %v2539 = vunpack.c.l.b16 %v2501
  %v2540 = vunpack.c.l.b16 %v2502
  %v2541 = vunpack.c.l.b16 %v2503
  %v2542 = vunpack.c.l.b16 %v2504
  %v2543 = vunpack.c.l.b16 %v2505
  %v2544 = vunpack.c.l.b16 %v2506
  %v2545 = vunpack.c.l.b16 %v2507
  %v2546 = vunpack.c.l.b16 %v2508
  %v2547 = vunpack.c.l.b16 %v2509
  %v2548 = vunpack.c.l.b16 %v2510
  %v2549 = vunpack.c.l.b16 %v2511
  %v2550 = vunpack.c.l.b16 %v2512
  %v2551 = vunpack.c.l.b16 %v2513
  %v2552 = vunpack.c.l.b16 %v2514
  %v2553 = vpack.c.b16 %v2538, %v2537
  %v2554 = vpack.c.b16 %v2540, %v2539
  %v2555 = vpack.c.b16 %v2542, %v2541
  %v2556 = vpack.c.b16 %v2544, %v2543
  %v2557 = vpack.c.b16 %v2546, %v2545
  %v2558 = vpack.c.b16 %v2548, %v2547
  %v2559 = vpack.c.b16 %v2550, %v2549
  %v2560 = vpack.c.b16 %v2552, %v2551
  %2569 = vmatprep.subr.bf16.mxu0 0
  %2570 = vmatpush1.bf16.msra.mxu0 %v2553
  %2571 = vmatprep.subr.bf16.mxu0 0
  %2572 = vmatpush1.bf16.msra.mxu0 %v2554
  %2573 = vmatprep.subr.bf16.mxu0 0
  %2574 = vmatpush1.bf16.msra.mxu0 %v2555
  %2575 = vmatprep.subr.bf16.mxu0 0
  %2576 = vmatpush1.bf16.msra.mxu0 %v2556
  %2577 = vmatprep.subr.bf16.mxu0 0
  %2578 = vmatpush1.bf16.msra.mxu0 %v2557
  %2579 = vmatprep.subr.bf16.mxu0 0
  %2580 = vmatpush1.bf16.msra.mxu0 %v2558
  %2581 = vmatprep.subr.bf16.mxu0 0
  %2582 = vmatpush1.bf16.msra.mxu0 %v2559
  %2583 = vmatprep.subr.bf16.mxu0 0
  %2584 = vmatpush1.bf16.msra.mxu0 %v2560
  %2585 = vmatprep.subr.bf16.mxu0 0
  %2586 = vmatpush1.bf16.msra.mxu0 0
  %2587 = vmatprep.subr.bf16.mxu0 0
  %2588 = vmatpush1.bf16.msra.mxu0 0
  %2589 = vmatprep.subr.bf16.mxu0 0
  %2590 = vmatpush1.bf16.msra.mxu0 0
  %2591 = vmatprep.subr.bf16.mxu0 0
  %2592 = vmatpush1.bf16.msra.mxu0 0
  %2593 = vmatprep.subr.bf16.mxu0 0
  %2594 = vmatpush1.bf16.msra.mxu0 0
  %2595 = vmatprep.subr.bf16.mxu0 0
  %2596 = vmatpush1.bf16.msra.mxu0 0
  %2597 = vmatprep.subr.bf16.mxu0 0
  %2598 = vmatpush1.bf16.msra.mxu0 0
  %2599 = vmatprep.subr.bf16.mxu0 0
  %2600 = vmatpush1.bf16.msra.mxu0 0
  %2601 = vmatprep.mubr.bf16.mxu0 0
  %2602 = vmatmul.mubr.bf16.gmra.mrb[0].mxu0 %v2515
  %v2603 = vpop.f32.mrb[0].mxu0
  %v2604 = vadd.f32 %v2520, %v2603
  %v2605 = vpop.f32.mrb[0].mxu0
  %v2606 = vpop.f32.mrb[0].mxu0
  %v2607 = vpop.f32.mrb[0].mxu0
  %2608 = vdwg.mxu0
  %v2609 = vmax.f32 %v2604, 0.0
  %v2610 = vld [vmem:[%s6 + $0x140] sm:$0xf]
  %v2611 = vld [vmem:[%s6 + $0x144] sm:$0xf]
  %v2612 = vld [vmem:[%s6 + $0x148] sm:$0xf]
  %v2613 = vld [vmem:[%s6 + $0x14c] sm:$0xf]
  %v2614 = vld [vmem:[%s6 + $0x150] sm:$0xf]
  %v2615 = vld [vmem:[%s6 + $0x154] sm:$0xf]
  %v2616 = vld [vmem:[%s6 + $0x158] sm:$0xf]
  %v2617 = vld [vmem:[%s6 + $0x15c] sm:$0xf]
  %v2618 = vpack.c.bf16 %v2609, %v2609
  %v2619 = vld [vmem:[%s7 + $0xa] sm:$0x1]
  %v2620 = vlaneseq
  %v2621 = vshrl.u32 %v2620, 7
  %v2622 = vsub.s32 0, %v2621
  %v2623 = vrot.slane %v2619, %v2622
  %v2632 = vunpack.c.l.b16 %v2610
  %v2633 = vunpack.c.l.b16 %v2611
  %v2634 = vunpack.c.l.b16 %v2612
  %v2635 = vunpack.c.l.b16 %v2613
  %v2636 = vunpack.c.l.b16 %v2614
  %v2637 = vunpack.c.l.b16 %v2615
  %v2638 = vunpack.c.l.b16 %v2616
  %v2639 = vunpack.c.l.b16 %v2617
  %v2640 = vpack.c.b16 %v2633, %v2632
  %v2641 = vpack.c.b16 %v2635, %v2634
  %v2642 = vpack.c.b16 %v2637, %v2636
  %v2643 = vpack.c.b16 %v2639, %v2638
  %v2649 = vsel %vm1399, %v2618, 0
  %2651 = vmatprep.subr.bf16.mxu0 0
  %2652 = vmatpush1.bf16.msra.mxu0 %v2640
  %2653 = vmatprep.subr.bf16.mxu0 0
  %2654 = vmatpush1.bf16.msra.mxu0 %v2641
  %2655 = vmatprep.subr.bf16.mxu0 0
  %2656 = vmatpush1.bf16.msra.mxu0 %v2642
  %2657 = vmatprep.subr.bf16.mxu0 0
  %2658 = vmatpush1.bf16.msra.mxu0 %v2643
  %2659 = vmatprep.subr.bf16.mxu0 0
  %2660 = vmatpush1.bf16.msra.mxu0 0
  %2661 = vmatprep.subr.bf16.mxu0 0
  %2662 = vmatpush1.bf16.msra.mxu0 0
  %2663 = vmatprep.subr.bf16.mxu0 0
  %2664 = vmatpush1.bf16.msra.mxu0 0
  %2665 = vmatprep.subr.bf16.mxu0 0
  %2666 = vmatpush1.bf16.msra.mxu0 0
  %2667 = vmatprep.subr.bf16.mxu0 0
  %2668 = vmatpush1.bf16.msra.mxu0 0
  %2669 = vmatprep.subr.bf16.mxu0 0
  %2670 = vmatpush1.bf16.msra.mxu0 0
  %2671 = vmatprep.subr.bf16.mxu0 0
  %2672 = vmatpush1.bf16.msra.mxu0 0
  %2673 = vmatprep.subr.bf16.mxu0 0
  %2674 = vmatpush1.bf16.msra.mxu0 0
  %2675 = vmatprep.subr.bf16.mxu0 0
  %2676 = vmatpush1.bf16.msra.mxu0 0
  %2677 = vmatprep.subr.bf16.mxu0 0
  %2678 = vmatpush1.bf16.msra.mxu0 0
  %2679 = vmatprep.subr.bf16.mxu0 0
  %2680 = vmatpush1.bf16.msra.mxu0 0
  %2681 = vmatprep.subr.bf16.mxu0 0
  %2682 = vmatpush1.bf16.msra.mxu0 0
  %2683 = vmatprep.mubr.bf16.mxu0 0
  %2684 = vmatmul.mubr.bf16.gmra.mrb[0].mxu0 %v2649
  %v2685 = vpop.f32.mrb[0].mxu0
  %v2686 = vadd.f32 %v2623, %v2685
  %v2687 = vpop.f32.mrb[0].mxu0
  %v2688 = vpop.f32.mrb[0].mxu0
  %v2689 = vpop.f32.mrb[0].mxu0
  %2690 = vdwg.mxu0
  %v2691 = vld [vmem:[%s6 + $0x160] sm:$0xf]
  %v2692 = vld [vmem:[%s6 + $0x164] sm:$0xf]
  %v2693 = vld [vmem:[%s6 + $0x168] sm:$0xf]
  %v2694 = vld [vmem:[%s6 + $0x16c] sm:$0xf]
  %v2695 = vpack.c.bf16 %v2686, %v2686
  %v2696 = vld [vmem:[%s7 + $0xb] sm:$0x1]
  %v2697 = vlaneseq
  %v2698 = vshrl.u32 %v2697, 7
  %v2699 = vsub.s32 0, %v2698
  %v2700 = vrot.slane %v2696, %v2699
  %v2705 = vunpack.c.l.b16 %v2691
  %v2706 = vunpack.c.l.b16 %v2692
  %v2707 = vunpack.c.l.b16 %v2693
  %v2708 = vunpack.c.l.b16 %v2694
  %v2709 = vpack.c.b16 %v2706, %v2705
  %v2710 = vpack.c.b16 %v2708, %v2707
  %v2714 = vsel %vm1205, %v2695, 0
  %2716 = vmatprep.subr.bf16.mxu0 0
  %2717 = vmatpush1.bf16.msra.mxu0 %v2709
  %2718 = vmatprep.subr.bf16.mxu0 0
  %2719 = vmatpush1.bf16.msra.mxu0 %v2710
  %2720 = vmatprep.subr.bf16.mxu0 0
  %2721 = vmatpush1.bf16.msra.mxu0 0
  %2722 = vmatprep.subr.bf16.mxu0 0
  %2723 = vmatpush1.bf16.msra.mxu0 0
  %2724 = vmatprep.subr.bf16.mxu0 0
  %2725 = vmatpush1.bf16.msra.mxu0 0
  %2726 = vmatprep.subr.bf16.mxu0 0
  %2727 = vmatpush1.bf16.msra.mxu0 0
  %2728 = vmatprep.subr.bf16.mxu0 0
  %2729 = vmatpush1.bf16.msra.mxu0 0
  %2730 = vmatprep.subr.bf16.mxu0 0
  %2731 = vmatpush1.bf16.msra.mxu0 0
  %2732 = vmatprep.subr.bf16.mxu0 0
  %2733 = vmatpush1.bf16.msra.mxu0 0
  %2734 = vmatprep.subr.bf16.mxu0 0
  %2735 = vmatpush1.bf16.msra.mxu0 0
  %2736 = vmatprep.subr.bf16.mxu0 0
  %2737 = vmatpush1.bf16.msra.mxu0 0
  %2738 = vmatprep.subr.bf16.mxu0 0
  %2739 = vmatpush1.bf16.msra.mxu0 0
  %2740 = vmatprep.subr.bf16.mxu0 0
  %2741 = vmatpush1.bf16.msra.mxu0 0
  %2742 = vmatprep.subr.bf16.mxu0 0
  %2743 = vmatpush1.bf16.msra.mxu0 0
  %2744 = vmatprep.subr.bf16.mxu0 0
  %2745 = vmatpush1.bf16.msra.mxu0 0
  %2746 = vmatprep.subr.bf16.mxu0 0
  %2747 = vmatpush1.bf16.msra.mxu0 0
  %2748 = vmatprep.mubr.bf16.mxu0 0
  %2749 = vmatmul.mubr.bf16.gmra.mrb[0].mxu0 %v2714
  %v2750 = vpop.f32.mrb[0].mxu0
  %v2751 = vadd.f32 %v2700, %v2750
  %v2752 = vpop.f32.mrb[0].mxu0
  %v2753 = vpop.f32.mrb[0].mxu0
  %v2754 = vpop.f32.mrb[0].mxu0
  %2755 = vdwg.mxu0
  %2756 = vst [vmem:[%s8] sm:$0xff] %v2751
  // Predicated region
  $region34: #{botgat_mlp_forward.1} parent=0 // pred_check
    _
  $region35: #{botgat_mlp_forward.1} parent=0 // pred_check_branch
    %2758 = sbr.rel (0) target = $region37
  $region36: #{botgat_mlp_forward.1} parent=0 // pred_region
    _
  $region37: #{botgat_mlp_forward.1} parent=0 // pred_fallthru
    _
  // Predicated region
  $region38: #{botgat_mlp_forward.1} parent=0 // pred_check
    _
  $region39: #{botgat_mlp_forward.1} parent=0 // pred_check_branch
    %2760 = sbr.rel (0) target = $region41
  $region40: #{botgat_mlp_forward.1} parent=0 // pred_region
    _
  $region41: #{botgat_mlp_forward.1} parent=0 // pred_fallthru
    _

</llo_original>
